<compile_context>
chip_gen: v6e
topology: v6e:2x2x1
jax: 0.10.0
libtpu: 0.0.40
codegen_flags: <defaults>
</compile_context>

<pallas_src>
import functools

import numpy as np
import jax
import jax.numpy as jnp
from jax import lax
from jax.experimental import pallas as pl
from jax.experimental.pallas import tpu as pltpu


_LANE = 128     # hidden channels padded up to a multiple of this (lane width)
_PAD_H = 3      # halo rows (== max dilation)
_PAD_W = 8      # halo cols; 8 keeps interior stores/slices sublane-aligned


def _round_up(n, m):
    return ((n + m - 1) // m) * m


def _gelu_tanh(x):
    # tanh-form GELU: the transcendental goes to the (otherwise idle) EUP slot.
    c0 = 0.7978845608028654      # sqrt(2/pi)
    c1 = 0.044715
    return 0.5 * x * (1.0 + jnp.tanh(c0 * x * (1.0 + c1 * x * x)))


def _msfn_kernel(x_ref, w_in_ref, wd_ref, w_out_ref, o_ref, pad_ref,
                 *, TH, W, dim, hid_p):
    """One (batch, row-stripe) tile per grid step. x_ref holds the H-zero-padded image."""
    Hp = TH + 2 * _PAD_H
    Wp = W + 2 * _PAD_W

    # Stripe rows + 3-row halo from the zero-padded input. Projecting the zero
    # halo rows reproduces the zero H-padding of the convs (project_in has no bias).
    row0 = pl.multiple_of(pl.program_id(1) * TH, TH)
    xs = x_ref[0, pl.ds(row0, Hp), :, :].reshape(Hp * W, dim).astype(jnp.bfloat16)

    # Zero only the W-halo columns of the scratch (never overwritten by the
    # interior stores). Done every step so it stays correct under megacore
    # sharding, where each TensorCore owns a separate scratch.
    zero_col = jnp.zeros((Hp, _PAD_W, hid_p), jnp.float32)
    pad_ref[:, 0:_PAD_W, :] = zero_col
    pad_ref[:, _PAD_W + W:Wp, :] = zero_col

    wd = wd_ref[...]   # (27, hid_p): all depthwise taps resident once per step

    def dwconv(branch, d):
        # Per-branch 1x1 projection (MXU, bf16 operands / f32 accumulation) written
        # straight into the scratch interior -- no 3*hid_p-wide intermediate lives.
        xb = jnp.dot(xs, w_in_ref[branch], preferred_element_type=jnp.float32)
        pad_ref[:, _PAD_W:_PAD_W + W, :] = xb.reshape(Hp, W, hid_p)

        # One aligned full-width load; the +/-d column taps come from XLU rolls of
        # the flattened sublane axis (pltpu.roll == jnp.roll semantics:
        # rolled[k] = flat[(k - shift) % n]).  The 8-column margins (>= max
        # dilation 3) guarantee the cyclic wrap never reaches the interior slice.
        base = pad_ref[...]                       # (Hp, Wp, hid_p)
        flat = base.reshape(Hp * Wp, hid_p)
        n = Hp * Wp
        shifted = (
            pltpu.roll(flat, shift=d, axis=0).reshape(Hp, Wp, hid_p),      # column -d
            base,                                                          # column  0
            pltpu.roll(flat, shift=n - d, axis=0).reshape(Hp, Wp, hid_p),  # column +d
        )
        acc = None
        for ky in range(3):
            rs = _PAD_H + (ky - 1) * d            # row offsets are whole-tile rows (free)
            for kx in range(3):
                tap = shifted[kx][rs:rs + TH, _PAD_W:_PAD_W + W, :]
                term = wd[branch * 9 + ky * 3 + kx] * tap
                acc = term if acc is None else acc + term
        return acc

    # Branches run sequentially; only `prod` stays live across them.
    # TODO(synk): on v6e/v7x the tap math could run in bf16 (2x VALU pack, half the
    # bytes); kept f32 so one code path stays accurate/portable on v5e as well.
    prod = _gelu_tanh(dwconv(0, 1))   # dwconv1: middle depth slice of the 3x3x3 kernel
    prod = prod * dwconv(1, 2)        # dwconv2: dilation 2
    prod = prod * dwconv(2, 3)        # dwconv3: dilation 3

    # 1x1 output projection (bf16 operands, f32 accumulation)
    out = jnp.dot(prod.reshape(TH * W, hid_p).astype(jnp.bfloat16), w_out_ref[...],
                  preferred_element_type=jnp.float32)
    # TODO(synk): for dim < 128 the output store is lane-masked; a lane-dense
    # (W*dim)-packed I/O layout in the wrapper would remove the partial stores.
    o_ref[0] = out.reshape(TH, W, dim).astype(o_ref.dtype)


def _vmem_capacity_bytes():
    """Physical per-core VMEM; conservative (v7x, 64 MiB) fallback if the query fails."""
    try:
        cap = getattr(pltpu.get_tpu_info(), "vmem_capacity_bytes", None)
        if cap:
            return int(cap)
    except Exception:
        pass
    return 64 * 2**20


def _estimate_step_vmem(TH, H, W, C, hid_p):
    f32 = 4
    Hp, Wp = TH + 2 * _PAD_H, W + 2 * _PAD_W
    return int(
        Hp * Wp * hid_p * f32                      # padded dwconv scratch
        + 3 * Hp * Wp * hid_p * f32                # base + two rolled full-width copies
        + 4 * TH * W * hid_p * f32                 # acc / prod / tap temporaries
        + Hp * W * hid_p * f32                     # per-branch projection result
        + 2 * (H + 2 * _PAD_H) * W * C * f32       # double-buffered padded-input block
        + 2 * TH * W * C * f32                     # double-buffered output block
        + 2 * (3 * C * hid_p * 2 + 27 * hid_p * f32 + hid_p * C * 2))  # weights (x2 buffers)


def _choose_stripe(H, W, C, hid_p, cap):
    """Largest divisor of H whose per-step working set (x2 headroom) fits the budget."""
    best = 1
    for th in range(1, H + 1):
        if H % th == 0 and 2 * _estimate_step_vmem(th, H, W, C, hid_p) <= cap:
            best = th
    return best


def msfn_pallas_nhwc(x_nhwc, kparams):
    """x_nhwc: (B, H, W, dim) float32 -> (B, H, W, dim). Preferred entry (no transposes)."""
    w_in_f, wd_all, w_out_p = kparams
    B, H, W, C = x_nhwc.shape
    hid_p = w_out_p.shape[0]
    assert w_in_f.shape == (3, C, hid_p) and wd_all.shape == (27, hid_p)

    # Width rounded to a sublane multiple; the extra columns are zero and are
    # exactly the conv's own zero padding, so they are simply cropped at the end.
    Wk = _round_up(W, 8)

    cap = int(0.8 * _vmem_capacity_bytes())     # leave headroom for compiler scratch
    TH = _choose_stripe(H, Wk, C, hid_p, cap)   # row-stripe height (divides H)
    n_stripes = H // TH
    est = _estimate_step_vmem(TH, H, Wk, C, hid_p)
    vmem_limit = int(min(max(2 * est, 16 * 2**20), cap))

    x_in = x_nhwc
    if Wk != W:
        x_in = jnp.pad(x_in, ((0, 0), (0, 0), (0, Wk - W), (0, 0)))
    x_in = jnp.pad(x_in, ((0, 0), (_PAD_H, _PAD_H), (0, 0), (0, 0)))   # H halo baked in

    kernel = functools.partial(_msfn_kernel, TH=TH, W=Wk, dim=C, hid_p=hid_p)

    grid_spec = pltpu.PrefetchScalarGridSpec(
        num_scalar_prefetch=0,
        grid=(B, n_stripes),
        in_specs=[
            # Full padded image per batch element (same block for every stripe, so
            # it is DMA'd once per batch step); stripes slice it with pl.ds.
            pl.BlockSpec((1, H + 2 * _PAD_H, Wk, C), lambda b, i: (b, 0, 0, 0)),
            pl.BlockSpec(w_in_f.shape, lambda b, i: (0, 0, 0)),
            pl.BlockSpec(wd_all.shape, lambda b, i: (0, 0)),
            pl.BlockSpec(w_out_p.shape, lambda b, i: (0, 0)),
        ],
        out_specs=pl.BlockSpec((1, TH, Wk, C), lambda b, i: (b, i, 0, 0)),
        # Shared padded scratch reused by all three depthwise branches.
        scratch_shapes=[pltpu.VMEM((TH + 2 * _PAD_H, Wk + 2 * _PAD_W, hid_p), jnp.float32)],
    )
    out = pl.pallas_call(
        kernel,
        out_shape=jax.ShapeDtypeStruct((B, H, Wk, C), x_nhwc.dtype),
        grid_spec=grid_spec,
        compiler_params=pltpu.CompilerParams(
            dimension_semantics=("parallel", "parallel"),
            vmem_limit_bytes=vmem_limit),
    )(x_in, w_in_f, wd_all, w_out_p)
    if Wk != W:
        out = out[:, :, :W, :]
    return out


def msfn_pallas(x_nchw, kparams):
    """NCHW wrapper matching the PyTorch module. Prefer msfn_pallas_nhwc to skip transposes."""
    out = msfn_pallas_nhwc(jnp.transpose(x_nchw, (0, 2, 3, 1)), kparams)
    return jnp.transpose(out, (0, 3, 1, 2))


def init_params(key, dim, ffn_expansion_factor=2.66):
    """Deterministic synthetic weights with the PyTorch module's shapes (bias=False)."""
    hid = int(dim * ffn_expansion_factor)
    ks = jax.random.split(key, 5)
    s = 0.3
    w_in = s * jax.random.normal(ks[0], (3 * hid, dim), jnp.float32)       # Conv3d 1x1x1
    wd1_3d = s * jax.random.normal(ks[1], (hid, 1, 3, 3, 3), jnp.float32)  # dw Conv3d 3x3x3
    wd2_w = s * jax.random.normal(ks[2], (hid, 1, 3, 3), jnp.float32)      # dw Conv2d dil=2
    wd3_w = s * jax.random.normal(ks[3], (hid, 1, 3, 3), jnp.float32)      # dw Conv2d dil=3
    w_out = s * jax.random.normal(ks[4], (dim, hid), jnp.float32)          # Conv3d 1x1x1
    return hid, w_in, wd1_3d, wd2_w, wd3_w, w_out


def to_kernel_layout(hid, w_in, wd1_3d, wd2_w, wd3_w, w_out, matmul_dtype=jnp.bfloat16):
    """Lane-pad + repack the weights into the kernel layout (padding is exact: zeros)."""
    dim = w_in.shape[1]
    hid_p = _round_up(hid, _LANE)

    # Per-branch input projection: (3, dim, hid_p); padded hidden channels have zero columns.
    w_in_f = jnp.zeros((3, dim, hid_p), jnp.float32)
    for b in range(3):
        w_in_f = w_in_f.at[b, :, :hid].set(w_in[b * hid:(b + 1) * hid].T)

    # Depthwise taps: (27, hid_p); branch b, tap (ky,kx) lives at row b*9 + ky*3 + kx.
    wd1_eff = wd1_3d[:, 0, 1]                                  # middle depth slice -> (hid, 3, 3)
    wd_all = jnp.zeros((27, hid_p), jnp.float32)
    for b, w_hw in enumerate((wd1_eff, wd2_w[:, 0], wd3_w[:, 0])):
        taps = jnp.transpose(w_hw, (1, 2, 0)).reshape(9, hid)
        wd_all = wd_all.at[b * 9:(b + 1) * 9, :hid].set(taps)

    # Output projection: (hid_p, dim), padded rows are zero.
    w_out_p = jnp.zeros((hid_p, dim), jnp.float32).at[:hid, :].set(w_out.T)

    return (w_in_f.astype(matmul_dtype), wd_all, w_out_p.astype(matmul_dtype))


def msfn_reference(x_nchw, w_in, wd1_3d, wd2_w, wd3_w, w_out):
    """Pure-JAX f32 reference matching the PyTorch forward exactly (erf GELU)."""
    hid = w_in.shape[0] // 3
    x = jnp.transpose(x_nchw, (0, 2, 3, 1)).astype(jnp.float32)
    xp = jnp.einsum('bhwc,fc->bhwf', x, w_in, precision=lax.Precision.HIGHEST)
    x1, x2, x3 = jnp.split(xp, 3, axis=-1)

    def dw(xb, w_oihw, d):
        filt = jnp.transpose(w_oihw[:, 0], (1, 2, 0))[:, :, None, :]   # (3,3,1,hid)
        return lax.conv_general_dilated(
            xb, filt, window_strides=(1, 1), padding=[(d, d), (d, d)],
            rhs_dilation=(d, d), dimension_numbers=('NHWC', 'HWIO', 'NHWC'),
            feature_group_count=hid, precision=lax.Precision.HIGHEST)

    y1 = dw(x1, wd1_3d[:, :, 1], 1)   # middle depth slice of the 3x3x3 depthwise kernel
    y2 = dw(x2, wd2_w, 2)
    y3 = dw(x3, wd3_w, 3)
    g = 0.5 * y1 * (1.0 + jax.scipy.special.erf(y1 / jnp.sqrt(2.0)))
    out = jnp.einsum('bhwf,cf->bhwc', g * y2 * y3, w_out,
                     precision=lax.Precision.HIGHEST)
    return jnp.transpose(out, (0, 3, 1, 2))


if __name__ == "__main__":
    B, DIM, H, W = 2, 4, 16, 16
    key = jax.random.PRNGKey(0)
    k_x, k_p = jax.random.split(key)
    x = jax.random.normal(k_x, (B, DIM, H, W), jnp.float32)

    hid, w_in, wd1_3d, wd2_w, wd3_w, w_out = init_params(k_p, DIM)
    kparams = to_kernel_layout(hid, w_in, wd1_3d, wd2_w, wd3_w, w_out)

    out = msfn_pallas(x, kparams)
    out = jax.block_until_ready(out)

    ref = msfn_reference(x, w_in, wd1_3d, wd2_w, wd3_w, w_out)
    err = float(jnp.max(jnp.abs(out - ref)))
    # Tolerance covers bf16 MXU operands (f32 accumulation) + the tanh-GELU
    # approximation (~5e-4 abs) vs the exact erf reference; structural bugs
    # (wrong taps/branches) produce errors orders of magnitude larger.
    if not np.isfinite(err) or err > 4e-2:
        raise AssertionError(f"Pallas MSFN mismatch vs reference: max abs err = {err}")
    print("KERNEL_OK")
</pallas_src>

<mosaic_0001>
module attributes {stable_mosaic.version = 11 : i64} {
  func.func @_msfn_kernel(%arg0: i32, %arg1: i32, %arg2: memref<1x22x16x4xf32, #tpu.memory_space<vmem>>, %arg3: memref<3x4x128xbf16, #tpu.memory_space<vmem>>, %arg4: memref<27x128xf32, #tpu.memory_space<vmem>>, %arg5: memref<128x4xbf16, #tpu.memory_space<vmem>>, %arg6: memref<1x16x16x4xf32, #tpu.memory_space<vmem>>, %arg7: memref<22x32x128xf32, #tpu.memory_space<vmem>>) attributes {dimension_semantics = [#tpu.dimension_semantics<parallel>, #tpu.dimension_semantics<parallel>], iteration_bounds = array<i64: 2, 1>, scalar_prefetch = 0 : i64, scratch_operands = 1 : i64, tpu.core_type = #tpu.core_type<tc>, window_params = [{transform_indices = @transform_0, window_bounds = array<i64: 1, 22, 16, 4>}, {pipeline_mode = #tpu.pipeline_mode<synchronous>, transform_indices = @transform_1, window_bounds = array<i64: 3, 4, 128>}, {pipeline_mode = #tpu.pipeline_mode<synchronous>, transform_indices = @transform_2, window_bounds = array<i64: 27, 128>}, {pipeline_mode = #tpu.pipeline_mode<synchronous>, transform_indices = @transform_3, window_bounds = array<i64: 128, 4>}, {transform_indices = @transform_4, window_bounds = array<i64: 1, 16, 16, 4>}]} {
    %c16_i32 = arith.constant 16 : i32
    %0 = arith.muli %arg1, %c16_i32 : i32
    %1 = tpu.assume_multiple %0, 16 : i32
    %c0 = arith.constant 0 : index
    %2 = arith.index_cast %1 : i32 to index
    %c0_0 = arith.constant 0 : index
    %c0_1 = arith.constant 0 : index
    %3 = vector.load %arg2[%c0, %2, %c0_0, %c0_1] : memref<1x22x16x4xf32, #tpu.memory_space<vmem>>, vector<1x22x16x4xf32>
    %4 = vector.shape_cast %3 : vector<1x22x16x4xf32> to vector<22x16x4xf32>
    %5 = vector.shape_cast %4 : vector<22x16x4xf32> to vector<352x4xf32>
    %6 = arith.truncf %5 : vector<352x4xf32> to vector<352x4xbf16>
    %cst = arith.constant 0.000000e+00 : f32
    %7 = vector.broadcast %cst : f32 to vector<22x8x128xf32>
    %c0_2 = arith.constant 0 : index
    %c0_3 = arith.constant 0 : index
    %c0_4 = arith.constant 0 : index
    %8 = vector.load %arg7[%c0_2, %c0_3, %c0_4] : memref<22x32x128xf32, #tpu.memory_space<vmem>>, vector<22x8x128xf32>
    tpu.vector_store %arg7[%c0_2, %c0_3, %c0_4], %7 {strides = array<i32>} : memref<22x32x128xf32, #tpu.memory_space<vmem>>, vector<22x8x128xf32>,
    %c0_5 = arith.constant 0 : index
    %c24 = arith.constant 24 : index
    %c0_6 = arith.constant 0 : index
    %9 = vector.load %arg7[%c0_5, %c24, %c0_6] : memref<22x32x128xf32, #tpu.memory_space<vmem>>, vector<22x8x128xf32>
    tpu.vector_store %arg7[%c0_5, %c24, %c0_6], %7 {strides = array<i32>} : memref<22x32x128xf32, #tpu.memory_space<vmem>>, vector<22x8x128xf32>,
    %c0_7 = arith.constant 0 : index
    %c0_8 = arith.constant 0 : index
    %10 = vector.load %arg4[%c0_7, %c0_8] : memref<27x128xf32, #tpu.memory_space<vmem>>, vector<27x128xf32>
    %c0_9 = arith.constant 0 : index
    %c0_10 = arith.constant 0 : index
    %c0_11 = arith.constant 0 : index
    %11 = vector.load %arg3[%c0_9, %c0_10, %c0_11] : memref<3x4x128xbf16, #tpu.memory_space<vmem>>, vector<1x4x128xbf16>
    %12 = vector.shape_cast %11 : vector<1x4x128xbf16> to vector<4x128xbf16>
    %cst_12 = arith.constant dense<0.000000e+00> : vector<352x128xf32>
    %13 = tpu.matmul %6, %12, %cst_12 {dimension_numbers = #tpu.dot_dimension_numbers<[1], [0], [0], [1], [0, 0, 1, 1], [], []>} : vector<352x4xbf16>, vector<4x128xbf16>, vector<352x128xf32> -> vector<352x128xf32>
    %14 = vector.shape_cast %13 : vector<352x128xf32> to vector<22x16x128xf32>
    %c0_13 = arith.constant 0 : index
    %c8 = arith.constant 8 : index
    %c0_14 = arith.constant 0 : index
    %15 = vector.load %arg7[%c0_13, %c8, %c0_14] : memref<22x32x128xf32, #tpu.memory_space<vmem>>, vector<22x16x128xf32>
    tpu.vector_store %arg7[%c0_13, %c8, %c0_14], %14 {strides = array<i32>} : memref<22x32x128xf32, #tpu.memory_space<vmem>>, vector<22x16x128xf32>,
    %c0_15 = arith.constant 0 : index
    %c0_16 = arith.constant 0 : index
    %c0_17 = arith.constant 0 : index
    %16 = vector.load %arg7[%c0_15, %c0_16, %c0_17] : memref<22x32x128xf32, #tpu.memory_space<vmem>>, vector<22x32x128xf32>
    %17 = vector.shape_cast %16 : vector<22x32x128xf32> to vector<704x128xf32>
    %c1_i32 = arith.constant 1 : i32
    %18 = tpu.dynamic_rotate %17 by %c1_i32 dim 0 : vector<704x128xf32>, i32 -> vector<704x128xf32>
    %19 = vector.shape_cast %18 : vector<704x128xf32> to vector<22x32x128xf32>
    %c703_i32 = arith.constant 703 : i32
    %20 = tpu.dynamic_rotate %17 by %c703_i32 dim 0 : vector<704x128xf32>, i32 -> vector<704x128xf32>
    %21 = vector.shape_cast %20 : vector<704x128xf32> to vector<22x32x128xf32>
    %22 = vector.extract_strided_slice %19 {offsets = [2, 8, 0], sizes = [16, 16, 128], strides = [1, 1, 1]} : vector<22x32x128xf32> to vector<16x16x128xf32>
    %23 = vector.extract_strided_slice %10 {offsets = [0, 0], sizes = [1, 128], strides = [1, 1]} : vector<27x128xf32> to vector<1x128xf32>
    %24 = vector.shape_cast %23 : vector<1x128xf32> to vector<128xf32>
    %25 = vector.shape_cast %24 : vector<128xf32> to vector<1x1x128xf32>
    %26 = vector.broadcast %25 : vector<1x1x128xf32> to vector<16x16x128xf32>
    %27 = arith.mulf %26, %22 : vector<16x16x128xf32>
    %28 = vector.extract_strided_slice %16 {offsets = [2, 8, 0], sizes = [16, 16, 128], strides = [1, 1, 1]} : vector<22x32x128xf32> to vector<16x16x128xf32>
    %29 = vector.extract_strided_slice %10 {offsets = [1, 0], sizes = [1, 128], strides = [1, 1]} : vector<27x128xf32> to vector<1x128xf32>
    %30 = vector.shape_cast %29 : vector<1x128xf32> to vector<128xf32>
    %31 = vector.shape_cast %30 : vector<128xf32> to vector<1x1x128xf32>
    %32 = vector.broadcast %31 : vector<1x1x128xf32> to vector<16x16x128xf32>
    %33 = arith.mulf %32, %28 : vector<16x16x128xf32>
    %34 = arith.addf %27, %33 : vector<16x16x128xf32>
    %35 = vector.extract_strided_slice %21 {offsets = [2, 8, 0], sizes = [16, 16, 128], strides = [1, 1, 1]} : vector<22x32x128xf32> to vector<16x16x128xf32>
    %36 = vector.extract_strided_slice %10 {offsets = [2, 0], sizes = [1, 128], strides = [1, 1]} : vector<27x128xf32> to vector<1x128xf32>
    %37 = vector.shape_cast %36 : vector<1x128xf32> to vector<128xf32>
    %38 = vector.shape_cast %37 : vector<128xf32> to vector<1x1x128xf32>
    %39 = vector.broadcast %38 : vector<1x1x128xf32> to vector<16x16x128xf32>
    %40 = arith.mulf %39, %35 : vector<16x16x128xf32>
    %41 = arith.addf %34, %40 : vector<16x16x128xf32>
    %42 = vector.extract_strided_slice %19 {offsets = [3, 8, 0], sizes = [16, 16, 128], strides = [1, 1, 1]} : vector<22x32x128xf32> to vector<16x16x128xf32>
    %43 = vector.extract_strided_slice %10 {offsets = [3, 0], sizes = [1, 128], strides = [1, 1]} : vector<27x128xf32> to vector<1x128xf32>
    %44 = vector.shape_cast %43 : vector<1x128xf32> to vector<128xf32>
    %45 = vector.shape_cast %44 : vector<128xf32> to vector<1x1x128xf32>
    %46 = vector.broadcast %45 : vector<1x1x128xf32> to vector<16x16x128xf32>
    %47 = arith.mulf %46, %42 : vector<16x16x128xf32>
    %48 = arith.addf %41, %47 : vector<16x16x128xf32>
    %49 = vector.extract_strided_slice %16 {offsets = [3, 8, 0], sizes = [16, 16, 128], strides = [1, 1, 1]} : vector<22x32x128xf32> to vector<16x16x128xf32>
    %50 = vector.extract_strided_slice %10 {offsets = [4, 0], sizes = [1, 128], strides = [1, 1]} : vector<27x128xf32> to vector<1x128xf32>
    %51 = vector.shape_cast %50 : vector<1x128xf32> to vector<128xf32>
    %52 = vector.shape_cast %51 : vector<128xf32> to vector<1x1x128xf32>
    %53 = vector.broadcast %52 : vector<1x1x128xf32> to vector<16x16x128xf32>
    %54 = arith.mulf %53, %49 : vector<16x16x128xf32>
    %55 = arith.addf %48, %54 : vector<16x16x128xf32>
    %56 = vector.extract_strided_slice %21 {offsets = [3, 8, 0], sizes = [16, 16, 128], strides = [1, 1, 1]} : vector<22x32x128xf32> to vector<16x16x128xf32>
    %57 = vector.extract_strided_slice %10 {offsets = [5, 0], sizes = [1, 128], strides = [1, 1]} : vector<27x128xf32> to vector<1x128xf32>
    %58 = vector.shape_cast %57 : vector<1x128xf32> to vector<128xf32>
    %59 = vector.shape_cast %58 : vector<128xf32> to vector<1x1x128xf32>
    %60 = vector.broadcast %59 : vector<1x1x128xf32> to vector<16x16x128xf32>
    %61 = arith.mulf %60, %56 : vector<16x16x128xf32>
    %62 = arith.addf %55, %61 : vector<16x16x128xf32>
    %63 = vector.extract_strided_slice %19 {offsets = [4, 8, 0], sizes = [16, 16, 128], strides = [1, 1, 1]} : vector<22x32x128xf32> to vector<16x16x128xf32>
    %64 = vector.extract_strided_slice %10 {offsets = [6, 0], sizes = [1, 128], strides = [1, 1]} : vector<27x128xf32> to vector<1x128xf32>
    %65 = vector.shape_cast %64 : vector<1x128xf32> to vector<128xf32>
    %66 = vector.shape_cast %65 : vector<128xf32> to vector<1x1x128xf32>
    %67 = vector.broadcast %66 : vector<1x1x128xf32> to vector<16x16x128xf32>
    %68 = arith.mulf %67, %63 : vector<16x16x128xf32>
    %69 = arith.addf %62, %68 : vector<16x16x128xf32>
    %70 = vector.extract_strided_slice %16 {offsets = [4, 8, 0], sizes = [16, 16, 128], strides = [1, 1, 1]} : vector<22x32x128xf32> to vector<16x16x128xf32>
    %71 = vector.extract_strided_slice %10 {offsets = [7, 0], sizes = [1, 128], strides = [1, 1]} : vector<27x128xf32> to vector<1x128xf32>
    %72 = vector.shape_cast %71 : vector<1x128xf32> to vector<128xf32>
    %73 = vector.shape_cast %72 : vector<128xf32> to vector<1x1x128xf32>
    %74 = vector.broadcast %73 : vector<1x1x128xf32> to vector<16x16x128xf32>
    %75 = arith.mulf %74, %70 : vector<16x16x128xf32>
    %76 = arith.addf %69, %75 : vector<16x16x128xf32>
    %77 = vector.extract_strided_slice %21 {offsets = [4, 8, 0], sizes = [16, 16, 128], strides = [1, 1, 1]} : vector<22x32x128xf32> to vector<16x16x128xf32>
    %78 = vector.extract_strided_slice %10 {offsets = [8, 0], sizes = [1, 128], strides = [1, 1]} : vector<27x128xf32> to vector<1x128xf32>
    %79 = vector.shape_cast %78 : vector<1x128xf32> to vector<128xf32>
    %80 = vector.shape_cast %79 : vector<128xf32> to vector<1x1x128xf32>
    %81 = vector.broadcast %80 : vector<1x1x128xf32> to vector<16x16x128xf32>
    %82 = arith.mulf %81, %77 : vector<16x16x128xf32>
    %83 = arith.addf %76, %82 : vector<16x16x128xf32>
    %cst_18 = arith.constant 5.000000e-01 : f32
    %84 = vector.broadcast %cst_18 : f32 to vector<16x16x128xf32>
    %85 = arith.mulf %84, %83 : vector<16x16x128xf32>
    %cst_19 = arith.constant 0.797884583 : f32
    %86 = vector.broadcast %cst_19 : f32 to vector<16x16x128xf32>
    %87 = arith.mulf %86, %83 : vector<16x16x128xf32>
    %cst_20 = arith.constant 4.471500e-02 : f32
    %88 = vector.broadcast %cst_20 : f32 to vector<16x16x128xf32>
    %89 = arith.mulf %88, %83 : vector<16x16x128xf32>
    %90 = arith.mulf %89, %83 : vector<16x16x128xf32>
    %cst_21 = arith.constant 1.000000e+00 : f32
    %91 = vector.broadcast %cst_21 : f32 to vector<16x16x128xf32>
    %92 = arith.addf %91, %90 : vector<16x16x128xf32>
    %93 = arith.mulf %87, %92 : vector<16x16x128xf32>
    %94 = math.tanh %93 : vector<16x16x128xf32>
    %cst_22 = arith.constant 1.000000e+00 : f32
    %95 = vector.broadcast %cst_22 : f32 to vector<16x16x128xf32>
    %96 = arith.addf %95, %94 : vector<16x16x128xf32>
    %97 = arith.mulf %85, %96 : vector<16x16x128xf32>
    %c1 = arith.constant 1 : index
    %c0_23 = arith.constant 0 : index
    %c0_24 = arith.constant 0 : index
    %98 = vector.load %arg3[%c1, %c0_23, %c0_24] : memref<3x4x128xbf16, #tpu.memory_space<vmem>>, vector<1x4x128xbf16>
    %99 = vector.shape_cast %98 : vector<1x4x128xbf16> to vector<4x128xbf16>
    %cst_25 = arith.constant dense<0.000000e+00> : vector<352x128xf32>
    %100 = tpu.matmul %6, %99, %cst_25 {dimension_numbers = #tpu.dot_dimension_numbers<[1], [0], [0], [1], [0, 0, 1, 1], [], []>} : vector<352x4xbf16>, vector<4x128xbf16>, vector<352x128xf32> -> vector<352x128xf32>
    %101 = vector.shape_cast %100 : vector<352x128xf32> to vector<22x16x128xf32>
    %c0_26 = arith.constant 0 : index
    %c8_27 = arith.constant 8 : index
    %c0_28 = arith.constant 0 : index
    %102 = vector.load %arg7[%c0_26, %c8_27, %c0_28] : memref<22x32x128xf32, #tpu.memory_space<vmem>>, vector<22x16x128xf32>
    tpu.vector_store %arg7[%c0_26, %c8_27, %c0_28], %101 {strides = array<i32>} : memref<22x32x128xf32, #tpu.memory_space<vmem>>, vector<22x16x128xf32>,
    %c0_29 = arith.constant 0 : index
    %c0_30 = arith.constant 0 : index
    %c0_31 = arith.constant 0 : index
    %103 = vector.load %arg7[%c0_29, %c0_30, %c0_31] : memref<22x32x128xf32, #tpu.memory_space<vmem>>, vector<22x32x128xf32>
    %104 = vector.shape_cast %103 : vector<22x32x128xf32> to vector<704x128xf32>
    %c2_i32 = arith.constant 2 : i32
    %105 = tpu.dynamic_rotate %104 by %c2_i32 dim 0 : vector<704x128xf32>, i32 -> vector<704x128xf32>
    %106 = vector.shape_cast %105 : vector<704x128xf32> to vector<22x32x128xf32>
    %c702_i32 = arith.constant 702 : i32
    %107 = tpu.dynamic_rotate %104 by %c702_i32 dim 0 : vector<704x128xf32>, i32 -> vector<704x128xf32>
    %108 = vector.shape_cast %107 : vector<704x128xf32> to vector<22x32x128xf32>
    %109 = vector.extract_strided_slice %106 {offsets = [1, 8, 0], sizes = [16, 16, 128], strides = [1, 1, 1]} : vector<22x32x128xf32> to vector<16x16x128xf32>
    %110 = vector.extract_strided_slice %10 {offsets = [9, 0], sizes = [1, 128], strides = [1, 1]} : vector<27x128xf32> to vector<1x128xf32>
    %111 = vector.shape_cast %110 : vector<1x128xf32> to vector<128xf32>
    %112 = vector.shape_cast %111 : vector<128xf32> to vector<1x1x128xf32>
    %113 = vector.broadcast %112 : vector<1x1x128xf32> to vector<16x16x128xf32>
    %114 = arith.mulf %113, %109 : vector<16x16x128xf32>
    %115 = vector.extract_strided_slice %103 {offsets = [1, 8, 0], sizes = [16, 16, 128], strides = [1, 1, 1]} : vector<22x32x128xf32> to vector<16x16x128xf32>
    %116 = vector.extract_strided_slice %10 {offsets = [10, 0], sizes = [1, 128], strides = [1, 1]} : vector<27x128xf32> to vector<1x128xf32>
    %117 = vector.shape_cast %116 : vector<1x128xf32> to vector<128xf32>
    %118 = vector.shape_cast %117 : vector<128xf32> to vector<1x1x128xf32>
    %119 = vector.broadcast %118 : vector<1x1x128xf32> to vector<16x16x128xf32>
    %120 = arith.mulf %119, %115 : vector<16x16x128xf32>
    %121 = arith.addf %114, %120 : vector<16x16x128xf32>
    %122 = vector.extract_strided_slice %108 {offsets = [1, 8, 0], sizes = [16, 16, 128], strides = [1, 1, 1]} : vector<22x32x128xf32> to vector<16x16x128xf32>
    %123 = vector.extract_strided_slice %10 {offsets = [11, 0], sizes = [1, 128], strides = [1, 1]} : vector<27x128xf32> to vector<1x128xf32>
    %124 = vector.shape_cast %123 : vector<1x128xf32> to vector<128xf32>
    %125 = vector.shape_cast %124 : vector<128xf32> to vector<1x1x128xf32>
    %126 = vector.broadcast %125 : vector<1x1x128xf32> to vector<16x16x128xf32>
    %127 = arith.mulf %126, %122 : vector<16x16x128xf32>
    %128 = arith.addf %121, %127 : vector<16x16x128xf32>
    %129 = vector.extract_strided_slice %106 {offsets = [3, 8, 0], sizes = [16, 16, 128], strides = [1, 1, 1]} : vector<22x32x128xf32> to vector<16x16x128xf32>
    %130 = vector.extract_strided_slice %10 {offsets = [12, 0], sizes = [1, 128], strides = [1, 1]} : vector<27x128xf32> to vector<1x128xf32>
    %131 = vector.shape_cast %130 : vector<1x128xf32> to vector<128xf32>
    %132 = vector.shape_cast %131 : vector<128xf32> to vector<1x1x128xf32>
    %133 = vector.broadcast %132 : vector<1x1x128xf32> to vector<16x16x128xf32>
    %134 = arith.mulf %133, %129 : vector<16x16x128xf32>
    %135 = arith.addf %128, %134 : vector<16x16x128xf32>
    %136 = vector.extract_strided_slice %103 {offsets = [3, 8, 0], sizes = [16, 16, 128], strides = [1, 1, 1]} : vector<22x32x128xf32> to vector<16x16x128xf32>
    %137 = vector.extract_strided_slice %10 {offsets = [13, 0], sizes = [1, 128], strides = [1, 1]} : vector<27x128xf32> to vector<1x128xf32>
    %138 = vector.shape_cast %137 : vector<1x128xf32> to vector<128xf32>
    %139 = vector.shape_cast %138 : vector<128xf32> to vector<1x1x128xf32>
    %140 = vector.broadcast %139 : vector<1x1x128xf32> to vector<16x16x128xf32>
    %141 = arith.mulf %140, %136 : vector<16x16x128xf32>
    %142 = arith.addf %135, %141 : vector<16x16x128xf32>
    %143 = vector.extract_strided_slice %108 {offsets = [3, 8, 0], sizes = [16, 16, 128], strides = [1, 1, 1]} : vector<22x32x128xf32> to vector<16x16x128xf32>
    %144 = vector.extract_strided_slice %10 {offsets = [14, 0], sizes = [1, 128], strides = [1, 1]} : vector<27x128xf32> to vector<1x128xf32>
    %145 = vector.shape_cast %144 : vector<1x128xf32> to vector<128xf32>
    %146 = vector.shape_cast %145 : vector<128xf32> to vector<1x1x128xf32>
    %147 = vector.broadcast %146 : vector<1x1x128xf32> to vector<16x16x128xf32>
    %148 = arith.mulf %147, %143 : vector<16x16x128xf32>
    %149 = arith.addf %142, %148 : vector<16x16x128xf32>
    %150 = vector.extract_strided_slice %106 {offsets = [5, 8, 0], sizes = [16, 16, 128], strides = [1, 1, 1]} : vector<22x32x128xf32> to vector<16x16x128xf32>
    %151 = vector.extract_strided_slice %10 {offsets = [15, 0], sizes = [1, 128], strides = [1, 1]} : vector<27x128xf32> to vector<1x128xf32>
    %152 = vector.shape_cast %151 : vector<1x128xf32> to vector<128xf32>
    %153 = vector.shape_cast %152 : vector<128xf32> to vector<1x1x128xf32>
    %154 = vector.broadcast %153 : vector<1x1x128xf32> to vector<16x16x128xf32>
    %155 = arith.mulf %154, %150 : vector<16x16x128xf32>
    %156 = arith.addf %149, %155 : vector<16x16x128xf32>
    %157 = vector.extract_strided_slice %103 {offsets = [5, 8, 0], sizes = [16, 16, 128], strides = [1, 1, 1]} : vector<22x32x128xf32> to vector<16x16x128xf32>
    %158 = vector.extract_strided_slice %10 {offsets = [16, 0], sizes = [1, 128], strides = [1, 1]} : vector<27x128xf32> to vector<1x128xf32>
    %159 = vector.shape_cast %158 : vector<1x128xf32> to vector<128xf32>
    %160 = vector.shape_cast %159 : vector<128xf32> to vector<1x1x128xf32>
    %161 = vector.broadcast %160 : vector<1x1x128xf32> to vector<16x16x128xf32>
    %162 = arith.mulf %161, %157 : vector<16x16x128xf32>
    %163 = arith.addf %156, %162 : vector<16x16x128xf32>
    %164 = vector.extract_strided_slice %108 {offsets = [5, 8, 0], sizes = [16, 16, 128], strides = [1, 1, 1]} : vector<22x32x128xf32> to vector<16x16x128xf32>
    %165 = vector.extract_strided_slice %10 {offsets = [17, 0], sizes = [1, 128], strides = [1, 1]} : vector<27x128xf32> to vector<1x128xf32>
    %166 = vector.shape_cast %165 : vector<1x128xf32> to vector<128xf32>
    %167 = vector.shape_cast %166 : vector<128xf32> to vector<1x1x128xf32>
    %168 = vector.broadcast %167 : vector<1x1x128xf32> to vector<16x16x128xf32>
    %169 = arith.mulf %168, %164 : vector<16x16x128xf32>
    %170 = arith.addf %163, %169 : vector<16x16x128xf32>
    %171 = arith.mulf %97, %170 : vector<16x16x128xf32>
    %c2 = arith.constant 2 : index
    %c0_32 = arith.constant 0 : index
    %c0_33 = arith.constant 0 : index
    %172 = vector.load %arg3[%c2, %c0_32, %c0_33] : memref<3x4x128xbf16, #tpu.memory_space<vmem>>, vector<1x4x128xbf16>
    %173 = vector.shape_cast %172 : vector<1x4x128xbf16> to vector<4x128xbf16>
    %cst_34 = arith.constant dense<0.000000e+00> : vector<352x128xf32>
    %174 = tpu.matmul %6, %173, %cst_34 {dimension_numbers = #tpu.dot_dimension_numbers<[1], [0], [0], [1], [0, 0, 1, 1], [], []>} : vector<352x4xbf16>, vector<4x128xbf16>, vector<352x128xf32> -> vector<352x128xf32>
    %175 = vector.shape_cast %174 : vector<352x128xf32> to vector<22x16x128xf32>
    %c0_35 = arith.constant 0 : index
    %c8_36 = arith.constant 8 : index
    %c0_37 = arith.constant 0 : index
    %176 = vector.load %arg7[%c0_35, %c8_36, %c0_37] : memref<22x32x128xf32, #tpu.memory_space<vmem>>, vector<22x16x128xf32>
    tpu.vector_store %arg7[%c0_35, %c8_36, %c0_37], %175 {strides = array<i32>} : memref<22x32x128xf32, #tpu.memory_space<vmem>>, vector<22x16x128xf32>,
    %c0_38 = arith.constant 0 : index
    %c0_39 = arith.constant 0 : index
    %c0_40 = arith.constant 0 : index
    %177 = vector.load %arg7[%c0_38, %c0_39, %c0_40] : memref<22x32x128xf32, #tpu.memory_space<vmem>>, vector<22x32x128xf32>
    %178 = vector.shape_cast %177 : vector<22x32x128xf32> to vector<704x128xf32>
    %c3_i32 = arith.constant 3 : i32
    %179 = tpu.dynamic_rotate %178 by %c3_i32 dim 0 : vector<704x128xf32>, i32 -> vector<704x128xf32>
    %180 = vector.shape_cast %179 : vector<704x128xf32> to vector<22x32x128xf32>
    %c701_i32 = arith.constant 701 : i32
    %181 = tpu.dynamic_rotate %178 by %c701_i32 dim 0 : vector<704x128xf32>, i32 -> vector<704x128xf32>
    %182 = vector.shape_cast %181 : vector<704x128xf32> to vector<22x32x128xf32>
    %183 = vector.extract_strided_slice %180 {offsets = [0, 8, 0], sizes = [16, 16, 128], strides = [1, 1, 1]} : vector<22x32x128xf32> to vector<16x16x128xf32>
    %184 = vector.extract_strided_slice %10 {offsets = [18, 0], sizes = [1, 128], strides = [1, 1]} : vector<27x128xf32> to vector<1x128xf32>
    %185 = vector.shape_cast %184 : vector<1x128xf32> to vector<128xf32>
    %186 = vector.shape_cast %185 : vector<128xf32> to vector<1x1x128xf32>
    %187 = vector.broadcast %186 : vector<1x1x128xf32> to vector<16x16x128xf32>
    %188 = arith.mulf %187, %183 : vector<16x16x128xf32>
    %189 = vector.extract_strided_slice %177 {offsets = [0, 8, 0], sizes = [16, 16, 128], strides = [1, 1, 1]} : vector<22x32x128xf32> to vector<16x16x128xf32>
    %190 = vector.extract_strided_slice %10 {offsets = [19, 0], sizes = [1, 128], strides = [1, 1]} : vector<27x128xf32> to vector<1x128xf32>
    %191 = vector.shape_cast %190 : vector<1x128xf32> to vector<128xf32>
    %192 = vector.shape_cast %191 : vector<128xf32> to vector<1x1x128xf32>
    %193 = vector.broadcast %192 : vector<1x1x128xf32> to vector<16x16x128xf32>
    %194 = arith.mulf %193, %189 : vector<16x16x128xf32>
    %195 = arith.addf %188, %194 : vector<16x16x128xf32>
    %196 = vector.extract_strided_slice %182 {offsets = [0, 8, 0], sizes = [16, 16, 128], strides = [1, 1, 1]} : vector<22x32x128xf32> to vector<16x16x128xf32>
    %197 = vector.extract_strided_slice %10 {offsets = [20, 0], sizes = [1, 128], strides = [1, 1]} : vector<27x128xf32> to vector<1x128xf32>
    %198 = vector.shape_cast %197 : vector<1x128xf32> to vector<128xf32>
    %199 = vector.shape_cast %198 : vector<128xf32> to vector<1x1x128xf32>
    %200 = vector.broadcast %199 : vector<1x1x128xf32> to vector<16x16x128xf32>
    %201 = arith.mulf %200, %196 : vector<16x16x128xf32>
    %202 = arith.addf %195, %201 : vector<16x16x128xf32>
    %203 = vector.extract_strided_slice %180 {offsets = [3, 8, 0], sizes = [16, 16, 128], strides = [1, 1, 1]} : vector<22x32x128xf32> to vector<16x16x128xf32>
    %204 = vector.extract_strided_slice %10 {offsets = [21, 0], sizes = [1, 128], strides = [1, 1]} : vector<27x128xf32> to vector<1x128xf32>
    %205 = vector.shape_cast %204 : vector<1x128xf32> to vector<128xf32>
    %206 = vector.shape_cast %205 : vector<128xf32> to vector<1x1x128xf32>
    %207 = vector.broadcast %206 : vector<1x1x128xf32> to vector<16x16x128xf32>
    %208 = arith.mulf %207, %203 : vector<16x16x128xf32>
    %209 = arith.addf %202, %208 : vector<16x16x128xf32>
    %210 = vector.extract_strided_slice %177 {offsets = [3, 8, 0], sizes = [16, 16, 128], strides = [1, 1, 1]} : vector<22x32x128xf32> to vector<16x16x128xf32>
    %211 = vector.extract_strided_slice %10 {offsets = [22, 0], sizes = [1, 128], strides = [1, 1]} : vector<27x128xf32> to vector<1x128xf32>
    %212 = vector.shape_cast %211 : vector<1x128xf32> to vector<128xf32>
    %213 = vector.shape_cast %212 : vector<128xf32> to vector<1x1x128xf32>
    %214 = vector.broadcast %213 : vector<1x1x128xf32> to vector<16x16x128xf32>
    %215 = arith.mulf %214, %210 : vector<16x16x128xf32>
    %216 = arith.addf %209, %215 : vector<16x16x128xf32>
    %217 = vector.extract_strided_slice %182 {offsets = [3, 8, 0], sizes = [16, 16, 128], strides = [1, 1, 1]} : vector<22x32x128xf32> to vector<16x16x128xf32>
    %218 = vector.extract_strided_slice %10 {offsets = [23, 0], sizes = [1, 128], strides = [1, 1]} : vector<27x128xf32> to vector<1x128xf32>
    %219 = vector.shape_cast %218 : vector<1x128xf32> to vector<128xf32>
    %220 = vector.shape_cast %219 : vector<128xf32> to vector<1x1x128xf32>
    %221 = vector.broadcast %220 : vector<1x1x128xf32> to vector<16x16x128xf32>
    %222 = arith.mulf %221, %217 : vector<16x16x128xf32>
    %223 = arith.addf %216, %222 : vector<16x16x128xf32>
    %224 = vector.extract_strided_slice %180 {offsets = [6, 8, 0], sizes = [16, 16, 128], strides = [1, 1, 1]} : vector<22x32x128xf32> to vector<16x16x128xf32>
    %225 = vector.extract_strided_slice %10 {offsets = [24, 0], sizes = [1, 128], strides = [1, 1]} : vector<27x128xf32> to vector<1x128xf32>
    %226 = vector.shape_cast %225 : vector<1x128xf32> to vector<128xf32>
    %227 = vector.shape_cast %226 : vector<128xf32> to vector<1x1x128xf32>
    %228 = vector.broadcast %227 : vector<1x1x128xf32> to vector<16x16x128xf32>
    %229 = arith.mulf %228, %224 : vector<16x16x128xf32>
    %230 = arith.addf %223, %229 : vector<16x16x128xf32>
    %231 = vector.extract_strided_slice %177 {offsets = [6, 8, 0], sizes = [16, 16, 128], strides = [1, 1, 1]} : vector<22x32x128xf32> to vector<16x16x128xf32>
    %232 = vector.extract_strided_slice %10 {offsets = [25, 0], sizes = [1, 128], strides = [1, 1]} : vector<27x128xf32> to vector<1x128xf32>
    %233 = vector.shape_cast %232 : vector<1x128xf32> to vector<128xf32>
    %234 = vector.shape_cast %233 : vector<128xf32> to vector<1x1x128xf32>
    %235 = vector.broadcast %234 : vector<1x1x128xf32> to vector<16x16x128xf32>
    %236 = arith.mulf %235, %231 : vector<16x16x128xf32>
    %237 = arith.addf %230, %236 : vector<16x16x128xf32>
    %238 = vector.extract_strided_slice %182 {offsets = [6, 8, 0], sizes = [16, 16, 128], strides = [1, 1, 1]} : vector<22x32x128xf32> to vector<16x16x128xf32>
    %239 = vector.extract_strided_slice %10 {offsets = [26, 0], sizes = [1, 128], strides = [1, 1]} : vector<27x128xf32> to vector<1x128xf32>
    %240 = vector.shape_cast %239 : vector<1x128xf32> to vector<128xf32>
    %241 = vector.shape_cast %240 : vector<128xf32> to vector<1x1x128xf32>
    %242 = vector.broadcast %241 : vector<1x1x128xf32> to vector<16x16x128xf32>
    %243 = arith.mulf %242, %238 : vector<16x16x128xf32>
    %244 = arith.addf %237, %243 : vector<16x16x128xf32>
    %245 = arith.mulf %171, %244 : vector<16x16x128xf32>
    %246 = vector.shape_cast %245 : vector<16x16x128xf32> to vector<256x128xf32>
    %247 = arith.truncf %246 : vector<256x128xf32> to vector<256x128xbf16>
    %c0_41 = arith.constant 0 : index
    %c0_42 = arith.constant 0 : index
    %248 = vector.load %arg5[%c0_41, %c0_42] : memref<128x4xbf16, #tpu.memory_space<vmem>>, vector<128x4xbf16>
    %cst_43 = arith.constant dense<0.000000e+00> : vector<256x4xf32>
    %249 = tpu.matmul %247, %248, %cst_43 {dimension_numbers = #tpu.dot_dimension_numbers<[1], [0], [0], [1], [0, 0, 1, 1], [], []>} : vector<256x128xbf16>, vector<128x4xbf16>, vector<256x4xf32> -> vector<256x4xf32>
    %250 = vector.shape_cast %249 : vector<256x4xf32> to vector<16x16x4xf32>
    %c0_44 = arith.constant 0 : index
    %c0_45 = arith.constant 0 : index
    %c0_46 = arith.constant 0 : index
    %c0_47 = arith.constant 0 : index
    %251 = vector.load %arg6[%c0_44, %c0_45, %c0_46, %c0_47] : memref<1x16x16x4xf32, #tpu.memory_space<vmem>>, vector<1x16x16x4xf32>
    %252 = vector.shape_cast %251 : vector<1x16x16x4xf32> to vector<16x16x4xf32>
    %253 = vector.shape_cast %250 : vector<16x16x4xf32> to vector<1x16x16x4xf32>
    tpu.vector_store %arg6[%c0_44, %c0_45, %c0_46, %c0_47], %253 {strides = array<i32>} : memref<1x16x16x4xf32, #tpu.memory_space<vmem>>, vector<1x16x16x4xf32>,
    return
  }
  func.func @transform_0(%arg0: i32, %arg1: i32) -> (i32, i32, i32, i32) {
    %c0_i32 = arith.constant 0 : i32
    %c0_i32_0 = arith.constant 0 : i32
    %c0_i32_1 = arith.constant 0 : i32
    %c0_i32_2 = arith.constant 0 : i32
    return %arg0, %c0_i32, %c0_i32_0, %c0_i32_1 : i32, i32, i32, i32
  }
  func.func @transform_1(%arg0: i32, %arg1: i32) -> (i32, i32, i32) {
    %c0_i32 = arith.constant 0 : i32
    %c0_i32_0 = arith.constant 0 : i32
    %c0_i32_1 = arith.constant 0 : i32
    %c0_i32_2 = arith.constant 0 : i32
    return %c0_i32, %c0_i32_0, %c0_i32_1 : i32, i32, i32
  }
  func.func @transform_2(%arg0: i32, %arg1: i32) -> (i32, i32) {
    %c0_i32 = arith.constant 0 : i32
    %c0_i32_0 = arith.constant 0 : i32
    %c0_i32_1 = arith.constant 0 : i32
    return %c0_i32, %c0_i32_0 : i32, i32
  }
  func.func @transform_3(%arg0: i32, %arg1: i32) -> (i32, i32) {
    %c0_i32 = arith.constant 0 : i32
    %c0_i32_0 = arith.constant 0 : i32
    %c0_i32_1 = arith.constant 0 : i32
    return %c0_i32, %c0_i32_0 : i32, i32
  }
  func.func @transform_4(%arg0: i32, %arg1: i32) -> (i32, i32, i32, i32) {
    %c0_i32 = arith.constant 0 : i32
    %c0_i32_0 = arith.constant 0 : i32
    %c0_i32_1 = arith.constant 0 : i32
    return %arg0, %arg1, %c0_i32, %c0_i32_0 : i32, i32, i32, i32
  }
}

</mosaic_0001>

<llo_original>
// kernel: tpu_custom_call.1
$region0: #{tpu_custom_call.1}
  #allocation0 [shape = 'u32[]', space=smem, size = 0x4, offset = 0x4, fixed_abs, tag = 'smem constant byte address 0x4 - core index']
  #allocation1 [shape = 'u32[144,128]{1,0:T(1,128)}', space=vmem, size = 0x12000, scoped, tag = 'internal scratch']
  #allocation2 [shape = 'f32[22,32,128]{2,1,0:T(8,128)}', space=vmem, size = 0x58000, scoped, tag = 'scratch operand']
  %s0 = inlined_call_operand.vmem [shape: f32[2,22,16,4], index: 0, kind: input, shape index: {}]
  %s1 = inlined_call_operand.vmem [shape: bf16[3,4,128], index: 1, kind: input, shape index: {}]
  %s2 = inlined_call_operand.vmem [shape: f32[27,128], index: 2, kind: input, shape index: {}]
  %s3 = inlined_call_operand.vmem [shape: bf16[128,4], index: 3, kind: input, shape index: {}]
  %s4 = inlined_call_operand.vmem [shape: f32[2,16,16,4], index: 4, kind: output, shape index: {}]
  %s5 = sld [smem:[#allocation0]]
  $region49: #{tpu_custom_call.1} parent=0
    _
  %s7 = ssub.s32 1, %s5
  %s8 = scalar_select 0, %s7, %s5
  loop: start=0, step=1, limit=4
  $region2: #{tpu_custom_call.1} parent=0 // loop_pre_header
    _
  $region3: #{tpu_custom_call.1} parent=0 // loop_header
    %s10 = sphi 0, %s14
    %p11 = scmp.ge.s32.totalorder %s10, 4
    %s17 = sphi 0, %s29
    %s18 = sphi 0, %s25
    %s19 = sphi 0, %s17
    %s20 = sphi 0, %s18
    %s21 = sphi 0, %s19
    %s22 = sphi 0, %s20
    %s32 = sphi 0, %s34
    %s35 = sphi 0, %s32
    %s36 = sphi 0, %s35
    %s52 = sphi 0, %s36
    %s56 = sphi 0, %s56
    %s58 = sphi 0, %s56
    %s59 = sphi 0, %s58
    %s73 = sphi 0, %s59
    %s77 = sphi 0, %s77
    %s79 = sphi 0, %s77
    %s80 = sphi 0, %s79
    %s94 = sphi 0, %s80
    %s98 = sphi 0, %s98
    %s100 = sphi 0, %s98
    %s101 = sphi 0, %s100
    %s115 = sphi 0, %s101
    %s123 = sphi 0, %s125
    %s126 = sphi 0, %s123
    %s127 = sphi 0, %s126
    %s143 = sphi 0, %s127
  $region4: #{tpu_custom_call.1} parent=0 // loop_header_branch
    %13 = sbr.rel (%p11) target = $region8
  $region5: #{tpu_custom_call.1} parent=0 // loop_body
    %s15 = ssub.s32 %s10, 1
    %s16 = ssub.s32 %s10, 2
    %s23 = sadd.s32 1, %s18
    %p24 = scmp.ge.s32.totalorder %s23, 1
    %s25 = scalar_select %p24, 0, %s23
    %s26 = sadd.s32 1, %s17
    %s27 = scalar_select %p24, %s26, %s17
    %p28 = scmp.ge.s32.totalorder %s27, 2
    %s29 = scalar_select %p28, 0, %s27
    %s30 = ssub.s32 %s17, %s29
    %p31 = scmp.eq.s32.totalorder %s30, 0
    %s33 = sadd.s32 %s32, 1
    %s34 = scalar_select %p31, %s32, %s33
    %p37 = pneg %p31
    %p38 = scmp.eq.s32.totalorder %s10, 1
    %p39 = por %p37, %p38
    %p40 = scmp.ne.s32.totalorder %s32, %s35
    %p41 = scmp.eq.s32.totalorder %s10, 0
    %p42 = por %p40, %p41
    %p43 = scmp.ne.s32.totalorder %s32, %s35
    %p44 = scmp.eq.s32.totalorder %s15, 1
    %p45 = por %p43, %p44
    %p46 = scmp.ne.s32.totalorder %s35, %s36
    %p47 = scmp.eq.s32.totalorder %s15, 0
    %p48 = por %p46, %p47
    %p49 = scmp.ne.s32.totalorder %s35, %s36
    %p50 = scmp.eq.s32.totalorder %s16, 1
    %p51 = por %p49, %p50
    %p53 = scmp.ne.s32.totalorder %s36, %s52
    %p54 = scmp.eq.s32.totalorder %s16, 0
    %p55 = por %p53, %p54
    %s57 = sadd.s32 %s56, 1
    %p60 = scmp.eq.s32.totalorder %s10, 1
    %p61 = scmp.ne.s32.totalorder %s56, %s58
    %p62 = scmp.eq.s32.totalorder %s10, 0
    %p63 = por %p61, %p62
    %p64 = scmp.ne.s32.totalorder %s56, %s58
    %p65 = scmp.eq.s32.totalorder %s15, 1
    %p66 = por %p64, %p65
    %p67 = scmp.ne.s32.totalorder %s58, %s59
    %p68 = scmp.eq.s32.totalorder %s15, 0
    %p69 = por %p67, %p68
    %p70 = scmp.ne.s32.totalorder %s58, %s59
    %p71 = scmp.eq.s32.totalorder %s16, 1
    %p72 = por %p70, %p71
    %p74 = scmp.ne.s32.totalorder %s59, %s73
    %p75 = scmp.eq.s32.totalorder %s16, 0
    %p76 = por %p74, %p75
    %s78 = sadd.s32 %s77, 1
    %p81 = scmp.eq.s32.totalorder %s10, 1
    %p82 = scmp.ne.s32.totalorder %s77, %s79
    %p83 = scmp.eq.s32.totalorder %s10, 0
    %p84 = por %p82, %p83
    %p85 = scmp.ne.s32.totalorder %s77, %s79
    %p86 = scmp.eq.s32.totalorder %s15, 1
    %p87 = por %p85, %p86
    %p88 = scmp.ne.s32.totalorder %s79, %s80
    %p89 = scmp.eq.s32.totalorder %s15, 0
    %p90 = por %p88, %p89
    %p91 = scmp.ne.s32.totalorder %s79, %s80
    %p92 = scmp.eq.s32.totalorder %s16, 1
    %p93 = por %p91, %p92
    %p95 = scmp.ne.s32.totalorder %s80, %s94
    %p96 = scmp.eq.s32.totalorder %s16, 0
    %p97 = por %p95, %p96
    %s99 = sadd.s32 %s98, 1
    %p102 = scmp.eq.s32.totalorder %s10, 1
    %p103 = scmp.ne.s32.totalorder %s98, %s100
    %p104 = scmp.eq.s32.totalorder %s10, 0
    %p105 = por %p103, %p104
    %p106 = scmp.ne.s32.totalorder %s98, %s100
    %p107 = scmp.eq.s32.totalorder %s15, 1
    %p108 = por %p106, %p107
    %p109 = scmp.ne.s32.totalorder %s100, %s101
    %p110 = scmp.eq.s32.totalorder %s15, 0
    %p111 = por %p109, %p110
    %p112 = scmp.ne.s32.totalorder %s100, %s101
    %p113 = scmp.eq.s32.totalorder %s16, 1
    %p114 = por %p112, %p113
    %p116 = scmp.ne.s32.totalorder %s101, %s115
    %p117 = scmp.eq.s32.totalorder %s16, 0
    %p118 = por %p116, %p117
    %s119 = ssub.s32 %s17, %s29
    %s120 = ssub.s32 %s18, %s25
    %s121 = sor.u32 %s119, %s120
    %p122 = scmp.eq.s32.totalorder %s121, 0
    %s124 = sadd.s32 %s123, 1
    %s125 = scalar_select %p122, %s123, %s124
    %p128 = pneg %p122
    %p129 = scmp.eq.s32.totalorder %s10, 1
    %p130 = por %p128, %p129
    %p131 = scmp.ne.s32.totalorder %s123, %s126
    %p132 = scmp.eq.s32.totalorder %s10, 0
    %p133 = por %p131, %p132
    %p134 = scmp.ne.s32.totalorder %s123, %s126
    %p135 = scmp.eq.s32.totalorder %s15, 1
    %p136 = por %p134, %p135
    %p137 = scmp.ne.s32.totalorder %s126, %s127
    %p138 = scmp.eq.s32.totalorder %s15, 0
    %p139 = por %p137, %p138
    %p140 = scmp.ne.s32.totalorder %s126, %s127
    %p141 = scmp.eq.s32.totalorder %s16, 1
    %p142 = por %p140, %p141
    %p144 = scmp.ne.s32.totalorder %s127, %s143
    %p145 = scmp.eq.s32.totalorder %s16, 0
    %p146 = por %p144, %p145
    %p147 = scmp.le.s32.totalorder 1, %s10
    %p148 = scmp.lt.s32.totalorder %s10, 3
    %p149 = pnand %p147, %p148
    %p150 = pneg %p149
    // Predicated region
    $region9: #{tpu_custom_call.1} parent=5 // pred_check
      _
    $region10: #{tpu_custom_call.1} parent=5 // pred_check_branch
      %152 = sbr.rel (%p149) target = $region12
    $region11: #{tpu_custom_call.1} parent=5 // pred_region
      %s153 = ssub.s32 %s10, 1
      // Predicated region
      $region13: #{tpu_custom_call.1} parent=11 // pred_check
        %p154 = pneg %p69
      $region14: #{tpu_custom_call.1} parent=11 // pred_check_branch
        %156 = sbr.rel (%p154) target = $region16
      $region15: #{tpu_custom_call.1} parent=11 // pred_region
        _
      $region16: #{tpu_custom_call.1} parent=11 // pred_fallthru
        _
      // Predicated region
      $region17: #{tpu_custom_call.1} parent=11 // pred_check
        %p157 = pneg %p90
      $region18: #{tpu_custom_call.1} parent=11 // pred_check_branch
        %159 = sbr.rel (%p157) target = $region20
      $region19: #{tpu_custom_call.1} parent=11 // pred_region
        _
      $region20: #{tpu_custom_call.1} parent=11 // pred_fallthru
        _
      // Predicated region
      $region21: #{tpu_custom_call.1} parent=11 // pred_check
        %p160 = pneg %p111
      $region22: #{tpu_custom_call.1} parent=11 // pred_check_branch
        %162 = sbr.rel (%p160) target = $region24
      $region23: #{tpu_custom_call.1} parent=11 // pred_region
        _
      $region24: #{tpu_custom_call.1} parent=11 // pred_fallthru
        _
    $region12: #{tpu_custom_call.1} parent=5 // pred_fallthru
      _
    %p163 = scmp.lt.s32.totalorder %s10, 2
    // Predicated region
    $region25: #{tpu_custom_call.1} parent=5 // pred_check
      %p164 = pneg %p163
    $region26: #{tpu_custom_call.1} parent=5 // pred_check_branch
      %166 = sbr.rel (%p164) target = $region28
    $region27: #{tpu_custom_call.1} parent=5 // pred_region
      // Predicated region
      $region29: #{tpu_custom_call.1} parent=27 // pred_check
        %p167 = pneg %p42
      $region30: #{tpu_custom_call.1} parent=27 // pred_check_branch
        %169 = sbr.rel (%p167) target = $region32
      $region31: #{tpu_custom_call.1} parent=27 // pred_region
        %p170 = scmp.lt.s32.totalorder %s17, 1
        %s171 = scalar_select %p170, %s17, 1
        %s172 = smul.addr %s171, 44
        %s173 = smul.addr %s172, 8
        %s174 = scalar_lea.vmem %s0, %s173
      $region32: #{tpu_custom_call.1} parent=27 // pred_fallthru
        _
    $region28: #{tpu_custom_call.1} parent=5 // pred_fallthru
      _
    %p175 = scmp.le.s32.totalorder 1, %s10
    %p176 = scmp.lt.s32.totalorder %s10, 3
    %p177 = pnand %p175, %p176
    %p178 = pneg %p177
    // Predicated region
    $region33: #{tpu_custom_call.1} parent=5 // pred_check
      _
    $region34: #{tpu_custom_call.1} parent=5 // pred_check_branch
      %180 = sbr.rel (%p177) target = $region36
    $region35: #{tpu_custom_call.1} parent=5 // pred_region
      %s181 = ssub.s32 %s10, 1
      %p182 = scmp.lt.s32.totalorder %s19, 1
      %s183 = scalar_select %p182, %s19, 1
      %s184 = smul.addr %s183, 44
      %s185 = smul.addr %s184, 8
      %s186 = scalar_lea.vmem %s0, %s185
      %p187 = pneg %p48
      %p188 = pneg %p45
      %p189 = pneg %p69
      %p190 = pneg %p66
      %p191 = pneg %p90
      %p192 = pneg %p87
      %p193 = pneg %p111
      %p194 = pneg %p108
      %p195 = pneg %p139
      %p196 = pneg %p136
      %s197 = smul.u32 16, %s20
      %p198 = scmp.lt.s32.totalorder %s19, 1
      %s199 = scalar_select %p198, %s19, 1
      %p200 = scmp.lt.s32.totalorder %s197, 15
      %s201 = scalar_select %p200, %s197, 15
      %s202 = smul.addr %s201, 2
      %s203 = smul.addr %s199, 32
      %s204 = sadd.s32 %s202, %s203
      %s205 = smul.addr %s204, 8
      %s206 = scalar_lea.vmem %s4, %s205
      %p207 = scmp.lt.s32.totalorder %s19, 1
      %s208 = scalar_select %p207, %s19, 1
      %s209 = smul.addr %s208, 44
      %s210 = smul.addr %s209, 8
      %s211 = scalar_lea.vmem %s0, %s210
      %s212 = smul.u32 16, %s20
      %p213 = scmp.lt.s32.totalorder %s19, 1
      %s214 = scalar_select %p213, %s19, 1
      %p215 = scmp.lt.s32.totalorder %s212, 15
      %s216 = scalar_select %p215, %s212, 15
      %s217 = smul.addr %s216, 2
      %s218 = smul.addr %s214, 32
      %s219 = sadd.s32 %s217, %s218
      %s220 = smul.addr %s219, 8
      %s221 = scalar_lea.vmem %s4, %s220
      %s222 = smul.u32 16, %s20
      %s224 = smul.u32 %s20, 16
      %s225 = smul.u32 %s224, 16
      %s226 = scalar_lea.vmem %s211, %s225
      %v227 = vld [vmem:[%s226] sm:$0xff]
      %v228 = vld [vmem:[%s226 + $0x8] sm:$0xff]
      %v229 = vld [vmem:[%s226 + $0x10] sm:$0xff]
      %v230 = vld [vmem:[%s226 + $0x18] sm:$0xff]
      %v231 = vld [vmem:[%s226 + $0x20] sm:$0xff]
      %v232 = vld [vmem:[%s226 + $0x28] sm:$0xff]
      %v233 = vld [vmem:[%s226 + $0x30] sm:$0xff]
      %v234 = vld [vmem:[%s226 + $0x38] sm:$0xff]
      %v235 = vld [vmem:[%s226 + $0x40] sm:$0xff]
      %v236 = vld [vmem:[%s226 + $0x48] sm:$0xff]
      %v237 = vld [vmem:[%s226 + $0x50] sm:$0xff]
      %v238 = vld [vmem:[%s226 + $0x58] sm:$0xff]
      %v239 = vld [vmem:[%s226 + $0x60] sm:$0xff]
      %v240 = vld [vmem:[%s226 + $0x68] sm:$0xff]
      %v241 = vld [vmem:[%s226 + $0x70] sm:$0xff]
      %v242 = vld [vmem:[%s226 + $0x78] sm:$0xff]
      %v243 = vld [vmem:[%s226 + $0x80] sm:$0xff]
      %v244 = vld [vmem:[%s226 + $0x88] sm:$0xff]
      %v245 = vld [vmem:[%s226 + $0x90] sm:$0xff]
      %v246 = vld [vmem:[%s226 + $0x98] sm:$0xff]
      %v247 = vld [vmem:[%s226 + $0xa0] sm:$0xff]
      %v248 = vld [vmem:[%s226 + $0xa8] sm:$0xff]
      %v249 = vld [vmem:[%s226 + $0xb0] sm:$0xff]
      %v250 = vld [vmem:[%s226 + $0xb8] sm:$0xff]
      %v251 = vld [vmem:[%s226 + $0xc0] sm:$0xff]
      %v252 = vld [vmem:[%s226 + $0xc8] sm:$0xff]
      %v253 = vld [vmem:[%s226 + $0xd0] sm:$0xff]
      %v254 = vld [vmem:[%s226 + $0xd8] sm:$0xff]
      %v255 = vld [vmem:[%s226 + $0xe0] sm:$0xff]
      %v256 = vld [vmem:[%s226 + $0xe8] sm:$0xff]
      %v257 = vld [vmem:[%s226 + $0xf0] sm:$0xff]
      %v258 = vld [vmem:[%s226 + $0xf8] sm:$0xff]
      %v259 = vld [vmem:[%s226 + $0x100] sm:$0xff]
      %v260 = vld [vmem:[%s226 + $0x108] sm:$0xff]
      %v261 = vld [vmem:[%s226 + $0x110] sm:$0xff]
      %v262 = vld [vmem:[%s226 + $0x118] sm:$0xff]
      %v263 = vld [vmem:[%s226 + $0x120] sm:$0xff]
      %v264 = vld [vmem:[%s226 + $0x128] sm:$0xff]
      %v265 = vld [vmem:[%s226 + $0x130] sm:$0xff]
      %v266 = vld [vmem:[%s226 + $0x138] sm:$0xff]
      %v267 = vld [vmem:[%s226 + $0x140] sm:$0xff]
      %v268 = vld [vmem:[%s226 + $0x148] sm:$0xff]
      %v269 = vld [vmem:[%s226 + $0x150] sm:$0xff]
      %v270 = vld [vmem:[%s226 + $0x158] sm:$0xff]
      %v271 = vpack.c.bf16 %v228, %v227
      %v272 = vpack.c.bf16 %v230, %v229
      %v273 = vpack.c.bf16 %v232, %v231
      %v274 = vpack.c.bf16 %v234, %v233
      %v275 = vpack.c.bf16 %v236, %v235
      %v276 = vpack.c.bf16 %v238, %v237
      %v277 = vpack.c.bf16 %v240, %v239
      %v278 = vpack.c.bf16 %v242, %v241
      %v279 = vpack.c.bf16 %v244, %v243
      %v280 = vpack.c.bf16 %v246, %v245
      %v281 = vpack.c.bf16 %v248, %v247
      %v282 = vpack.c.bf16 %v250, %v249
      %v283 = vpack.c.bf16 %v252, %v251
      %v284 = vpack.c.bf16 %v254, %v253
      %v285 = vpack.c.bf16 %v256, %v255
      %v286 = vpack.c.bf16 %v258, %v257
      %v287 = vpack.c.bf16 %v260, %v259
      %v288 = vpack.c.bf16 %v262, %v261
      %v289 = vpack.c.bf16 %v264, %v263
      %v290 = vpack.c.bf16 %v266, %v265
      %v291 = vpack.c.bf16 %v268, %v267
      %v292 = vpack.c.bf16 %v270, %v269
      %293 = vst [vmem:[#allocation2] sm:$0xff] 0.0
      %294 = vst [vmem:[#allocation2 + $0x20] sm:$0xff] 0.0
      %295 = vst [vmem:[#allocation2 + $0x40] sm:$0xff] 0.0
      %296 = vst [vmem:[#allocation2 + $0x60] sm:$0xff] 0.0
      %297 = vst [vmem:[#allocation2 + $0x80] sm:$0xff] 0.0
      %298 = vst [vmem:[#allocation2 + $0xa0] sm:$0xff] 0.0
      %299 = vst [vmem:[#allocation2 + $0xc0] sm:$0xff] 0.0
      %300 = vst [vmem:[#allocation2 + $0xe0] sm:$0xff] 0.0
      %301 = vst [vmem:[#allocation2 + $0x100] sm:$0xff] 0.0
      %302 = vst [vmem:[#allocation2 + $0x120] sm:$0xff] 0.0
      %303 = vst [vmem:[#allocation2 + $0x140] sm:$0xff] 0.0
      %304 = vst [vmem:[#allocation2 + $0x160] sm:$0xff] 0.0
      %305 = vst [vmem:[#allocation2 + $0x180] sm:$0xff] 0.0
      %306 = vst [vmem:[#allocation2 + $0x1a0] sm:$0xff] 0.0
      %307 = vst [vmem:[#allocation2 + $0x1c0] sm:$0xff] 0.0
      %308 = vst [vmem:[#allocation2 + $0x1e0] sm:$0xff] 0.0
      %309 = vst [vmem:[#allocation2 + $0x200] sm:$0xff] 0.0
      %310 = vst [vmem:[#allocation2 + $0x220] sm:$0xff] 0.0
      %311 = vst [vmem:[#allocation2 + $0x240] sm:$0xff] 0.0
      %312 = vst [vmem:[#allocation2 + $0x260] sm:$0xff] 0.0
      %313 = vst [vmem:[#allocation2 + $0x280] sm:$0xff] 0.0
      %314 = vst [vmem:[#allocation2 + $0x2a0] sm:$0xff] 0.0
      %315 = vst [vmem:[#allocation2 + $0x18] sm:$0xff] 0.0
      %316 = vst [vmem:[#allocation2 + $0x38] sm:$0xff] 0.0
      %317 = vst [vmem:[#allocation2 + $0x58] sm:$0xff] 0.0
      %318 = vst [vmem:[#allocation2 + $0x78] sm:$0xff] 0.0
      %319 = vst [vmem:[#allocation2 + $0x98] sm:$0xff] 0.0
      %320 = vst [vmem:[#allocation2 + $0xb8] sm:$0xff] 0.0
      %321 = vst [vmem:[#allocation2 + $0xd8] sm:$0xff] 0.0
      %322 = vst [vmem:[#allocation2 + $0xf8] sm:$0xff] 0.0
      %323 = vst [vmem:[#allocation2 + $0x118] sm:$0xff] 0.0
      %324 = vst [vmem:[#allocation2 + $0x138] sm:$0xff] 0.0
      %325 = vst [vmem:[#allocation2 + $0x158] sm:$0xff] 0.0
      %326 = vst [vmem:[#allocation2 + $0x178] sm:$0xff] 0.0
      %327 = vst [vmem:[#allocation2 + $0x198] sm:$0xff] 0.0
      %328 = vst [vmem:[#allocation2 + $0x1b8] sm:$0xff] 0.0
      %329 = vst [vmem:[#allocation2 + $0x1d8] sm:$0xff] 0.0
      %330 = vst [vmem:[#allocation2 + $0x1f8] sm:$0xff] 0.0
      %331 = vst [vmem:[#allocation2 + $0x218] sm:$0xff] 0.0
      %332 = vst [vmem:[#allocation2 + $0x238] sm:$0xff] 0.0
      %333 = vst [vmem:[#allocation2 + $0x258] sm:$0xff] 0.0
      %334 = vst [vmem:[#allocation2 + $0x278] sm:$0xff] 0.0
      %335 = vst [vmem:[#allocation2 + $0x298] sm:$0xff] 0.0
      %336 = vst [vmem:[#allocation2 + $0x2b8] sm:$0xff] 0.0
      %v337 = vld [vmem:[%s2] sm:$0xff]
      %v338 = vld [vmem:[%s2 + $0x8] sm:$0xff]
      %v339 = vld [vmem:[%s2 + $0x10] sm:$0xff]
      %v340 = vld [vmem:[%s2 + $0x18] sm:$0x7]
      %v341 = vld [vmem:[%s1] sm:$0x3]
      %vm342 = vcmask 31744
      %v344 = vsel %vm342, %v271, 0
      %v347 = vsel %vm342, %v272, 0
      %v350 = vsel %vm342, %v273, 0
      %v353 = vsel %vm342, %v274, 0
      %v356 = vsel %vm342, %v275, 0
      %v359 = vsel %vm342, %v276, 0
      %v362 = vsel %vm342, %v277, 0
      %v365 = vsel %vm342, %v278, 0
      %v368 = vsel %vm342, %v279, 0
      %v371 = vsel %vm342, %v280, 0
      %v374 = vsel %vm342, %v281, 0
      %v377 = vsel %vm342, %v282, 0
      %v380 = vsel %vm342, %v283, 0
      %v383 = vsel %vm342, %v284, 0
      %v386 = vsel %vm342, %v285, 0
      %v389 = vsel %vm342, %v286, 0
      %v392 = vsel %vm342, %v287, 0
      %v395 = vsel %vm342, %v288, 0
      %v398 = vsel %vm342, %v289, 0
      %v401 = vsel %vm342, %v290, 0
      %v404 = vsel %vm342, %v291, 0
      %v407 = vsel %vm342, %v292, 0
      %vm409 = vcmask 1041408
      %v411 = vsel %vm409, %v341, 0
      %413 = vmatprep.subr.bf16.mxu0 0
      %414 = vmatpush1.bf16.msra.mxu0 0
      %415 = vmatprep.subr.bf16.mxu0 0
      %416 = vmatpush1.bf16.msra.mxu0 0
      %417 = vmatprep.subr.bf16.mxu0 0
      %418 = vmatpush1.bf16.msra.mxu0 0
      %419 = vmatprep.subr.bf16.mxu0 0
      %420 = vmatpush1.bf16.msra.mxu0 0
      %421 = vmatprep.subr.bf16.mxu0 0
      %422 = vmatpush1.bf16.msra.mxu0 0
      %423 = vmatprep.subr.bf16.mxu0 0
      %424 = vmatpush1.bf16.msra.mxu0 0
      %425 = vmatprep.subr.bf16.mxu0 0
      %426 = vmatpush1.bf16.msra.mxu0 0
      %427 = vmatprep.subr.bf16.mxu0 0
      %428 = vmatpush1.bf16.msra.mxu0 %v411
      %429 = vmatprep.subr.bf16.mxu0 0
      %430 = vmatpush2.bf16.msra.mxu0 0
      %431 = vmatprep.subr.bf16.mxu0 0
      %432 = vmatpush2.bf16.msra.mxu0 0
      %433 = vmatprep.subr.bf16.mxu0 0
      %434 = vmatpush2.bf16.msra.mxu0 0
      %435 = vmatprep.subr.bf16.mxu0 0
      %436 = vmatpush2.bf16.msra.mxu0 0
      %437 = vmatprep.subr.bf16.mxu0 0
      %438 = vmatpush2.bf16.msra.mxu0 0
      %439 = vmatprep.subr.bf16.mxu0 0
      %440 = vmatpush2.bf16.msra.mxu0 0
      %441 = vmatprep.subr.bf16.mxu0 0
      %442 = vmatpush2.bf16.msra.mxu0 0
      %443 = vmatprep.subr.bf16.mxu0 0
      %444 = vmatpush2.bf16.msra.mxu0 0
      %445 = vmatprep.mubr.bf16.mxu0 0
      %446 = vmatmul.mubr.bf16.gmra.mxu0 %v344
      %v447 = vpop.f32.mrf.mxu0
      %v448 = vadd.f32 0.0, %v447
      %v449 = vpop.f32.mrf.mxu0
      %v450 = vpop.f32.mrf.mxu0
      %v451 = vadd.f32 0.0, %v450
      %v452 = vpop.f32.mrf.mxu0
      %453 = vmatprep.mubr.bf16.mxu0 0
      %454 = vmatmul.mubr.bf16.gmra.mxu0 %v347
      %v455 = vpop.f32.mrf.mxu0
      %v456 = vadd.f32 0.0, %v455
      %v457 = vpop.f32.mrf.mxu0
      %v458 = vpop.f32.mrf.mxu0
      %v459 = vadd.f32 0.0, %v458
      %v460 = vpop.f32.mrf.mxu0
      %461 = vmatprep.mubr.bf16.mxu0 0
      %462 = vmatmul.mubr.bf16.gmra.mxu0 %v350
      %v463 = vpop.f32.mrf.mxu0
      %v464 = vadd.f32 0.0, %v463
      %v465 = vpop.f32.mrf.mxu0
      %v466 = vpop.f32.mrf.mxu0
      %v467 = vadd.f32 0.0, %v466
      %v468 = vpop.f32.mrf.mxu0
      %469 = vmatprep.mubr.bf16.mxu0 0
      %470 = vmatmul.mubr.bf16.gmra.mxu0 %v353
      %v471 = vpop.f32.mrf.mxu0
      %v472 = vadd.f32 0.0, %v471
      %v473 = vpop.f32.mrf.mxu0
      %v474 = vpop.f32.mrf.mxu0
      %v475 = vadd.f32 0.0, %v474
      %v476 = vpop.f32.mrf.mxu0
      %477 = vmatprep.mubr.bf16.mxu0 0
      %478 = vmatmul.mubr.bf16.gmra.mxu0 %v356
      %v479 = vpop.f32.mrf.mxu0
      %v480 = vadd.f32 0.0, %v479
      %v481 = vpop.f32.mrf.mxu0
      %v482 = vpop.f32.mrf.mxu0
      %v483 = vadd.f32 0.0, %v482
      %v484 = vpop.f32.mrf.mxu0
      %485 = vmatprep.mubr.bf16.mxu0 0
      %486 = vmatmul.mubr.bf16.gmra.mxu0 %v359
      %v487 = vpop.f32.mrf.mxu0
      %v488 = vadd.f32 0.0, %v487
      %v489 = vpop.f32.mrf.mxu0
      %v490 = vpop.f32.mrf.mxu0
      %v491 = vadd.f32 0.0, %v490
      %v492 = vpop.f32.mrf.mxu0
      %493 = vmatprep.mubr.bf16.mxu0 0
      %494 = vmatmul.mubr.bf16.gmra.mxu0 %v362
      %v495 = vpop.f32.mrf.mxu0
      %v496 = vadd.f32 0.0, %v495
      %v497 = vpop.f32.mrf.mxu0
      %v498 = vpop.f32.mrf.mxu0
      %v499 = vadd.f32 0.0, %v498
      %v500 = vpop.f32.mrf.mxu0
      %501 = vmatprep.mubr.bf16.mxu0 0
      %502 = vmatmul.mubr.bf16.gmra.mxu0 %v365
      %v503 = vpop.f32.mrf.mxu0
      %v504 = vadd.f32 0.0, %v503
      %v505 = vpop.f32.mrf.mxu0
      %v506 = vpop.f32.mrf.mxu0
      %v507 = vadd.f32 0.0, %v506
      %v508 = vpop.f32.mrf.mxu0
      %509 = vmatprep.mubr.bf16.mxu0 0
      %510 = vmatmul.mubr.bf16.gmra.mxu0 %v368
      %v511 = vpop.f32.mrf.mxu0
      %v512 = vadd.f32 0.0, %v511
      %v513 = vpop.f32.mrf.mxu0
      %v514 = vpop.f32.mrf.mxu0
      %v515 = vadd.f32 0.0, %v514
      %v516 = vpop.f32.mrf.mxu0
      %517 = vmatprep.mubr.bf16.mxu0 0
      %518 = vmatmul.mubr.bf16.gmra.mxu0 %v371
      %v519 = vpop.f32.mrf.mxu0
      %v520 = vadd.f32 0.0, %v519
      %v521 = vpop.f32.mrf.mxu0
      %v522 = vpop.f32.mrf.mxu0
      %v523 = vadd.f32 0.0, %v522
      %v524 = vpop.f32.mrf.mxu0
      %525 = vmatprep.mubr.bf16.mxu0 0
      %526 = vmatmul.mubr.bf16.gmra.mxu0 %v374
      %v527 = vpop.f32.mrf.mxu0
      %v528 = vadd.f32 0.0, %v527
      %v529 = vpop.f32.mrf.mxu0
      %v530 = vpop.f32.mrf.mxu0
      %v531 = vadd.f32 0.0, %v530
      %v532 = vpop.f32.mrf.mxu0
      %533 = vmatprep.mubr.bf16.mxu0 0
      %534 = vmatmul.mubr.bf16.gmra.mxu0 %v377
      %v535 = vpop.f32.mrf.mxu0
      %v536 = vadd.f32 0.0, %v535
      %v537 = vpop.f32.mrf.mxu0
      %v538 = vpop.f32.mrf.mxu0
      %v539 = vadd.f32 0.0, %v538
      %v540 = vpop.f32.mrf.mxu0
      %541 = vmatprep.mubr.bf16.mxu0 0
      %542 = vmatmul.mubr.bf16.gmra.mxu0 %v380
      %v543 = vpop.f32.mrf.mxu0
      %v544 = vadd.f32 0.0, %v543
      %v545 = vpop.f32.mrf.mxu0
      %v546 = vpop.f32.mrf.mxu0
      %v547 = vadd.f32 0.0, %v546
      %v548 = vpop.f32.mrf.mxu0
      %549 = vmatprep.mubr.bf16.mxu0 0
      %550 = vmatmul.mubr.bf16.gmra.mxu0 %v383
      %v551 = vpop.f32.mrf.mxu0
      %v552 = vadd.f32 0.0, %v551
      %v553 = vpop.f32.mrf.mxu0
      %v554 = vpop.f32.mrf.mxu0
      %v555 = vadd.f32 0.0, %v554
      %v556 = vpop.f32.mrf.mxu0
      %557 = vmatprep.mubr.bf16.mxu0 0
      %558 = vmatmul.mubr.bf16.gmra.mxu0 %v386
      %v559 = vpop.f32.mrf.mxu0
      %v560 = vadd.f32 0.0, %v559
      %v561 = vpop.f32.mrf.mxu0
      %v562 = vpop.f32.mrf.mxu0
      %v563 = vadd.f32 0.0, %v562
      %v564 = vpop.f32.mrf.mxu0
      %565 = vmatprep.mubr.bf16.mxu0 0
      %566 = vmatmul.mubr.bf16.gmra.mxu0 %v389
      %v567 = vpop.f32.mrf.mxu0
      %v568 = vadd.f32 0.0, %v567
      %v569 = vpop.f32.mrf.mxu0
      %v570 = vpop.f32.mrf.mxu0
      %v571 = vadd.f32 0.0, %v570
      %v572 = vpop.f32.mrf.mxu0
      %573 = vmatprep.mubr.bf16.mxu0 0
      %574 = vmatmul.mubr.bf16.gmra.mxu0 %v392
      %v575 = vpop.f32.mrf.mxu0
      %v576 = vadd.f32 0.0, %v575
      %v577 = vpop.f32.mrf.mxu0
      %v578 = vpop.f32.mrf.mxu0
      %v579 = vadd.f32 0.0, %v578
      %v580 = vpop.f32.mrf.mxu0
      %581 = vmatprep.mubr.bf16.mxu0 0
      %582 = vmatmul.mubr.bf16.gmra.mxu0 %v395
      %v583 = vpop.f32.mrf.mxu0
      %v584 = vadd.f32 0.0, %v583
      %v585 = vpop.f32.mrf.mxu0
      %v586 = vpop.f32.mrf.mxu0
      %v587 = vadd.f32 0.0, %v586
      %v588 = vpop.f32.mrf.mxu0
      %589 = vmatprep.mubr.bf16.mxu0 0
      %590 = vmatmul.mubr.bf16.gmra.mxu0 %v398
      %v591 = vpop.f32.mrf.mxu0
      %v592 = vadd.f32 0.0, %v591
      %v593 = vpop.f32.mrf.mxu0
      %v594 = vpop.f32.mrf.mxu0
      %v595 = vadd.f32 0.0, %v594
      %v596 = vpop.f32.mrf.mxu0
      %597 = vmatprep.mubr.bf16.mxu0 0
      %598 = vmatmul.mubr.bf16.gmra.mxu0 %v401
      %v599 = vpop.f32.mrf.mxu0
      %v600 = vadd.f32 0.0, %v599
      %v601 = vpop.f32.mrf.mxu0
      %v602 = vpop.f32.mrf.mxu0
      %v603 = vadd.f32 0.0, %v602
      %v604 = vpop.f32.mrf.mxu0
      %605 = vmatprep.mubr.bf16.mxu0 0
      %606 = vmatmul.mubr.bf16.gmra.mxu0 %v404
      %v607 = vpop.f32.mrf.mxu0
      %v608 = vadd.f32 0.0, %v607
      %v609 = vpop.f32.mrf.mxu0
      %v610 = vpop.f32.mrf.mxu0
      %v611 = vadd.f32 0.0, %v610
      %v612 = vpop.f32.mrf.mxu0
      %613 = vmatprep.mubr.bf16.mxu0 0
      %614 = vmatmul.mubr.bf16.gmra.mxu0 %v407
      %v615 = vpop.f32.mrf.mxu0
      %v616 = vadd.f32 0.0, %v615
      %v617 = vpop.f32.mrf.mxu0
      %v618 = vpop.f32.mrf.mxu0
      %v619 = vadd.f32 0.0, %v618
      %v620 = vpop.f32.mrf.mxu0
      %621 = vdwg.mxu0
      %622 = vst [vmem:[#allocation2 + $0x8] sm:$0xff] %v448
      %623 = vst [vmem:[#allocation2 + $0x10] sm:$0xff] %v451
      %624 = vst [vmem:[#allocation2 + $0x28] sm:$0xff] %v456
      %625 = vst [vmem:[#allocation2 + $0x30] sm:$0xff] %v459
      %626 = vst [vmem:[#allocation2 + $0x48] sm:$0xff] %v464
      %627 = vst [vmem:[#allocation2 + $0x50] sm:$0xff] %v467
      %628 = vst [vmem:[#allocation2 + $0x68] sm:$0xff] %v472
      %629 = vst [vmem:[#allocation2 + $0x70] sm:$0xff] %v475
      %630 = vst [vmem:[#allocation2 + $0x88] sm:$0xff] %v480
      %631 = vst [vmem:[#allocation2 + $0x90] sm:$0xff] %v483
      %632 = vst [vmem:[#allocation2 + $0xa8] sm:$0xff] %v488
      %633 = vst [vmem:[#allocation2 + $0xb0] sm:$0xff] %v491
      %634 = vst [vmem:[#allocation2 + $0xc8] sm:$0xff] %v496
      %635 = vst [vmem:[#allocation2 + $0xd0] sm:$0xff] %v499
      %636 = vst [vmem:[#allocation2 + $0xe8] sm:$0xff] %v504
      %637 = vst [vmem:[#allocation2 + $0xf0] sm:$0xff] %v507
      %638 = vst [vmem:[#allocation2 + $0x108] sm:$0xff] %v512
      %639 = vst [vmem:[#allocation2 + $0x110] sm:$0xff] %v515
      %640 = vst [vmem:[#allocation2 + $0x128] sm:$0xff] %v520
      %641 = vst [vmem:[#allocation2 + $0x130] sm:$0xff] %v523
      %642 = vst [vmem:[#allocation2 + $0x148] sm:$0xff] %v528
      %643 = vst [vmem:[#allocation2 + $0x150] sm:$0xff] %v531
      %644 = vst [vmem:[#allocation2 + $0x168] sm:$0xff] %v536
      %645 = vst [vmem:[#allocation2 + $0x170] sm:$0xff] %v539
      %646 = vst [vmem:[#allocation2 + $0x188] sm:$0xff] %v544
      %647 = vst [vmem:[#allocation2 + $0x190] sm:$0xff] %v547
      %648 = vst [vmem:[#allocation2 + $0x1a8] sm:$0xff] %v552
      %649 = vst [vmem:[#allocation2 + $0x1b0] sm:$0xff] %v555
      %650 = vst [vmem:[#allocation2 + $0x1c8] sm:$0xff] %v560
      %651 = vst [vmem:[#allocation2 + $0x1d0] sm:$0xff] %v563
      %652 = vst [vmem:[#allocation2 + $0x1e8] sm:$0xff] %v568
      %653 = vst [vmem:[#allocation2 + $0x1f0] sm:$0xff] %v571
      %654 = vst [vmem:[#allocation2 + $0x208] sm:$0xff] %v576
      %655 = vst [vmem:[#allocation2 + $0x210] sm:$0xff] %v579
      %656 = vst [vmem:[#allocation2 + $0x228] sm:$0xff] %v584
      %657 = vst [vmem:[#allocation2 + $0x230] sm:$0xff] %v587
      %658 = vst [vmem:[#allocation2 + $0x248] sm:$0xff] %v592
      %659 = vst [vmem:[#allocation2 + $0x250] sm:$0xff] %v595
      %660 = vst [vmem:[#allocation2 + $0x268] sm:$0xff] %v600
      %661 = vst [vmem:[#allocation2 + $0x270] sm:$0xff] %v603
      %662 = vst [vmem:[#allocation2 + $0x288] sm:$0xff] %v608
      %663 = vst [vmem:[#allocation2 + $0x290] sm:$0xff] %v611
      %664 = vst [vmem:[#allocation2 + $0x2a8] sm:$0xff] %v616
      %665 = vst [vmem:[#allocation2 + $0x2b0] sm:$0xff] %v619
      %v666 = vld [vmem:[#allocation2 + $0x40] sm:$0xff]
      %v667 = vld [vmem:[#allocation2 + $0x48] sm:$0xff]
      %v668 = vld [vmem:[#allocation2 + $0x50] sm:$0xff]
      %v669 = vld [vmem:[#allocation2 + $0x58] sm:$0xff]
      %v670 = vld [vmem:[#allocation2 + $0x60] sm:$0xff]
      %v671 = vld [vmem:[#allocation2 + $0x68] sm:$0xff]
      %v672 = vld [vmem:[#allocation2 + $0x70] sm:$0xff]
      %v673 = vld [vmem:[#allocation2 + $0x78] sm:$0xff]
      %v674 = vld [vmem:[#allocation2 + $0x80] sm:$0xff]
      %v675 = vld [vmem:[#allocation2 + $0x88] sm:$0xff]
      %v676 = vld [vmem:[#allocation2 + $0x90] sm:$0xff]
      %v677 = vld [vmem:[#allocation2 + $0x98] sm:$0xff]
      %v678 = vld [vmem:[#allocation2 + $0xa0] sm:$0xff]
      %v679 = vld [vmem:[#allocation2 + $0xa8] sm:$0xff]
      %v680 = vld [vmem:[#allocation2 + $0xb0] sm:$0xff]
      %v681 = vld [vmem:[#allocation2 + $0xb8] sm:$0xff]
      %v682 = vld [vmem:[#allocation2 + $0xc0] sm:$0xff]
      %v683 = vld [vmem:[#allocation2 + $0xc8] sm:$0xff]
      %v684 = vld [vmem:[#allocation2 + $0xd0] sm:$0xff]
      %v685 = vld [vmem:[#allocation2 + $0xd8] sm:$0xff]
      %v686 = vld [vmem:[#allocation2 + $0xe0] sm:$0xff]
      %v687 = vld [vmem:[#allocation2 + $0xe8] sm:$0xff]
      %v688 = vld [vmem:[#allocation2 + $0xf0] sm:$0xff]
      %v689 = vld [vmem:[#allocation2 + $0xf8] sm:$0xff]
      %v690 = vld [vmem:[#allocation2 + $0x100] sm:$0xff]
      %v691 = vld [vmem:[#allocation2 + $0x108] sm:$0xff]
      %v692 = vld [vmem:[#allocation2 + $0x110] sm:$0xff]
      %v693 = vld [vmem:[#allocation2 + $0x118] sm:$0xff]
      %v694 = vld [vmem:[#allocation2 + $0x120] sm:$0xff]
      %v695 = vld [vmem:[#allocation2 + $0x128] sm:$0xff]
      %v696 = vld [vmem:[#allocation2 + $0x130] sm:$0xff]
      %v697 = vld [vmem:[#allocation2 + $0x138] sm:$0xff]
      %v698 = vld [vmem:[#allocation2 + $0x140] sm:$0xff]
      %v699 = vld [vmem:[#allocation2 + $0x148] sm:$0xff]
      %v700 = vld [vmem:[#allocation2 + $0x150] sm:$0xff]
      %v701 = vld [vmem:[#allocation2 + $0x158] sm:$0xff]
      %v702 = vld [vmem:[#allocation2 + $0x160] sm:$0xff]
      %v703 = vld [vmem:[#allocation2 + $0x168] sm:$0xff]
      %v704 = vld [vmem:[#allocation2 + $0x170] sm:$0xff]
      %v705 = vld [vmem:[#allocation2 + $0x178] sm:$0xff]
      %v706 = vld [vmem:[#allocation2 + $0x180] sm:$0xff]
      %v707 = vld [vmem:[#allocation2 + $0x188] sm:$0xff]
      %v708 = vld [vmem:[#allocation2 + $0x190] sm:$0xff]
      %v709 = vld [vmem:[#allocation2 + $0x198] sm:$0xff]
      %v710 = vld [vmem:[#allocation2 + $0x1a0] sm:$0xff]
      %v711 = vld [vmem:[#allocation2 + $0x1a8] sm:$0xff]
      %v712 = vld [vmem:[#allocation2 + $0x1b0] sm:$0xff]
      %v713 = vld [vmem:[#allocation2 + $0x1b8] sm:$0xff]
      %v714 = vld [vmem:[#allocation2 + $0x1c0] sm:$0xff]
      %v715 = vld [vmem:[#allocation2 + $0x1c8] sm:$0xff]
      %v716 = vld [vmem:[#allocation2 + $0x1d0] sm:$0xff]
      %v717 = vld [vmem:[#allocation2 + $0x1d8] sm:$0xff]
      %v718 = vld [vmem:[#allocation2 + $0x1e0] sm:$0xff]
      %v719 = vld [vmem:[#allocation2 + $0x1e8] sm:$0xff]
      %v720 = vld [vmem:[#allocation2 + $0x1f0] sm:$0xff]
      %v721 = vld [vmem:[#allocation2 + $0x1f8] sm:$0xff]
      %v722 = vld [vmem:[#allocation2 + $0x200] sm:$0xff]
      %v723 = vld [vmem:[#allocation2 + $0x208] sm:$0xff]
      %v724 = vld [vmem:[#allocation2 + $0x210] sm:$0xff]
      %v725 = vld [vmem:[#allocation2 + $0x218] sm:$0xff]
      %v726 = vld [vmem:[#allocation2 + $0x220] sm:$0xff]
      %v727 = vld [vmem:[#allocation2 + $0x228] sm:$0xff]
      %v728 = vld [vmem:[#allocation2 + $0x230] sm:$0xff]
      %v729 = vld [vmem:[#allocation2 + $0x238] sm:$0xff]
      %v730 = vld [vmem:[#allocation2 + $0x240] sm:$0xff]
      %v731 = vld [vmem:[#allocation2 + $0x248] sm:$0xff]
      %v732 = vld [vmem:[#allocation2 + $0x250] sm:$0xff]
      %v733 = vld [vmem:[#allocation2 + $0x258] sm:$0xff]
      %v734 = vld [vmem:[#allocation2 + $0x260] sm:$0xff]
      %v735 = vld [vmem:[#allocation2 + $0x268] sm:$0xff]
      %v736 = vld [vmem:[#allocation2 + $0x270] sm:$0xff]
      %v737 = vld [vmem:[#allocation2 + $0x278] sm:$0xff]
      %v738 = vrot.slane %v666, 7
      %v739 = vrot.slane %v667, 7
      %v740 = vrot.slane %v668, 7
      %v741 = vrot.slane %v670, 7
      %v742 = vrot.slane %v671, 7
      %v743 = vrot.slane %v672, 7
      %v744 = vrot.slane %v674, 7
      %v745 = vrot.slane %v675, 7
      %v746 = vrot.slane %v676, 7
      %v747 = vrot.slane %v678, 7
      %v748 = vrot.slane %v679, 7
      %v749 = vrot.slane %v680, 7
      %v750 = vrot.slane %v682, 7
      %v751 = vrot.slane %v683, 7
      %v752 = vrot.slane %v684, 7
      %v753 = vrot.slane %v686, 7
      %v754 = vrot.slane %v687, 7
      %v755 = vrot.slane %v688, 7
      %v756 = vrot.slane %v690, 7
      %v757 = vrot.slane %v691, 7
      %v758 = vrot.slane %v692, 7
      %v759 = vrot.slane %v694, 7
      %v760 = vrot.slane %v695, 7
      %v761 = vrot.slane %v696, 7
      %v762 = vrot.slane %v698, 7
      %v763 = vrot.slane %v699, 7
      %v764 = vrot.slane %v700, 7
      %v765 = vrot.slane %v702, 7
      %v766 = vrot.slane %v703, 7
      %v767 = vrot.slane %v704, 7
      %v768 = vrot.slane %v706, 7
      %v769 = vrot.slane %v707, 7
      %v770 = vrot.slane %v708, 7
      %v771 = vrot.slane %v710, 7
      %v772 = vrot.slane %v711, 7
      %v773 = vrot.slane %v712, 7
      %v774 = vrot.slane %v714, 7
      %v775 = vrot.slane %v715, 7
      %v776 = vrot.slane %v716, 7
      %v777 = vrot.slane %v718, 7
      %v778 = vrot.slane %v719, 7
      %v779 = vrot.slane %v720, 7
      %v780 = vrot.slane %v722, 7
      %v781 = vrot.slane %v723, 7
      %v782 = vrot.slane %v724, 7
      %v783 = vrot.slane %v726, 7
      %v784 = vrot.slane %v727, 7
      %v785 = vrot.slane %v728, 7
      %v786 = vrot.slane %v730, 7
      %v787 = vrot.slane %v731, 7
      %v788 = vrot.slane %v732, 7
      %v789 = vrot.slane %v734, 7
      %v790 = vrot.slane %v735, 7
      %v791 = vrot.slane %v736, 7
      %v792 = vlaneseq
      %v793 = vshrl.u32 %v792, 7
      %vm794 = vcmp.lt.s32.totalorder %v793, 1
      %v795 = vsel %vm794, %v790, %v791
      %v796 = vsel %vm794, %v789, %v790
      %v797 = vsel %vm794, %v787, %v788
      %v798 = vsel %vm794, %v786, %v787
      %v799 = vsel %vm794, %v784, %v785
      %v800 = vsel %vm794, %v783, %v784
      %v801 = vsel %vm794, %v781, %v782
      %v802 = vsel %vm794, %v780, %v781
      %v803 = vsel %vm794, %v778, %v779
      %v804 = vsel %vm794, %v777, %v778
      %v805 = vsel %vm794, %v775, %v776
      %v806 = vsel %vm794, %v774, %v775
      %v807 = vsel %vm794, %v772, %v773
      %v808 = vsel %vm794, %v771, %v772
      %v809 = vsel %vm794, %v769, %v770
      %v810 = vsel %vm794, %v768, %v769
      %v811 = vsel %vm794, %v766, %v767
      %v812 = vsel %vm794, %v765, %v766
      %v813 = vsel %vm794, %v763, %v764
      %v814 = vsel %vm794, %v762, %v763
      %v815 = vsel %vm794, %v760, %v761
      %v816 = vsel %vm794, %v759, %v760
      %v817 = vsel %vm794, %v757, %v758
      %v818 = vsel %vm794, %v756, %v757
      %v819 = vsel %vm794, %v754, %v755
      %v820 = vsel %vm794, %v753, %v754
      %v821 = vsel %vm794, %v751, %v752
      %v822 = vsel %vm794, %v750, %v751
      %v823 = vsel %vm794, %v748, %v749
      %v824 = vsel %vm794, %v747, %v748
      %v825 = vsel %vm794, %v745, %v746
      %v826 = vsel %vm794, %v744, %v745
      %v827 = vsel %vm794, %v742, %v743
      %v828 = vsel %vm794, %v741, %v742
      %v829 = vsel %vm794, %v739, %v740
      %v830 = vsel %vm794, %v738, %v739
      %v831 = vrot.slane %v667, 1
      %v832 = vrot.slane %v668, 1
      %v833 = vrot.slane %v669, 1
      %v834 = vrot.slane %v671, 1
      %v835 = vrot.slane %v672, 1
      %v836 = vrot.slane %v673, 1
      %v837 = vrot.slane %v675, 1
      %v838 = vrot.slane %v676, 1
      %v839 = vrot.slane %v677, 1
      %v840 = vrot.slane %v679, 1
      %v841 = vrot.slane %v680, 1
      %v842 = vrot.slane %v681, 1
      %v843 = vrot.slane %v683, 1
      %v844 = vrot.slane %v684, 1
      %v845 = vrot.slane %v685, 1
      %v846 = vrot.slane %v687, 1
      %v847 = vrot.slane %v688, 1
      %v848 = vrot.slane %v689, 1
      %v849 = vrot.slane %v691, 1
      %v850 = vrot.slane %v692, 1
      %v851 = vrot.slane %v693, 1
      %v852 = vrot.slane %v695, 1
      %v853 = vrot.slane %v696, 1
      %v854 = vrot.slane %v697, 1
      %v855 = vrot.slane %v699, 1
      %v856 = vrot.slane %v700, 1
      %v857 = vrot.slane %v701, 1
      %v858 = vrot.slane %v703, 1
      %v859 = vrot.slane %v704, 1
      %v860 = vrot.slane %v705, 1
      %v861 = vrot.slane %v707, 1
      %v862 = vrot.slane %v708, 1
      %v863 = vrot.slane %v709, 1
      %v864 = vrot.slane %v711, 1
      %v865 = vrot.slane %v712, 1
      %v866 = vrot.slane %v713, 1
      %v867 = vrot.slane %v715, 1
      %v868 = vrot.slane %v716, 1
      %v869 = vrot.slane %v717, 1
      %v870 = vrot.slane %v719, 1
      %v871 = vrot.slane %v720, 1
      %v872 = vrot.slane %v721, 1
      %v873 = vrot.slane %v723, 1
      %v874 = vrot.slane %v724, 1
      %v875 = vrot.slane %v725, 1
      %v876 = vrot.slane %v727, 1
      %v877 = vrot.slane %v728, 1
      %v878 = vrot.slane %v729, 1
      %v879 = vrot.slane %v731, 1
      %v880 = vrot.slane %v732, 1
      %v881 = vrot.slane %v733, 1
      %v882 = vrot.slane %v735, 1
      %v883 = vrot.slane %v736, 1
      %v884 = vrot.slane %v737, 1
      %vm885 = vcmp.lt.s32.totalorder %v793, 7
      %v886 = vsel %vm885, %v883, %v884
      %v887 = vsel %vm885, %v882, %v883
      %v888 = vsel %vm885, %v880, %v881
      %v889 = vsel %vm885, %v879, %v880
      %v890 = vsel %vm885, %v877, %v878
      %v891 = vsel %vm885, %v876, %v877
      %v892 = vsel %vm885, %v874, %v875
      %v893 = vsel %vm885, %v873, %v874
      %v894 = vsel %vm885, %v871, %v872
      %v895 = vsel %vm885, %v870, %v871
      %v896 = vsel %vm885, %v868, %v869
      %v897 = vsel %vm885, %v867, %v868
      %v898 = vsel %vm885, %v865, %v866
      %v899 = vsel %vm885, %v864, %v865
      %v900 = vsel %vm885, %v862, %v863
      %v901 = vsel %vm885, %v861, %v862
      %v902 = vsel %vm885, %v859, %v860
      %v903 = vsel %vm885, %v858, %v859
      %v904 = vsel %vm885, %v856, %v857
      %v905 = vsel %vm885, %v855, %v856
      %v906 = vsel %vm885, %v853, %v854
      %v907 = vsel %vm885, %v852, %v853
      %v908 = vsel %vm885, %v850, %v851
      %v909 = vsel %vm885, %v849, %v850
      %v910 = vsel %vm885, %v847, %v848
      %v911 = vsel %vm885, %v846, %v847
      %v912 = vsel %vm885, %v844, %v845
      %v913 = vsel %vm885, %v843, %v844
      %v914 = vsel %vm885, %v841, %v842
      %v915 = vsel %vm885, %v840, %v841
      %v916 = vsel %vm885, %v838, %v839
      %v917 = vsel %vm885, %v837, %v838
      %v918 = vsel %vm885, %v835, %v836
      %v919 = vsel %vm885, %v834, %v835
      %v920 = vsel %vm885, %v832, %v833
      %v921 = vsel %vm885, %v831, %v832
      %v922 = vlaneseq
      %v923 = vshrl.u32 %v922, 7
      %v924 = vsub.s32 0, %v923
      %v925 = vrot.slane %v337, %v924
      %v926 = vmul.f32 %v925, %v830
      %v927 = vmul.f32 %v925, %v829
      %v928 = vmul.f32 %v925, %v828
      %v929 = vmul.f32 %v925, %v827
      %v930 = vmul.f32 %v925, %v826
      %v931 = vmul.f32 %v925, %v825
      %v932 = vmul.f32 %v925, %v824
      %v933 = vmul.f32 %v925, %v823
      %v934 = vmul.f32 %v925, %v822
      %v935 = vmul.f32 %v925, %v821
      %v936 = vmul.f32 %v925, %v820
      %v937 = vmul.f32 %v925, %v819
      %v938 = vmul.f32 %v925, %v818
      %v939 = vmul.f32 %v925, %v817
      %v940 = vmul.f32 %v925, %v816
      %v941 = vmul.f32 %v925, %v815
      %v942 = vmul.f32 %v925, %v814
      %v943 = vmul.f32 %v925, %v813
      %v944 = vmul.f32 %v925, %v812
      %v945 = vmul.f32 %v925, %v811
      %v946 = vmul.f32 %v925, %v810
      %v947 = vmul.f32 %v925, %v809
      %v948 = vmul.f32 %v925, %v808
      %v949 = vmul.f32 %v925, %v807
      %v950 = vmul.f32 %v925, %v806
      %v951 = vmul.f32 %v925, %v805
      %v952 = vmul.f32 %v925, %v804
      %v953 = vmul.f32 %v925, %v803
      %v954 = vmul.f32 %v925, %v802
      %v955 = vmul.f32 %v925, %v801
      %v956 = vmul.f32 %v925, %v800
      %v957 = vmul.f32 %v925, %v799
      %v958 = vlaneseq
      %v959 = vshrl.u32 %v958, 7
      %v960 = vsub.s32 1, %v959
      %v961 = vrot.slane %v337, %v960
      %v962 = vmul.f32 %v961, %v667
      %v963 = vmul.f32 %v961, %v668
      %v964 = vmul.f32 %v961, %v671
      %v965 = vmul.f32 %v961, %v672
      %v966 = vmul.f32 %v961, %v675
      %v967 = vmul.f32 %v961, %v676
      %v968 = vmul.f32 %v961, %v679
      %v969 = vmul.f32 %v961, %v680
      %v970 = vmul.f32 %v961, %v683
      %v971 = vmul.f32 %v961, %v684
      %v972 = vmul.f32 %v961, %v687
      %v973 = vmul.f32 %v961, %v688
      %v974 = vmul.f32 %v961, %v691
      %v975 = vmul.f32 %v961, %v692
      %v976 = vmul.f32 %v961, %v695
      %v977 = vmul.f32 %v961, %v696
      %v978 = vmul.f32 %v961, %v699
      %v979 = vmul.f32 %v961, %v700
      %v980 = vmul.f32 %v961, %v703
      %v981 = vmul.f32 %v961, %v704
      %v982 = vmul.f32 %v961, %v707
      %v983 = vmul.f32 %v961, %v708
      %v984 = vmul.f32 %v961, %v711
      %v985 = vmul.f32 %v961, %v712
      %v986 = vmul.f32 %v961, %v715
      %v987 = vmul.f32 %v961, %v716
      %v988 = vmul.f32 %v961, %v719
      %v989 = vmul.f32 %v961, %v720
      %v990 = vmul.f32 %v961, %v723
      %v991 = vmul.f32 %v961, %v724
      %v992 = vmul.f32 %v961, %v727
      %v993 = vmul.f32 %v961, %v728
      %v994 = vadd.f32 %v926, %v962
      %v995 = vadd.f32 %v927, %v963
      %v996 = vadd.f32 %v928, %v964
      %v997 = vadd.f32 %v929, %v965
      %v998 = vadd.f32 %v930, %v966
      %v999 = vadd.f32 %v931, %v967
      %v1000 = vadd.f32 %v932, %v968
      %v1001 = vadd.f32 %v933, %v969
      %v1002 = vadd.f32 %v934, %v970
      %v1003 = vadd.f32 %v935, %v971
      %v1004 = vadd.f32 %v936, %v972
      %v1005 = vadd.f32 %v937, %v973
      %v1006 = vadd.f32 %v938, %v974
      %v1007 = vadd.f32 %v939, %v975
      %v1008 = vadd.f32 %v940, %v976
      %v1009 = vadd.f32 %v941, %v977
      %v1010 = vadd.f32 %v942, %v978
      %v1011 = vadd.f32 %v943, %v979
      %v1012 = vadd.f32 %v944, %v980
      %v1013 = vadd.f32 %v945, %v981
      %v1014 = vadd.f32 %v946, %v982
      %v1015 = vadd.f32 %v947, %v983
      %v1016 = vadd.f32 %v948, %v984
      %v1017 = vadd.f32 %v949, %v985
      %v1018 = vadd.f32 %v950, %v986
      %v1019 = vadd.f32 %v951, %v987
      %v1020 = vadd.f32 %v952, %v988
      %v1021 = vadd.f32 %v953, %v989
      %v1022 = vadd.f32 %v954, %v990
      %v1023 = vadd.f32 %v955, %v991
      %v1024 = vadd.f32 %v956, %v992
      %v1025 = vadd.f32 %v957, %v993
      %v1026 = vlaneseq
      %v1027 = vshrl.u32 %v1026, 7
      %v1028 = vsub.s32 2, %v1027
      %v1029 = vrot.slane %v337, %v1028
      %v1030 = vmul.f32 %v1029, %v921
      %v1031 = vmul.f32 %v1029, %v920
      %v1032 = vmul.f32 %v1029, %v919
      %v1033 = vmul.f32 %v1029, %v918
      %v1034 = vmul.f32 %v1029, %v917
      %v1035 = vmul.f32 %v1029, %v916
      %v1036 = vmul.f32 %v1029, %v915
      %v1037 = vmul.f32 %v1029, %v914
      %v1038 = vmul.f32 %v1029, %v913
      %v1039 = vmul.f32 %v1029, %v912
      %v1040 = vmul.f32 %v1029, %v911
      %v1041 = vmul.f32 %v1029, %v910
      %v1042 = vmul.f32 %v1029, %v909
      %v1043 = vmul.f32 %v1029, %v908
      %v1044 = vmul.f32 %v1029, %v907
      %v1045 = vmul.f32 %v1029, %v906
      %v1046 = vmul.f32 %v1029, %v905
      %v1047 = vmul.f32 %v1029, %v904
      %v1048 = vmul.f32 %v1029, %v903
      %v1049 = vmul.f32 %v1029, %v902
      %v1050 = vmul.f32 %v1029, %v901
      %v1051 = vmul.f32 %v1029, %v900
      %v1052 = vmul.f32 %v1029, %v899
      %v1053 = vmul.f32 %v1029, %v898
      %v1054 = vmul.f32 %v1029, %v897
      %v1055 = vmul.f32 %v1029, %v896
      %v1056 = vmul.f32 %v1029, %v895
      %v1057 = vmul.f32 %v1029, %v894
      %v1058 = vmul.f32 %v1029, %v893
      %v1059 = vmul.f32 %v1029, %v892
      %v1060 = vmul.f32 %v1029, %v891
      %v1061 = vmul.f32 %v1029, %v890
      %v1062 = vadd.f32 %v994, %v1030
      %v1063 = vadd.f32 %v995, %v1031
      %v1064 = vadd.f32 %v996, %v1032
      %v1065 = vadd.f32 %v997, %v1033
      %v1066 = vadd.f32 %v998, %v1034
      %v1067 = vadd.f32 %v999, %v1035
      %v1068 = vadd.f32 %v1000, %v1036
      %v1069 = vadd.f32 %v1001, %v1037
      %v1070 = vadd.f32 %v1002, %v1038
      %v1071 = vadd.f32 %v1003, %v1039
      %v1072 = vadd.f32 %v1004, %v1040
      %v1073 = vadd.f32 %v1005, %v1041
      %v1074 = vadd.f32 %v1006, %v1042
      %v1075 = vadd.f32 %v1007, %v1043
      %v1076 = vadd.f32 %v1008, %v1044
      %v1077 = vadd.f32 %v1009, %v1045
      %v1078 = vadd.f32 %v1010, %v1046
      %v1079 = vadd.f32 %v1011, %v1047
      %v1080 = vadd.f32 %v1012, %v1048
      %v1081 = vadd.f32 %v1013, %v1049
      %v1082 = vadd.f32 %v1014, %v1050
      %v1083 = vadd.f32 %v1015, %v1051
      %v1084 = vadd.f32 %v1016, %v1052
      %v1085 = vadd.f32 %v1017, %v1053
      %v1086 = vadd.f32 %v1018, %v1054
      %v1087 = vadd.f32 %v1019, %v1055
      %v1088 = vadd.f32 %v1020, %v1056
      %v1089 = vadd.f32 %v1021, %v1057
      %v1090 = vadd.f32 %v1022, %v1058
      %v1091 = vadd.f32 %v1023, %v1059
      %v1092 = vadd.f32 %v1024, %v1060
      %v1093 = vadd.f32 %v1025, %v1061
      %v1094 = vlaneseq
      %v1095 = vshrl.u32 %v1094, 7
      %v1096 = vsub.s32 3, %v1095
      %v1097 = vrot.slane %v337, %v1096
      %v1098 = vmul.f32 %v1097, %v828
      %v1099 = vmul.f32 %v1097, %v827
      %v1100 = vmul.f32 %v1097, %v826
      %v1101 = vmul.f32 %v1097, %v825
      %v1102 = vmul.f32 %v1097, %v824
      %v1103 = vmul.f32 %v1097, %v823
      %v1104 = vmul.f32 %v1097, %v822
      %v1105 = vmul.f32 %v1097, %v821
      %v1106 = vmul.f32 %v1097, %v820
      %v1107 = vmul.f32 %v1097, %v819
      %v1108 = vmul.f32 %v1097, %v818
      %v1109 = vmul.f32 %v1097, %v817
      %v1110 = vmul.f32 %v1097, %v816
      %v1111 = vmul.f32 %v1097, %v815
      %v1112 = vmul.f32 %v1097, %v814
      %v1113 = vmul.f32 %v1097, %v813
      %v1114 = vmul.f32 %v1097, %v812
      %v1115 = vmul.f32 %v1097, %v811
      %v1116 = vmul.f32 %v1097, %v810
      %v1117 = vmul.f32 %v1097, %v809
      %v1118 = vmul.f32 %v1097, %v808
      %v1119 = vmul.f32 %v1097, %v807
      %v1120 = vmul.f32 %v1097, %v806
      %v1121 = vmul.f32 %v1097, %v805
      %v1122 = vmul.f32 %v1097, %v804
      %v1123 = vmul.f32 %v1097, %v803
      %v1124 = vmul.f32 %v1097, %v802
      %v1125 = vmul.f32 %v1097, %v801
      %v1126 = vmul.f32 %v1097, %v800
      %v1127 = vmul.f32 %v1097, %v799
      %v1128 = vmul.f32 %v1097, %v798
      %v1129 = vmul.f32 %v1097, %v797
      %v1130 = vadd.f32 %v1062, %v1098
      %v1131 = vadd.f32 %v1063, %v1099
      %v1132 = vadd.f32 %v1064, %v1100
      %v1133 = vadd.f32 %v1065, %v1101
      %v1134 = vadd.f32 %v1066, %v1102
      %v1135 = vadd.f32 %v1067, %v1103
      %v1136 = vadd.f32 %v1068, %v1104
      %v1137 = vadd.f32 %v1069, %v1105
      %v1138 = vadd.f32 %v1070, %v1106
      %v1139 = vadd.f32 %v1071, %v1107
      %v1140 = vadd.f32 %v1072, %v1108
      %v1141 = vadd.f32 %v1073, %v1109
      %v1142 = vadd.f32 %v1074, %v1110
      %v1143 = vadd.f32 %v1075, %v1111
      %v1144 = vadd.f32 %v1076, %v1112
      %v1145 = vadd.f32 %v1077, %v1113
      %v1146 = vadd.f32 %v1078, %v1114
      %v1147 = vadd.f32 %v1079, %v1115
      %v1148 = vadd.f32 %v1080, %v1116
      %v1149 = vadd.f32 %v1081, %v1117
      %v1150 = vadd.f32 %v1082, %v1118
      %v1151 = vadd.f32 %v1083, %v1119
      %v1152 = vadd.f32 %v1084, %v1120
      %v1153 = vadd.f32 %v1085, %v1121
      %v1154 = vadd.f32 %v1086, %v1122
      %v1155 = vadd.f32 %v1087, %v1123
      %v1156 = vadd.f32 %v1088, %v1124
      %v1157 = vadd.f32 %v1089, %v1125
      %v1158 = vadd.f32 %v1090, %v1126
      %v1159 = vadd.f32 %v1091, %v1127
      %v1160 = vadd.f32 %v1092, %v1128
      %v1161 = vadd.f32 %v1093, %v1129
      %v1162 = vlaneseq
      %v1163 = vshrl.u32 %v1162, 7
      %v1164 = vsub.s32 4, %v1163
      %v1165 = vrot.slane %v337, %v1164
      %v1166 = vmul.f32 %v1165, %v671
      %v1167 = vmul.f32 %v1165, %v672
      %v1168 = vmul.f32 %v1165, %v675
      %v1169 = vmul.f32 %v1165, %v676
      %v1170 = vmul.f32 %v1165, %v679
      %v1171 = vmul.f32 %v1165, %v680
      %v1172 = vmul.f32 %v1165, %v683
      %v1173 = vmul.f32 %v1165, %v684
      %v1174 = vmul.f32 %v1165, %v687
      %v1175 = vmul.f32 %v1165, %v688
      %v1176 = vmul.f32 %v1165, %v691
      %v1177 = vmul.f32 %v1165, %v692
      %v1178 = vmul.f32 %v1165, %v695
      %v1179 = vmul.f32 %v1165, %v696
      %v1180 = vmul.f32 %v1165, %v699
      %v1181 = vmul.f32 %v1165, %v700
      %v1182 = vmul.f32 %v1165, %v703
      %v1183 = vmul.f32 %v1165, %v704
      %v1184 = vmul.f32 %v1165, %v707
      %v1185 = vmul.f32 %v1165, %v708
      %v1186 = vmul.f32 %v1165, %v711
      %v1187 = vmul.f32 %v1165, %v712
      %v1188 = vmul.f32 %v1165, %v715
      %v1189 = vmul.f32 %v1165, %v716
      %v1190 = vmul.f32 %v1165, %v719
      %v1191 = vmul.f32 %v1165, %v720
      %v1192 = vmul.f32 %v1165, %v723
      %v1193 = vmul.f32 %v1165, %v724
      %v1194 = vmul.f32 %v1165, %v727
      %v1195 = vmul.f32 %v1165, %v728
      %v1196 = vmul.f32 %v1165, %v731
      %v1197 = vmul.f32 %v1165, %v732
      %v1198 = vadd.f32 %v1130, %v1166
      %v1199 = vadd.f32 %v1131, %v1167
      %v1200 = vadd.f32 %v1132, %v1168
      %v1201 = vadd.f32 %v1133, %v1169
      %v1202 = vadd.f32 %v1134, %v1170
      %v1203 = vadd.f32 %v1135, %v1171
      %v1204 = vadd.f32 %v1136, %v1172
      %v1205 = vadd.f32 %v1137, %v1173
      %v1206 = vadd.f32 %v1138, %v1174
      %v1207 = vadd.f32 %v1139, %v1175
      %v1208 = vadd.f32 %v1140, %v1176
      %v1209 = vadd.f32 %v1141, %v1177
      %v1210 = vadd.f32 %v1142, %v1178
      %v1211 = vadd.f32 %v1143, %v1179
      %v1212 = vadd.f32 %v1144, %v1180
      %v1213 = vadd.f32 %v1145, %v1181
      %v1214 = vadd.f32 %v1146, %v1182
      %v1215 = vadd.f32 %v1147, %v1183
      %v1216 = vadd.f32 %v1148, %v1184
      %v1217 = vadd.f32 %v1149, %v1185
      %v1218 = vadd.f32 %v1150, %v1186
      %v1219 = vadd.f32 %v1151, %v1187
      %v1220 = vadd.f32 %v1152, %v1188
      %v1221 = vadd.f32 %v1153, %v1189
      %v1222 = vadd.f32 %v1154, %v1190
      %v1223 = vadd.f32 %v1155, %v1191
      %v1224 = vadd.f32 %v1156, %v1192
      %v1225 = vadd.f32 %v1157, %v1193
      %v1226 = vadd.f32 %v1158, %v1194
      %v1227 = vadd.f32 %v1159, %v1195
      %v1228 = vadd.f32 %v1160, %v1196
      %v1229 = vadd.f32 %v1161, %v1197
      %v1230 = vlaneseq
      %v1231 = vshrl.u32 %v1230, 7
      %v1232 = vsub.s32 5, %v1231
      %v1233 = vrot.slane %v337, %v1232
      %v1234 = vmul.f32 %v1233, %v919
      %v1235 = vmul.f32 %v1233, %v918
      %v1236 = vmul.f32 %v1233, %v917
      %v1237 = vmul.f32 %v1233, %v916
      %v1238 = vmul.f32 %v1233, %v915
      %v1239 = vmul.f32 %v1233, %v914
      %v1240 = vmul.f32 %v1233, %v913
      %v1241 = vmul.f32 %v1233, %v912
      %v1242 = vmul.f32 %v1233, %v911
      %v1243 = vmul.f32 %v1233, %v910
      %v1244 = vmul.f32 %v1233, %v909
      %v1245 = vmul.f32 %v1233, %v908
      %v1246 = vmul.f32 %v1233, %v907
      %v1247 = vmul.f32 %v1233, %v906
      %v1248 = vmul.f32 %v1233, %v905
      %v1249 = vmul.f32 %v1233, %v904
      %v1250 = vmul.f32 %v1233, %v903
      %v1251 = vmul.f32 %v1233, %v902
      %v1252 = vmul.f32 %v1233, %v901
      %v1253 = vmul.f32 %v1233, %v900
      %v1254 = vmul.f32 %v1233, %v899
      %v1255 = vmul.f32 %v1233, %v898
      %v1256 = vmul.f32 %v1233, %v897
      %v1257 = vmul.f32 %v1233, %v896
      %v1258 = vmul.f32 %v1233, %v895
      %v1259 = vmul.f32 %v1233, %v894
      %v1260 = vmul.f32 %v1233, %v893
      %v1261 = vmul.f32 %v1233, %v892
      %v1262 = vmul.f32 %v1233, %v891
      %v1263 = vmul.f32 %v1233, %v890
      %v1264 = vmul.f32 %v1233, %v889
      %v1265 = vmul.f32 %v1233, %v888
      %v1266 = vadd.f32 %v1198, %v1234
      %v1267 = vadd.f32 %v1199, %v1235
      %v1268 = vadd.f32 %v1200, %v1236
      %v1269 = vadd.f32 %v1201, %v1237
      %v1270 = vadd.f32 %v1202, %v1238
      %v1271 = vadd.f32 %v1203, %v1239
      %v1272 = vadd.f32 %v1204, %v1240
      %v1273 = vadd.f32 %v1205, %v1241
      %v1274 = vadd.f32 %v1206, %v1242
      %v1275 = vadd.f32 %v1207, %v1243
      %v1276 = vadd.f32 %v1208, %v1244
      %v1277 = vadd.f32 %v1209, %v1245
      %v1278 = vadd.f32 %v1210, %v1246
      %v1279 = vadd.f32 %v1211, %v1247
      %v1280 = vadd.f32 %v1212, %v1248
      %v1281 = vadd.f32 %v1213, %v1249
      %v1282 = vadd.f32 %v1214, %v1250
      %v1283 = vadd.f32 %v1215, %v1251
      %v1284 = vadd.f32 %v1216, %v1252
      %v1285 = vadd.f32 %v1217, %v1253
      %v1286 = vadd.f32 %v1218, %v1254
      %v1287 = vadd.f32 %v1219, %v1255
      %v1288 = vadd.f32 %v1220, %v1256
      %v1289 = vadd.f32 %v1221, %v1257
      %v1290 = vadd.f32 %v1222, %v1258
      %v1291 = vadd.f32 %v1223, %v1259
      %v1292 = vadd.f32 %v1224, %v1260
      %v1293 = vadd.f32 %v1225, %v1261
      %v1294 = vadd.f32 %v1226, %v1262
      %v1295 = vadd.f32 %v1227, %v1263
      %v1296 = vadd.f32 %v1228, %v1264
      %v1297 = vadd.f32 %v1229, %v1265
      %v1298 = vlaneseq
      %v1299 = vshrl.u32 %v1298, 7
      %v1300 = vsub.s32 6, %v1299
      %v1301 = vrot.slane %v337, %v1300
      %v1302 = vmul.f32 %v1301, %v826
      %v1303 = vmul.f32 %v1301, %v825
      %v1304 = vmul.f32 %v1301, %v824
      %v1305 = vmul.f32 %v1301, %v823
      %v1306 = vmul.f32 %v1301, %v822
      %v1307 = vmul.f32 %v1301, %v821
      %v1308 = vmul.f32 %v1301, %v820
      %v1309 = vmul.f32 %v1301, %v819
      %v1310 = vmul.f32 %v1301, %v818
      %v1311 = vmul.f32 %v1301, %v817
      %v1312 = vmul.f32 %v1301, %v816
      %v1313 = vmul.f32 %v1301, %v815
      %v1314 = vmul.f32 %v1301, %v814
      %v1315 = vmul.f32 %v1301, %v813
      %v1316 = vmul.f32 %v1301, %v812
      %v1317 = vmul.f32 %v1301, %v811
      %v1318 = vmul.f32 %v1301, %v810
      %v1319 = vmul.f32 %v1301, %v809
      %v1320 = vmul.f32 %v1301, %v808
      %v1321 = vmul.f32 %v1301, %v807
      %v1322 = vmul.f32 %v1301, %v806
      %v1323 = vmul.f32 %v1301, %v805
      %v1324 = vmul.f32 %v1301, %v804
      %v1325 = vmul.f32 %v1301, %v803
      %v1326 = vmul.f32 %v1301, %v802
      %v1327 = vmul.f32 %v1301, %v801
      %v1328 = vmul.f32 %v1301, %v800
      %v1329 = vmul.f32 %v1301, %v799
      %v1330 = vmul.f32 %v1301, %v798
      %v1331 = vmul.f32 %v1301, %v797
      %v1332 = vmul.f32 %v1301, %v796
      %v1333 = vmul.f32 %v1301, %v795
      %v1334 = vadd.f32 %v1266, %v1302
      %v1335 = vadd.f32 %v1267, %v1303
      %v1336 = vadd.f32 %v1268, %v1304
      %v1337 = vadd.f32 %v1269, %v1305
      %v1338 = vadd.f32 %v1270, %v1306
      %v1339 = vadd.f32 %v1271, %v1307
      %v1340 = vadd.f32 %v1272, %v1308
      %v1341 = vadd.f32 %v1273, %v1309
      %v1342 = vadd.f32 %v1274, %v1310
      %v1343 = vadd.f32 %v1275, %v1311
      %v1344 = vadd.f32 %v1276, %v1312
      %v1345 = vadd.f32 %v1277, %v1313
      %v1346 = vadd.f32 %v1278, %v1314
      %v1347 = vadd.f32 %v1279, %v1315
      %v1348 = vadd.f32 %v1280, %v1316
      %v1349 = vadd.f32 %v1281, %v1317
      %v1350 = vadd.f32 %v1282, %v1318
      %v1351 = vadd.f32 %v1283, %v1319
      %v1352 = vadd.f32 %v1284, %v1320
      %v1353 = vadd.f32 %v1285, %v1321
      %v1354 = vadd.f32 %v1286, %v1322
      %v1355 = vadd.f32 %v1287, %v1323
      %v1356 = vadd.f32 %v1288, %v1324
      %v1357 = vadd.f32 %v1289, %v1325
      %v1358 = vadd.f32 %v1290, %v1326
      %v1359 = vadd.f32 %v1291, %v1327
      %v1360 = vadd.f32 %v1292, %v1328
      %v1361 = vadd.f32 %v1293, %v1329
      %v1362 = vadd.f32 %v1294, %v1330
      %v1363 = vadd.f32 %v1295, %v1331
      %v1364 = vadd.f32 %v1296, %v1332
      %v1365 = vadd.f32 %v1297, %v1333
      %v1366 = vlaneseq
      %v1367 = vshrl.u32 %v1366, 7
      %v1368 = vsub.s32 7, %v1367
      %v1369 = vrot.slane %v337, %v1368
      %v1370 = vmul.f32 %v1369, %v675
      %v1371 = vmul.f32 %v1369, %v676
      %v1372 = vmul.f32 %v1369, %v679
      %v1373 = vmul.f32 %v1369, %v680
      %v1374 = vmul.f32 %v1369, %v683
      %v1375 = vmul.f32 %v1369, %v684
      %v1376 = vmul.f32 %v1369, %v687
      %v1377 = vmul.f32 %v1369, %v688
      %v1378 = vmul.f32 %v1369, %v691
      %v1379 = vmul.f32 %v1369, %v692
      %v1380 = vmul.f32 %v1369, %v695
      %v1381 = vmul.f32 %v1369, %v696
      %v1382 = vmul.f32 %v1369, %v699
      %v1383 = vmul.f32 %v1369, %v700
      %v1384 = vmul.f32 %v1369, %v703
      %v1385 = vmul.f32 %v1369, %v704
      %v1386 = vmul.f32 %v1369, %v707
      %v1387 = vmul.f32 %v1369, %v708
      %v1388 = vmul.f32 %v1369, %v711
      %v1389 = vmul.f32 %v1369, %v712
      %v1390 = vmul.f32 %v1369, %v715
      %v1391 = vmul.f32 %v1369, %v716
      %v1392 = vmul.f32 %v1369, %v719
      %v1393 = vmul.f32 %v1369, %v720
      %v1394 = vmul.f32 %v1369, %v723
      %v1395 = vmul.f32 %v1369, %v724
      %v1396 = vmul.f32 %v1369, %v727
      %v1397 = vmul.f32 %v1369, %v728
      %v1398 = vmul.f32 %v1369, %v731
      %v1399 = vmul.f32 %v1369, %v732
      %v1400 = vmul.f32 %v1369, %v735
      %v1401 = vmul.f32 %v1369, %v736
      %v1402 = vadd.f32 %v1334, %v1370
      %v1403 = vadd.f32 %v1335, %v1371
      %v1404 = vadd.f32 %v1336, %v1372
      %v1405 = vadd.f32 %v1337, %v1373
      %v1406 = vadd.f32 %v1338, %v1374
      %v1407 = vadd.f32 %v1339, %v1375
      %v1408 = vadd.f32 %v1340, %v1376
      %v1409 = vadd.f32 %v1341, %v1377
      %v1410 = vadd.f32 %v1342, %v1378
      %v1411 = vadd.f32 %v1343, %v1379
      %v1412 = vadd.f32 %v1344, %v1380
      %v1413 = vadd.f32 %v1345, %v1381
      %v1414 = vadd.f32 %v1346, %v1382
      %v1415 = vadd.f32 %v1347, %v1383
      %v1416 = vadd.f32 %v1348, %v1384
      %v1417 = vadd.f32 %v1349, %v1385
      %v1418 = vadd.f32 %v1350, %v1386
      %v1419 = vadd.f32 %v1351, %v1387
      %v1420 = vadd.f32 %v1352, %v1388
      %v1421 = vadd.f32 %v1353, %v1389
      %v1422 = vadd.f32 %v1354, %v1390
      %v1423 = vadd.f32 %v1355, %v1391
      %v1424 = vadd.f32 %v1356, %v1392
      %v1425 = vadd.f32 %v1357, %v1393
      %v1426 = vadd.f32 %v1358, %v1394
      %v1427 = vadd.f32 %v1359, %v1395
      %v1428 = vadd.f32 %v1360, %v1396
      %v1429 = vadd.f32 %v1361, %v1397
      %v1430 = vadd.f32 %v1362, %v1398
      %v1431 = vadd.f32 %v1363, %v1399
      %v1432 = vadd.f32 %v1364, %v1400
      %v1433 = vadd.f32 %v1365, %v1401
      %v1434 = vlaneseq
      %v1435 = vshrl.u32 %v1434, 7
      %v1436 = vsub.s32 0, %v1435
      %v1437 = vrot.slane %v338, %v1436
      %v1438 = vmul.f32 %v1437, %v917
      %v1439 = vmul.f32 %v1437, %v916
      %v1440 = vmul.f32 %v1437, %v915
      %v1441 = vmul.f32 %v1437, %v914
      %v1442 = vmul.f32 %v1437, %v913
      %v1443 = vmul.f32 %v1437, %v912
      %v1444 = vmul.f32 %v1437, %v911
      %v1445 = vmul.f32 %v1437, %v910
      %v1446 = vmul.f32 %v1437, %v909
      %v1447 = vmul.f32 %v1437, %v908
      %v1448 = vmul.f32 %v1437, %v907
      %v1449 = vmul.f32 %v1437, %v906
      %v1450 = vmul.f32 %v1437, %v905
      %v1451 = vmul.f32 %v1437, %v904
      %v1452 = vmul.f32 %v1437, %v903
      %v1453 = vmul.f32 %v1437, %v902
      %v1454 = vmul.f32 %v1437, %v901
      %v1455 = vmul.f32 %v1437, %v900
      %v1456 = vmul.f32 %v1437, %v899
      %v1457 = vmul.f32 %v1437, %v898
      %v1458 = vmul.f32 %v1437, %v897
      %v1459 = vmul.f32 %v1437, %v896
      %v1460 = vmul.f32 %v1437, %v895
      %v1461 = vmul.f32 %v1437, %v894
      %v1462 = vmul.f32 %v1437, %v893
      %v1463 = vmul.f32 %v1437, %v892
      %v1464 = vmul.f32 %v1437, %v891
      %v1465 = vmul.f32 %v1437, %v890
      %v1466 = vmul.f32 %v1437, %v889
      %v1467 = vmul.f32 %v1437, %v888
      %v1468 = vmul.f32 %v1437, %v887
      %v1469 = vmul.f32 %v1437, %v886
      %v1470 = vadd.f32 %v1402, %v1438
      %v1471 = vadd.f32 %v1403, %v1439
      %v1472 = vadd.f32 %v1404, %v1440
      %v1473 = vadd.f32 %v1405, %v1441
      %v1474 = vadd.f32 %v1406, %v1442
      %v1475 = vadd.f32 %v1407, %v1443
      %v1476 = vadd.f32 %v1408, %v1444
      %v1477 = vadd.f32 %v1409, %v1445
      %v1478 = vadd.f32 %v1410, %v1446
      %v1479 = vadd.f32 %v1411, %v1447
      %v1480 = vadd.f32 %v1412, %v1448
      %v1481 = vadd.f32 %v1413, %v1449
      %v1482 = vadd.f32 %v1414, %v1450
      %v1483 = vadd.f32 %v1415, %v1451
      %v1484 = vadd.f32 %v1416, %v1452
      %v1485 = vadd.f32 %v1417, %v1453
      %v1486 = vadd.f32 %v1418, %v1454
      %v1487 = vadd.f32 %v1419, %v1455
      %v1488 = vadd.f32 %v1420, %v1456
      %v1489 = vadd.f32 %v1421, %v1457
      %v1490 = vadd.f32 %v1422, %v1458
      %v1491 = vadd.f32 %v1423, %v1459
      %v1492 = vadd.f32 %v1424, %v1460
      %v1493 = vadd.f32 %v1425, %v1461
      %v1494 = vadd.f32 %v1426, %v1462
      %v1495 = vadd.f32 %v1427, %v1463
      %v1496 = vadd.f32 %v1428, %v1464
      %v1497 = vadd.f32 %v1429, %v1465
      %v1498 = vadd.f32 %v1430, %v1466
      %v1499 = vadd.f32 %v1431, %v1467
      %v1500 = vadd.f32 %v1432, %v1468
      %v1501 = vadd.f32 %v1433, %v1469
      %v1502 = vmul.f32 %v1470, 0.5
      %v1503 = vmul.f32 %v1471, 0.5
      %v1504 = vmul.f32 %v1472, 0.5
      %v1505 = vmul.f32 %v1473, 0.5
      %v1506 = vmul.f32 %v1474, 0.5
      %v1507 = vmul.f32 %v1475, 0.5
      %v1508 = vmul.f32 %v1476, 0.5
      %v1509 = vmul.f32 %v1477, 0.5
      %v1510 = vmul.f32 %v1478, 0.5
      %v1511 = vmul.f32 %v1479, 0.5
      %v1512 = vmul.f32 %v1480, 0.5
      %v1513 = vmul.f32 %v1481, 0.5
      %v1514 = vmul.f32 %v1482, 0.5
      %v1515 = vmul.f32 %v1483, 0.5
      %v1516 = vmul.f32 %v1484, 0.5
      %v1517 = vmul.f32 %v1485, 0.5
      %v1518 = vmul.f32 %v1486, 0.5
      %v1519 = vmul.f32 %v1487, 0.5
      %v1520 = vmul.f32 %v1488, 0.5
      %v1521 = vmul.f32 %v1489, 0.5
      %v1522 = vmul.f32 %v1490, 0.5
      %v1523 = vmul.f32 %v1491, 0.5
      %v1524 = vmul.f32 %v1492, 0.5
      %v1525 = vmul.f32 %v1493, 0.5
      %v1526 = vmul.f32 %v1494, 0.5
      %v1527 = vmul.f32 %v1495, 0.5
      %v1528 = vmul.f32 %v1496, 0.5
      %v1529 = vmul.f32 %v1497, 0.5
      %v1530 = vmul.f32 %v1498, 0.5
      %v1531 = vmul.f32 %v1499, 0.5
      %v1532 = vmul.f32 %v1500, 0.5
      %v1533 = vmul.f32 %v1501, 0.5
      %v1534 = vmul.f32 %v1470, 0.7978846
      %v1535 = vmul.f32 %v1471, 0.7978846
      %v1536 = vmul.f32 %v1472, 0.7978846
      %v1537 = vmul.f32 %v1473, 0.7978846
      %v1538 = vmul.f32 %v1474, 0.7978846
      %v1539 = vmul.f32 %v1475, 0.7978846
      %v1540 = vmul.f32 %v1476, 0.7978846
      %v1541 = vmul.f32 %v1477, 0.7978846
      %v1542 = vmul.f32 %v1478, 0.7978846
      %v1543 = vmul.f32 %v1479, 0.7978846
      %v1544 = vmul.f32 %v1480, 0.7978846
      %v1545 = vmul.f32 %v1481, 0.7978846
      %v1546 = vmul.f32 %v1482, 0.7978846
      %v1547 = vmul.f32 %v1483, 0.7978846
      %v1548 = vmul.f32 %v1484, 0.7978846
      %v1549 = vmul.f32 %v1485, 0.7978846
      %v1550 = vmul.f32 %v1486, 0.7978846
      %v1551 = vmul.f32 %v1487, 0.7978846
      %v1552 = vmul.f32 %v1488, 0.7978846
      %v1553 = vmul.f32 %v1489, 0.7978846
      %v1554 = vmul.f32 %v1490, 0.7978846
      %v1555 = vmul.f32 %v1491, 0.7978846
      %v1556 = vmul.f32 %v1492, 0.7978846
      %v1557 = vmul.f32 %v1493, 0.7978846
      %v1558 = vmul.f32 %v1494, 0.7978846
      %v1559 = vmul.f32 %v1495, 0.7978846
      %v1560 = vmul.f32 %v1496, 0.7978846
      %v1561 = vmul.f32 %v1497, 0.7978846
      %v1562 = vmul.f32 %v1498, 0.7978846
      %v1563 = vmul.f32 %v1499, 0.7978846
      %v1564 = vmul.f32 %v1500, 0.7978846
      %v1565 = vmul.f32 %v1501, 0.7978846
      %v1566 = vmul.f32 %v1470, 0.044715
      %v1567 = vmul.f32 %v1471, 0.044715
      %v1568 = vmul.f32 %v1472, 0.044715
      %v1569 = vmul.f32 %v1473, 0.044715
      %v1570 = vmul.f32 %v1474, 0.044715
      %v1571 = vmul.f32 %v1475, 0.044715
      %v1572 = vmul.f32 %v1476, 0.044715
      %v1573 = vmul.f32 %v1477, 0.044715
      %v1574 = vmul.f32 %v1478, 0.044715
      %v1575 = vmul.f32 %v1479, 0.044715
      %v1576 = vmul.f32 %v1480, 0.044715
      %v1577 = vmul.f32 %v1481, 0.044715
      %v1578 = vmul.f32 %v1482, 0.044715
      %v1579 = vmul.f32 %v1483, 0.044715
      %v1580 = vmul.f32 %v1484, 0.044715
      %v1581 = vmul.f32 %v1485, 0.044715
      %v1582 = vmul.f32 %v1486, 0.044715
      %v1583 = vmul.f32 %v1487, 0.044715
      %v1584 = vmul.f32 %v1488, 0.044715
      %v1585 = vmul.f32 %v1489, 0.044715
      %v1586 = vmul.f32 %v1490, 0.044715
      %v1587 = vmul.f32 %v1491, 0.044715
      %v1588 = vmul.f32 %v1492, 0.044715
      %v1589 = vmul.f32 %v1493, 0.044715
      %v1590 = vmul.f32 %v1494, 0.044715
      %v1591 = vmul.f32 %v1495, 0.044715
      %v1592 = vmul.f32 %v1496, 0.044715
      %v1593 = vmul.f32 %v1497, 0.044715
      %v1594 = vmul.f32 %v1498, 0.044715
      %v1595 = vmul.f32 %v1499, 0.044715
      %v1596 = vmul.f32 %v1500, 0.044715
      %v1597 = vmul.f32 %v1501, 0.044715
      %v1598 = vmul.f32 %v1566, %v1470
      %v1599 = vmul.f32 %v1567, %v1471
      %v1600 = vmul.f32 %v1568, %v1472
      %v1601 = vmul.f32 %v1569, %v1473
      %v1602 = vmul.f32 %v1570, %v1474
      %v1603 = vmul.f32 %v1571, %v1475
      %v1604 = vmul.f32 %v1572, %v1476
      %v1605 = vmul.f32 %v1573, %v1477
      %v1606 = vmul.f32 %v1574, %v1478
      %v1607 = vmul.f32 %v1575, %v1479
      %v1608 = vmul.f32 %v1576, %v1480
      %v1609 = vmul.f32 %v1577, %v1481
      %v1610 = vmul.f32 %v1578, %v1482
      %v1611 = vmul.f32 %v1579, %v1483
      %v1612 = vmul.f32 %v1580, %v1484
      %v1613 = vmul.f32 %v1581, %v1485
      %v1614 = vmul.f32 %v1582, %v1486
      %v1615 = vmul.f32 %v1583, %v1487
      %v1616 = vmul.f32 %v1584, %v1488
      %v1617 = vmul.f32 %v1585, %v1489
      %v1618 = vmul.f32 %v1586, %v1490
      %v1619 = vmul.f32 %v1587, %v1491
      %v1620 = vmul.f32 %v1588, %v1492
      %v1621 = vmul.f32 %v1589, %v1493
      %v1622 = vmul.f32 %v1590, %v1494
      %v1623 = vmul.f32 %v1591, %v1495
      %v1624 = vmul.f32 %v1592, %v1496
      %v1625 = vmul.f32 %v1593, %v1497
      %v1626 = vmul.f32 %v1594, %v1498
      %v1627 = vmul.f32 %v1595, %v1499
      %v1628 = vmul.f32 %v1596, %v1500
      %v1629 = vmul.f32 %v1597, %v1501
      %v1630 = vadd.f32 %v1598, 1.0
      %v1631 = vadd.f32 %v1599, 1.0
      %v1632 = vadd.f32 %v1600, 1.0
      %v1633 = vadd.f32 %v1601, 1.0
      %v1634 = vadd.f32 %v1602, 1.0
      %v1635 = vadd.f32 %v1603, 1.0
      %v1636 = vadd.f32 %v1604, 1.0
      %v1637 = vadd.f32 %v1605, 1.0
      %v1638 = vadd.f32 %v1606, 1.0
      %v1639 = vadd.f32 %v1607, 1.0
      %v1640 = vadd.f32 %v1608, 1.0
      %v1641 = vadd.f32 %v1609, 1.0
      %v1642 = vadd.f32 %v1610, 1.0
      %v1643 = vadd.f32 %v1611, 1.0
      %v1644 = vadd.f32 %v1612, 1.0
      %v1645 = vadd.f32 %v1613, 1.0
      %v1646 = vadd.f32 %v1614, 1.0
      %v1647 = vadd.f32 %v1615, 1.0
      %v1648 = vadd.f32 %v1616, 1.0
      %v1649 = vadd.f32 %v1617, 1.0
      %v1650 = vadd.f32 %v1618, 1.0
      %v1651 = vadd.f32 %v1619, 1.0
      %v1652 = vadd.f32 %v1620, 1.0
      %v1653 = vadd.f32 %v1621, 1.0
      %v1654 = vadd.f32 %v1622, 1.0
      %v1655 = vadd.f32 %v1623, 1.0
      %v1656 = vadd.f32 %v1624, 1.0
      %v1657 = vadd.f32 %v1625, 1.0
      %v1658 = vadd.f32 %v1626, 1.0
      %v1659 = vadd.f32 %v1627, 1.0
      %v1660 = vadd.f32 %v1628, 1.0
      %v1661 = vadd.f32 %v1629, 1.0
      %v1662 = vmul.f32 %v1534, %v1630
      %v1663 = vmul.f32 %v1535, %v1631
      %v1664 = vmul.f32 %v1536, %v1632
      %v1665 = vmul.f32 %v1537, %v1633
      %v1666 = vmul.f32 %v1538, %v1634
      %v1667 = vmul.f32 %v1539, %v1635
      %v1668 = vmul.f32 %v1540, %v1636
      %v1669 = vmul.f32 %v1541, %v1637
      %v1670 = vmul.f32 %v1542, %v1638
      %v1671 = vmul.f32 %v1543, %v1639
      %v1672 = vmul.f32 %v1544, %v1640
      %v1673 = vmul.f32 %v1545, %v1641
      %v1674 = vmul.f32 %v1546, %v1642
      %v1675 = vmul.f32 %v1547, %v1643
      %v1676 = vmul.f32 %v1548, %v1644
      %v1677 = vmul.f32 %v1549, %v1645
      %v1678 = vmul.f32 %v1550, %v1646
      %v1679 = vmul.f32 %v1551, %v1647
      %v1680 = vmul.f32 %v1552, %v1648
      %v1681 = vmul.f32 %v1553, %v1649
      %v1682 = vmul.f32 %v1554, %v1650
      %v1683 = vmul.f32 %v1555, %v1651
      %v1684 = vmul.f32 %v1556, %v1652
      %v1685 = vmul.f32 %v1557, %v1653
      %v1686 = vmul.f32 %v1558, %v1654
      %v1687 = vmul.f32 %v1559, %v1655
      %v1688 = vmul.f32 %v1560, %v1656
      %v1689 = vmul.f32 %v1561, %v1657
      %v1690 = vmul.f32 %v1562, %v1658
      %v1691 = vmul.f32 %v1563, %v1659
      %v1692 = vmul.f32 %v1564, %v1660
      %v1693 = vmul.f32 %v1565, %v1661
      %v1694 = vtanh.pop %v1662
      %v1695 = vtanh.pop %v1663
      %v1696 = vtanh.pop %v1664
      %v1697 = vtanh.pop %v1665
      %v1698 = vtanh.pop %v1666
      %v1699 = vtanh.pop %v1667
      %v1700 = vtanh.pop %v1668
      %v1701 = vtanh.pop %v1669
      %v1702 = vtanh.pop %v1670
      %v1703 = vtanh.pop %v1671
      %v1704 = vtanh.pop %v1672
      %v1705 = vtanh.pop %v1673
      %v1706 = vtanh.pop %v1674
      %v1707 = vtanh.pop %v1675
      %v1708 = vtanh.pop %v1676
      %v1709 = vtanh.pop %v1677
      %v1710 = vtanh.pop %v1678
      %v1711 = vtanh.pop %v1679
      %v1712 = vtanh.pop %v1680
      %v1713 = vtanh.pop %v1681
      %v1714 = vtanh.pop %v1682
      %v1715 = vtanh.pop %v1683
      %v1716 = vtanh.pop %v1684
      %v1717 = vtanh.pop %v1685
      %v1718 = vtanh.pop %v1686
      %v1719 = vtanh.pop %v1687
      %v1720 = vtanh.pop %v1688
      %v1721 = vtanh.pop %v1689
      %v1722 = vtanh.pop %v1690
      %v1723 = vtanh.pop %v1691
      %v1724 = vtanh.pop %v1692
      %v1725 = vtanh.pop %v1693
      %v1726 = vadd.f32 %v1694, 1.0
      %v1727 = vadd.f32 %v1695, 1.0
      %v1728 = vadd.f32 %v1696, 1.0
      %v1729 = vadd.f32 %v1697, 1.0
      %v1730 = vadd.f32 %v1698, 1.0
      %v1731 = vadd.f32 %v1699, 1.0
      %v1732 = vadd.f32 %v1700, 1.0
      %v1733 = vadd.f32 %v1701, 1.0
      %v1734 = vadd.f32 %v1702, 1.0
      %v1735 = vadd.f32 %v1703, 1.0
      %v1736 = vadd.f32 %v1704, 1.0
      %v1737 = vadd.f32 %v1705, 1.0
      %v1738 = vadd.f32 %v1706, 1.0
      %v1739 = vadd.f32 %v1707, 1.0
      %v1740 = vadd.f32 %v1708, 1.0
      %v1741 = vadd.f32 %v1709, 1.0
      %v1742 = vadd.f32 %v1710, 1.0
      %v1743 = vadd.f32 %v1711, 1.0
      %v1744 = vadd.f32 %v1712, 1.0
      %v1745 = vadd.f32 %v1713, 1.0
      %v1746 = vadd.f32 %v1714, 1.0
      %v1747 = vadd.f32 %v1715, 1.0
      %v1748 = vadd.f32 %v1716, 1.0
      %v1749 = vadd.f32 %v1717, 1.0
      %v1750 = vadd.f32 %v1718, 1.0
      %v1751 = vadd.f32 %v1719, 1.0
      %v1752 = vadd.f32 %v1720, 1.0
      %v1753 = vadd.f32 %v1721, 1.0
      %v1754 = vadd.f32 %v1722, 1.0
      %v1755 = vadd.f32 %v1723, 1.0
      %v1756 = vadd.f32 %v1724, 1.0
      %v1757 = vadd.f32 %v1725, 1.0
      %v1758 = vmul.f32 %v1502, %v1726
      %v1759 = vmul.f32 %v1503, %v1727
      %v1760 = vmul.f32 %v1504, %v1728
      %v1761 = vmul.f32 %v1505, %v1729
      %v1762 = vmul.f32 %v1506, %v1730
      %v1763 = vmul.f32 %v1507, %v1731
      %v1764 = vmul.f32 %v1508, %v1732
      %v1765 = vmul.f32 %v1509, %v1733
      %v1766 = vmul.f32 %v1510, %v1734
      %v1767 = vmul.f32 %v1511, %v1735
      %v1768 = vmul.f32 %v1512, %v1736
      %v1769 = vmul.f32 %v1513, %v1737
      %v1770 = vmul.f32 %v1514, %v1738
      %v1771 = vmul.f32 %v1515, %v1739
      %v1772 = vmul.f32 %v1516, %v1740
      %v1773 = vmul.f32 %v1517, %v1741
      %v1774 = vmul.f32 %v1518, %v1742
      %v1775 = vmul.f32 %v1519, %v1743
      %v1776 = vmul.f32 %v1520, %v1744
      %v1777 = vmul.f32 %v1521, %v1745
      %v1778 = vmul.f32 %v1522, %v1746
      %v1779 = vmul.f32 %v1523, %v1747
      %v1780 = vmul.f32 %v1524, %v1748
      %v1781 = vmul.f32 %v1525, %v1749
      %v1782 = vmul.f32 %v1526, %v1750
      %v1783 = vmul.f32 %v1527, %v1751
      %v1784 = vmul.f32 %v1528, %v1752
      %v1785 = vmul.f32 %v1529, %v1753
      %v1786 = vmul.f32 %v1530, %v1754
      %v1787 = vmul.f32 %v1531, %v1755
      %v1788 = vmul.f32 %v1532, %v1756
      %v1789 = vmul.f32 %v1533, %v1757
      %s1790 = scalar_lea.vmem %s1, 2
      %v1791 = vld [vmem:[%s1790] sm:$0x3]
      %v1793 = vsel %vm409, %v1791, 0
      %1795 = vmatprep.subr.bf16.mxu0 0
      %1796 = vmatpush1.bf16.msra.mxu0 0
      %1797 = vmatprep.subr.bf16.mxu0 0
      %1798 = vmatpush1.bf16.msra.mxu0 0
      %1799 = vmatprep.subr.bf16.mxu0 0
      %1800 = vmatpush1.bf16.msra.mxu0 0
      %1801 = vmatprep.subr.bf16.mxu0 0
      %1802 = vmatpush1.bf16.msra.mxu0 0
      %1803 = vmatprep.subr.bf16.mxu0 0
      %1804 = vmatpush1.bf16.msra.mxu0 0
      %1805 = vmatprep.subr.bf16.mxu0 0
      %1806 = vmatpush1.bf16.msra.mxu0 0
      %1807 = vmatprep.subr.bf16.mxu0 0
      %1808 = vmatpush1.bf16.msra.mxu0 0
      %1809 = vmatprep.subr.bf16.mxu0 0
      %1810 = vmatpush1.bf16.msra.mxu0 %v1793
      %1811 = vmatprep.subr.bf16.mxu0 0
      %1812 = vmatpush2.bf16.msra.mxu0 0
      %1813 = vmatprep.subr.bf16.mxu0 0
      %1814 = vmatpush2.bf16.msra.mxu0 0
      %1815 = vmatprep.subr.bf16.mxu0 0
      %1816 = vmatpush2.bf16.msra.mxu0 0
      %1817 = vmatprep.subr.bf16.mxu0 0
      %1818 = vmatpush2.bf16.msra.mxu0 0
      %1819 = vmatprep.subr.bf16.mxu0 0
      %1820 = vmatpush2.bf16.msra.mxu0 0
      %1821 = vmatprep.subr.bf16.mxu0 0
      %1822 = vmatpush2.bf16.msra.mxu0 0
      %1823 = vmatprep.subr.bf16.mxu0 0
      %1824 = vmatpush2.bf16.msra.mxu0 0
      %1825 = vmatprep.subr.bf16.mxu0 0
      %1826 = vmatpush2.bf16.msra.mxu0 0
      %1827 = vmatprep.mubr.bf16.mxu0 0
      %1828 = vmatmul.mubr.bf16.gmra.mxu0 %v344
      %v1829 = vpop.f32.mrf.mxu0
      %v1830 = vadd.f32 0.0, %v1829
      %v1831 = vpop.f32.mrf.mxu0
      %v1832 = vpop.f32.mrf.mxu0
      %v1833 = vadd.f32 0.0, %v1832
      %v1834 = vpop.f32.mrf.mxu0
      %1835 = vmatprep.mubr.bf16.mxu0 0
      %1836 = vmatmul.mubr.bf16.gmra.mxu0 %v347
      %v1837 = vpop.f32.mrf.mxu0
      %v1838 = vadd.f32 0.0, %v1837
      %v1839 = vpop.f32.mrf.mxu0
      %v1840 = vpop.f32.mrf.mxu0
      %v1841 = vadd.f32 0.0, %v1840
      %v1842 = vpop.f32.mrf.mxu0
      %1843 = vmatprep.mubr.bf16.mxu0 0
      %1844 = vmatmul.mubr.bf16.gmra.mxu0 %v350
      %v1845 = vpop.f32.mrf.mxu0
      %v1846 = vadd.f32 0.0, %v1845
      %v1847 = vpop.f32.mrf.mxu0
      %v1848 = vpop.f32.mrf.mxu0
      %v1849 = vadd.f32 0.0, %v1848
      %v1850 = vpop.f32.mrf.mxu0
      %1851 = vmatprep.mubr.bf16.mxu0 0
      %1852 = vmatmul.mubr.bf16.gmra.mxu0 %v353
      %v1853 = vpop.f32.mrf.mxu0
      %v1854 = vadd.f32 0.0, %v1853
      %v1855 = vpop.f32.mrf.mxu0
      %v1856 = vpop.f32.mrf.mxu0
      %v1857 = vadd.f32 0.0, %v1856
      %v1858 = vpop.f32.mrf.mxu0
      %1859 = vmatprep.mubr.bf16.mxu0 0
      %1860 = vmatmul.mubr.bf16.gmra.mxu0 %v356
      %v1861 = vpop.f32.mrf.mxu0
      %v1862 = vadd.f32 0.0, %v1861
      %v1863 = vpop.f32.mrf.mxu0
      %v1864 = vpop.f32.mrf.mxu0
      %v1865 = vadd.f32 0.0, %v1864
      %v1866 = vpop.f32.mrf.mxu0
      %1867 = vmatprep.mubr.bf16.mxu0 0
      %1868 = vmatmul.mubr.bf16.gmra.mxu0 %v359
      %v1869 = vpop.f32.mrf.mxu0
      %v1870 = vadd.f32 0.0, %v1869
      %v1871 = vpop.f32.mrf.mxu0
      %v1872 = vpop.f32.mrf.mxu0
      %v1873 = vadd.f32 0.0, %v1872
      %v1874 = vpop.f32.mrf.mxu0
      %1875 = vmatprep.mubr.bf16.mxu0 0
      %1876 = vmatmul.mubr.bf16.gmra.mxu0 %v362
      %v1877 = vpop.f32.mrf.mxu0
      %v1878 = vadd.f32 0.0, %v1877
      %v1879 = vpop.f32.mrf.mxu0
      %v1880 = vpop.f32.mrf.mxu0
      %v1881 = vadd.f32 0.0, %v1880
      %v1882 = vpop.f32.mrf.mxu0
      %1883 = vmatprep.mubr.bf16.mxu0 0
      %1884 = vmatmul.mubr.bf16.gmra.mxu0 %v365
      %v1885 = vpop.f32.mrf.mxu0
      %v1886 = vadd.f32 0.0, %v1885
      %v1887 = vpop.f32.mrf.mxu0
      %v1888 = vpop.f32.mrf.mxu0
      %v1889 = vadd.f32 0.0, %v1888
      %v1890 = vpop.f32.mrf.mxu0
      %1891 = vmatprep.mubr.bf16.mxu0 0
      %1892 = vmatmul.mubr.bf16.gmra.mxu0 %v368
      %v1893 = vpop.f32.mrf.mxu0
      %v1894 = vadd.f32 0.0, %v1893
      %v1895 = vpop.f32.mrf.mxu0
      %v1896 = vpop.f32.mrf.mxu0
      %v1897 = vadd.f32 0.0, %v1896
      %v1898 = vpop.f32.mrf.mxu0
      %1899 = vmatprep.mubr.bf16.mxu0 0
      %1900 = vmatmul.mubr.bf16.gmra.mxu0 %v371
      %v1901 = vpop.f32.mrf.mxu0
      %v1902 = vadd.f32 0.0, %v1901
      %v1903 = vpop.f32.mrf.mxu0
      %v1904 = vpop.f32.mrf.mxu0
      %v1905 = vadd.f32 0.0, %v1904
      %v1906 = vpop.f32.mrf.mxu0
      %1907 = vmatprep.mubr.bf16.mxu0 0
      %1908 = vmatmul.mubr.bf16.gmra.mxu0 %v374
      %v1909 = vpop.f32.mrf.mxu0
      %v1910 = vadd.f32 0.0, %v1909
      %v1911 = vpop.f32.mrf.mxu0
      %v1912 = vpop.f32.mrf.mxu0
      %v1913 = vadd.f32 0.0, %v1912
      %v1914 = vpop.f32.mrf.mxu0
      %1915 = vmatprep.mubr.bf16.mxu0 0
      %1916 = vmatmul.mubr.bf16.gmra.mxu0 %v377
      %v1917 = vpop.f32.mrf.mxu0
      %v1918 = vadd.f32 0.0, %v1917
      %v1919 = vpop.f32.mrf.mxu0
      %v1920 = vpop.f32.mrf.mxu0
      %v1921 = vadd.f32 0.0, %v1920
      %v1922 = vpop.f32.mrf.mxu0
      %1923 = vmatprep.mubr.bf16.mxu0 0
      %1924 = vmatmul.mubr.bf16.gmra.mxu0 %v380
      %v1925 = vpop.f32.mrf.mxu0
      %v1926 = vadd.f32 0.0, %v1925
      %v1927 = vpop.f32.mrf.mxu0
      %v1928 = vpop.f32.mrf.mxu0
      %v1929 = vadd.f32 0.0, %v1928
      %v1930 = vpop.f32.mrf.mxu0
      %1931 = vmatprep.mubr.bf16.mxu0 0
      %1932 = vmatmul.mubr.bf16.gmra.mxu0 %v383
      %v1933 = vpop.f32.mrf.mxu0
      %v1934 = vadd.f32 0.0, %v1933
      %v1935 = vpop.f32.mrf.mxu0
      %v1936 = vpop.f32.mrf.mxu0
      %v1937 = vadd.f32 0.0, %v1936
      %v1938 = vpop.f32.mrf.mxu0
      %1939 = vmatprep.mubr.bf16.mxu0 0
      %1940 = vmatmul.mubr.bf16.gmra.mxu0 %v386
      %v1941 = vpop.f32.mrf.mxu0
      %v1942 = vadd.f32 0.0, %v1941
      %v1943 = vpop.f32.mrf.mxu0
      %v1944 = vpop.f32.mrf.mxu0
      %v1945 = vadd.f32 0.0, %v1944
      %v1946 = vpop.f32.mrf.mxu0
      %1947 = vmatprep.mubr.bf16.mxu0 0
      %1948 = vmatmul.mubr.bf16.gmra.mxu0 %v389
      %v1949 = vpop.f32.mrf.mxu0
      %v1950 = vadd.f32 0.0, %v1949
      %v1951 = vpop.f32.mrf.mxu0
      %v1952 = vpop.f32.mrf.mxu0
      %v1953 = vadd.f32 0.0, %v1952
      %v1954 = vpop.f32.mrf.mxu0
      %1955 = vmatprep.mubr.bf16.mxu0 0
      %1956 = vmatmul.mubr.bf16.gmra.mxu0 %v392
      %v1957 = vpop.f32.mrf.mxu0
      %v1958 = vadd.f32 0.0, %v1957
      %v1959 = vpop.f32.mrf.mxu0
      %v1960 = vpop.f32.mrf.mxu0
      %v1961 = vadd.f32 0.0, %v1960
      %v1962 = vpop.f32.mrf.mxu0
      %1963 = vmatprep.mubr.bf16.mxu0 0
      %1964 = vmatmul.mubr.bf16.gmra.mxu0 %v395
      %v1965 = vpop.f32.mrf.mxu0
      %v1966 = vadd.f32 0.0, %v1965
      %v1967 = vpop.f32.mrf.mxu0
      %v1968 = vpop.f32.mrf.mxu0
      %v1969 = vadd.f32 0.0, %v1968
      %v1970 = vpop.f32.mrf.mxu0
      %1971 = vmatprep.mubr.bf16.mxu0 0
      %1972 = vmatmul.mubr.bf16.gmra.mxu0 %v398
      %v1973 = vpop.f32.mrf.mxu0
      %v1974 = vadd.f32 0.0, %v1973
      %v1975 = vpop.f32.mrf.mxu0
      %v1976 = vpop.f32.mrf.mxu0
      %v1977 = vadd.f32 0.0, %v1976
      %v1978 = vpop.f32.mrf.mxu0
      %1979 = vmatprep.mubr.bf16.mxu0 0
      %1980 = vmatmul.mubr.bf16.gmra.mxu0 %v401
      %v1981 = vpop.f32.mrf.mxu0
      %v1982 = vadd.f32 0.0, %v1981
      %v1983 = vpop.f32.mrf.mxu0
      %v1984 = vpop.f32.mrf.mxu0
      %v1985 = vadd.f32 0.0, %v1984
      %v1986 = vpop.f32.mrf.mxu0
      %1987 = vmatprep.mubr.bf16.mxu0 0
      %1988 = vmatmul.mubr.bf16.gmra.mxu0 %v404
      %v1989 = vpop.f32.mrf.mxu0
      %v1990 = vadd.f32 0.0, %v1989
      %v1991 = vpop.f32.mrf.mxu0
      %v1992 = vpop.f32.mrf.mxu0
      %v1993 = vadd.f32 0.0, %v1992
      %v1994 = vpop.f32.mrf.mxu0
      %1995 = vmatprep.mubr.bf16.mxu0 0
      %1996 = vmatmul.mubr.bf16.gmra.mxu0 %v407
      %v1997 = vpop.f32.mrf.mxu0
      %v1998 = vadd.f32 0.0, %v1997
      %v1999 = vpop.f32.mrf.mxu0
      %v2000 = vpop.f32.mrf.mxu0
      %v2001 = vadd.f32 0.0, %v2000
      %v2002 = vpop.f32.mrf.mxu0
      %2003 = vdwg.mxu0
      %2004 = vst [vmem:[#allocation2 + $0x8] sm:$0xff] %v1830
      %2005 = vst [vmem:[#allocation2 + $0x10] sm:$0xff] %v1833
      %2006 = vst [vmem:[#allocation2 + $0x28] sm:$0xff] %v1838
      %2007 = vst [vmem:[#allocation2 + $0x30] sm:$0xff] %v1841
      %2008 = vst [vmem:[#allocation2 + $0x48] sm:$0xff] %v1846
      %2009 = vst [vmem:[#allocation2 + $0x50] sm:$0xff] %v1849
      %2010 = vst [vmem:[#allocation2 + $0x68] sm:$0xff] %v1854
      %2011 = vst [vmem:[#allocation2 + $0x70] sm:$0xff] %v1857
      %2012 = vst [vmem:[#allocation2 + $0x88] sm:$0xff] %v1862
      %2013 = vst [vmem:[#allocation2 + $0x90] sm:$0xff] %v1865
      %2014 = vst [vmem:[#allocation2 + $0xa8] sm:$0xff] %v1870
      %2015 = vst [vmem:[#allocation2 + $0xb0] sm:$0xff] %v1873
      %2016 = vst [vmem:[#allocation2 + $0xc8] sm:$0xff] %v1878
      %2017 = vst [vmem:[#allocation2 + $0xd0] sm:$0xff] %v1881
      %2018 = vst [vmem:[#allocation2 + $0xe8] sm:$0xff] %v1886
      %2019 = vst [vmem:[#allocation2 + $0xf0] sm:$0xff] %v1889
      %2020 = vst [vmem:[#allocation2 + $0x108] sm:$0xff] %v1894
      %2021 = vst [vmem:[#allocation2 + $0x110] sm:$0xff] %v1897
      %2022 = vst [vmem:[#allocation2 + $0x128] sm:$0xff] %v1902
      %2023 = vst [vmem:[#allocation2 + $0x130] sm:$0xff] %v1905
      %2024 = vst [vmem:[#allocation2 + $0x148] sm:$0xff] %v1910
      %2025 = vst [vmem:[#allocation2 + $0x150] sm:$0xff] %v1913
      %2026 = vst [vmem:[#allocation2 + $0x168] sm:$0xff] %v1918
      %2027 = vst [vmem:[#allocation2 + $0x170] sm:$0xff] %v1921
      %2028 = vst [vmem:[#allocation2 + $0x188] sm:$0xff] %v1926
      %2029 = vst [vmem:[#allocation2 + $0x190] sm:$0xff] %v1929
      %2030 = vst [vmem:[#allocation2 + $0x1a8] sm:$0xff] %v1934
      %2031 = vst [vmem:[#allocation2 + $0x1b0] sm:$0xff] %v1937
      %2032 = vst [vmem:[#allocation2 + $0x1c8] sm:$0xff] %v1942
      %2033 = vst [vmem:[#allocation2 + $0x1d0] sm:$0xff] %v1945
      %2034 = vst [vmem:[#allocation2 + $0x1e8] sm:$0xff] %v1950
      %2035 = vst [vmem:[#allocation2 + $0x1f0] sm:$0xff] %v1953
      %2036 = vst [vmem:[#allocation2 + $0x208] sm:$0xff] %v1958
      %2037 = vst [vmem:[#allocation2 + $0x210] sm:$0xff] %v1961
      %2038 = vst [vmem:[#allocation2 + $0x228] sm:$0xff] %v1966
      %2039 = vst [vmem:[#allocation2 + $0x230] sm:$0xff] %v1969
      %2040 = vst [vmem:[#allocation2 + $0x248] sm:$0xff] %v1974
      %2041 = vst [vmem:[#allocation2 + $0x250] sm:$0xff] %v1977
      %2042 = vst [vmem:[#allocation2 + $0x268] sm:$0xff] %v1982
      %2043 = vst [vmem:[#allocation2 + $0x270] sm:$0xff] %v1985
      %2044 = vst [vmem:[#allocation2 + $0x288] sm:$0xff] %v1990
      %2045 = vst [vmem:[#allocation2 + $0x290] sm:$0xff] %v1993
      %2046 = vst [vmem:[#allocation2 + $0x2a8] sm:$0xff] %v1998
      %2047 = vst [vmem:[#allocation2 + $0x2b0] sm:$0xff] %v2001
      %v2048 = vld [vmem:[#allocation2 + $0x20] sm:$0xff]
      %v2049 = vld [vmem:[#allocation2 + $0x28] sm:$0xff]
      %v2050 = vld [vmem:[#allocation2 + $0x30] sm:$0xff]
      %v2051 = vld [vmem:[#allocation2 + $0x38] sm:$0xff]
      %v2052 = vld [vmem:[#allocation2 + $0x40] sm:$0xff]
      %v2053 = vld [vmem:[#allocation2 + $0x48] sm:$0xff]
      %v2054 = vld [vmem:[#allocation2 + $0x50] sm:$0xff]
      %v2055 = vld [vmem:[#allocation2 + $0x58] sm:$0xff]
      %v2056 = vld [vmem:[#allocation2 + $0x60] sm:$0xff]
      %v2057 = vld [vmem:[#allocation2 + $0x68] sm:$0xff]
      %v2058 = vld [vmem:[#allocation2 + $0x70] sm:$0xff]
      %v2059 = vld [vmem:[#allocation2 + $0x78] sm:$0xff]
      %v2060 = vld [vmem:[#allocation2 + $0x80] sm:$0xff]
      %v2061 = vld [vmem:[#allocation2 + $0x88] sm:$0xff]
      %v2062 = vld [vmem:[#allocation2 + $0x90] sm:$0xff]
      %v2063 = vld [vmem:[#allocation2 + $0x98] sm:$0xff]
      %v2064 = vld [vmem:[#allocation2 + $0xa0] sm:$0xff]
      %v2065 = vld [vmem:[#allocation2 + $0xa8] sm:$0xff]
      %v2066 = vld [vmem:[#allocation2 + $0xb0] sm:$0xff]
      %v2067 = vld [vmem:[#allocation2 + $0xb8] sm:$0xff]
      %v2068 = vld [vmem:[#allocation2 + $0xc0] sm:$0xff]
      %v2069 = vld [vmem:[#allocation2 + $0xc8] sm:$0xff]
      %v2070 = vld [vmem:[#allocation2 + $0xd0] sm:$0xff]
      %v2071 = vld [vmem:[#allocation2 + $0xd8] sm:$0xff]
      %v2072 = vld [vmem:[#allocation2 + $0xe0] sm:$0xff]
      %v2073 = vld [vmem:[#allocation2 + $0xe8] sm:$0xff]
      %v2074 = vld [vmem:[#allocation2 + $0xf0] sm:$0xff]
      %v2075 = vld [vmem:[#allocation2 + $0xf8] sm:$0xff]
      %v2076 = vld [vmem:[#allocation2 + $0x100] sm:$0xff]
      %v2077 = vld [vmem:[#allocation2 + $0x108] sm:$0xff]
      %v2078 = vld [vmem:[#allocation2 + $0x110] sm:$0xff]
      %v2079 = vld [vmem:[#allocation2 + $0x118] sm:$0xff]
      %v2080 = vld [vmem:[#allocation2 + $0x120] sm:$0xff]
      %v2081 = vld [vmem:[#allocation2 + $0x128] sm:$0xff]
      %v2082 = vld [vmem:[#allocation2 + $0x130] sm:$0xff]
      %v2083 = vld [vmem:[#allocation2 + $0x138] sm:$0xff]
      %v2084 = vld [vmem:[#allocation2 + $0x140] sm:$0xff]
      %v2085 = vld [vmem:[#allocation2 + $0x148] sm:$0xff]
      %v2086 = vld [vmem:[#allocation2 + $0x150] sm:$0xff]
      %v2087 = vld [vmem:[#allocation2 + $0x158] sm:$0xff]
      %v2088 = vld [vmem:[#allocation2 + $0x160] sm:$0xff]
      %v2089 = vld [vmem:[#allocation2 + $0x168] sm:$0xff]
      %v2090 = vld [vmem:[#allocation2 + $0x170] sm:$0xff]
      %v2091 = vld [vmem:[#allocation2 + $0x178] sm:$0xff]
      %v2092 = vld [vmem:[#allocation2 + $0x180] sm:$0xff]
      %v2093 = vld [vmem:[#allocation2 + $0x188] sm:$0xff]
      %v2094 = vld [vmem:[#allocation2 + $0x190] sm:$0xff]
      %v2095 = vld [vmem:[#allocation2 + $0x198] sm:$0xff]
      %v2096 = vld [vmem:[#allocation2 + $0x1a0] sm:$0xff]
      %v2097 = vld [vmem:[#allocation2 + $0x1a8] sm:$0xff]
      %v2098 = vld [vmem:[#allocation2 + $0x1b0] sm:$0xff]
      %v2099 = vld [vmem:[#allocation2 + $0x1b8] sm:$0xff]
      %v2100 = vld [vmem:[#allocation2 + $0x1c0] sm:$0xff]
      %v2101 = vld [vmem:[#allocation2 + $0x1c8] sm:$0xff]
      %v2102 = vld [vmem:[#allocation2 + $0x1d0] sm:$0xff]
      %v2103 = vld [vmem:[#allocation2 + $0x1d8] sm:$0xff]
      %v2104 = vld [vmem:[#allocation2 + $0x1e0] sm:$0xff]
      %v2105 = vld [vmem:[#allocation2 + $0x1e8] sm:$0xff]
      %v2106 = vld [vmem:[#allocation2 + $0x1f0] sm:$0xff]
      %v2107 = vld [vmem:[#allocation2 + $0x1f8] sm:$0xff]
      %v2108 = vld [vmem:[#allocation2 + $0x200] sm:$0xff]
      %v2109 = vld [vmem:[#allocation2 + $0x208] sm:$0xff]
      %v2110 = vld [vmem:[#allocation2 + $0x210] sm:$0xff]
      %v2111 = vld [vmem:[#allocation2 + $0x218] sm:$0xff]
      %v2112 = vld [vmem:[#allocation2 + $0x220] sm:$0xff]
      %v2113 = vld [vmem:[#allocation2 + $0x228] sm:$0xff]
      %v2114 = vld [vmem:[#allocation2 + $0x230] sm:$0xff]
      %v2115 = vld [vmem:[#allocation2 + $0x238] sm:$0xff]
      %v2116 = vld [vmem:[#allocation2 + $0x240] sm:$0xff]
      %v2117 = vld [vmem:[#allocation2 + $0x248] sm:$0xff]
      %v2118 = vld [vmem:[#allocation2 + $0x250] sm:$0xff]
      %v2119 = vld [vmem:[#allocation2 + $0x258] sm:$0xff]
      %v2120 = vld [vmem:[#allocation2 + $0x260] sm:$0xff]
      %v2121 = vld [vmem:[#allocation2 + $0x268] sm:$0xff]
      %v2122 = vld [vmem:[#allocation2 + $0x270] sm:$0xff]
      %v2123 = vld [vmem:[#allocation2 + $0x278] sm:$0xff]
      %v2124 = vld [vmem:[#allocation2 + $0x280] sm:$0xff]
      %v2125 = vld [vmem:[#allocation2 + $0x288] sm:$0xff]
      %v2126 = vld [vmem:[#allocation2 + $0x290] sm:$0xff]
      %v2127 = vld [vmem:[#allocation2 + $0x298] sm:$0xff]
      %v2128 = vrot.slane %v2048, 6
      %v2129 = vrot.slane %v2049, 6
      %v2130 = vrot.slane %v2050, 6
      %v2131 = vrot.slane %v2052, 6
      %v2132 = vrot.slane %v2053, 6
      %v2133 = vrot.slane %v2054, 6
      %v2134 = vrot.slane %v2056, 6
      %v2135 = vrot.slane %v2057, 6
      %v2136 = vrot.slane %v2058, 6
      %v2137 = vrot.slane %v2060, 6
      %v2138 = vrot.slane %v2061, 6
      %v2139 = vrot.slane %v2062, 6
      %v2140 = vrot.slane %v2064, 6
      %v2141 = vrot.slane %v2065, 6
      %v2142 = vrot.slane %v2066, 6
      %v2143 = vrot.slane %v2068, 6
      %v2144 = vrot.slane %v2069, 6
      %v2145 = vrot.slane %v2070, 6
      %v2146 = vrot.slane %v2072, 6
      %v2147 = vrot.slane %v2073, 6
      %v2148 = vrot.slane %v2074, 6
      %v2149 = vrot.slane %v2076, 6
      %v2150 = vrot.slane %v2077, 6
      %v2151 = vrot.slane %v2078, 6
      %v2152 = vrot.slane %v2080, 6
      %v2153 = vrot.slane %v2081, 6
      %v2154 = vrot.slane %v2082, 6
      %v2155 = vrot.slane %v2084, 6
      %v2156 = vrot.slane %v2085, 6
      %v2157 = vrot.slane %v2086, 6
      %v2158 = vrot.slane %v2088, 6
      %v2159 = vrot.slane %v2089, 6
      %v2160 = vrot.slane %v2090, 6
      %v2161 = vrot.slane %v2092, 6
      %v2162 = vrot.slane %v2093, 6
      %v2163 = vrot.slane %v2094, 6
      %v2164 = vrot.slane %v2096, 6
      %v2165 = vrot.slane %v2097, 6
      %v2166 = vrot.slane %v2098, 6
      %v2167 = vrot.slane %v2100, 6
      %v2168 = vrot.slane %v2101, 6
      %v2169 = vrot.slane %v2102, 6
      %v2170 = vrot.slane %v2104, 6
      %v2171 = vrot.slane %v2105, 6
      %v2172 = vrot.slane %v2106, 6
      %v2173 = vrot.slane %v2108, 6
      %v2174 = vrot.slane %v2109, 6
      %v2175 = vrot.slane %v2110, 6
      %v2176 = vrot.slane %v2112, 6
      %v2177 = vrot.slane %v2113, 6
      %v2178 = vrot.slane %v2114, 6
      %v2179 = vrot.slane %v2116, 6
      %v2180 = vrot.slane %v2117, 6
      %v2181 = vrot.slane %v2118, 6
      %v2182 = vrot.slane %v2120, 6
      %v2183 = vrot.slane %v2121, 6
      %v2184 = vrot.slane %v2122, 6
      %v2185 = vrot.slane %v2124, 6
      %v2186 = vrot.slane %v2125, 6
      %v2187 = vrot.slane %v2126, 6
      %vm2188 = vcmp.lt.s32.totalorder %v793, 2
      %v2189 = vsel %vm2188, %v2186, %v2187
      %v2190 = vsel %vm2188, %v2185, %v2186
      %v2191 = vsel %vm2188, %v2183, %v2184
      %v2192 = vsel %vm2188, %v2182, %v2183
      %v2193 = vsel %vm2188, %v2180, %v2181
      %v2194 = vsel %vm2188, %v2179, %v2180
      %v2195 = vsel %vm2188, %v2177, %v2178
      %v2196 = vsel %vm2188, %v2176, %v2177
      %v2197 = vsel %vm2188, %v2174, %v2175
      %v2198 = vsel %vm2188, %v2173, %v2174
      %v2199 = vsel %vm2188, %v2171, %v2172
      %v2200 = vsel %vm2188, %v2170, %v2171
      %v2201 = vsel %vm2188, %v2168, %v2169
      %v2202 = vsel %vm2188, %v2167, %v2168
      %v2203 = vsel %vm2188, %v2165, %v2166
      %v2204 = vsel %vm2188, %v2164, %v2165
      %v2205 = vsel %vm2188, %v2162, %v2163
      %v2206 = vsel %vm2188, %v2161, %v2162
      %v2207 = vsel %vm2188, %v2159, %v2160
      %v2208 = vsel %vm2188, %v2158, %v2159
      %v2209 = vsel %vm2188, %v2156, %v2157
      %v2210 = vsel %vm2188, %v2155, %v2156
      %v2211 = vsel %vm2188, %v2153, %v2154
      %v2212 = vsel %vm2188, %v2152, %v2153
      %v2213 = vsel %vm2188, %v2150, %v2151
      %v2214 = vsel %vm2188, %v2149, %v2150
      %v2215 = vsel %vm2188, %v2147, %v2148
      %v2216 = vsel %vm2188, %v2146, %v2147
      %v2217 = vsel %vm2188, %v2144, %v2145
      %v2218 = vsel %vm2188, %v2143, %v2144
      %v2219 = vsel %vm2188, %v2141, %v2142
      %v2220 = vsel %vm2188, %v2140, %v2141
      %v2221 = vsel %vm2188, %v2138, %v2139
      %v2222 = vsel %vm2188, %v2137, %v2138
      %v2223 = vsel %vm2188, %v2135, %v2136
      %v2224 = vsel %vm2188, %v2134, %v2135
      %v2225 = vsel %vm2188, %v2132, %v2133
      %v2226 = vsel %vm2188, %v2131, %v2132
      %v2227 = vsel %vm2188, %v2129, %v2130
      %v2228 = vsel %vm2188, %v2128, %v2129
      %v2229 = vrot.slane %v2049, 2
      %v2230 = vrot.slane %v2050, 2
      %v2231 = vrot.slane %v2051, 2
      %v2232 = vrot.slane %v2053, 2
      %v2233 = vrot.slane %v2054, 2
      %v2234 = vrot.slane %v2055, 2
      %v2235 = vrot.slane %v2057, 2
      %v2236 = vrot.slane %v2058, 2
      %v2237 = vrot.slane %v2059, 2
      %v2238 = vrot.slane %v2061, 2
      %v2239 = vrot.slane %v2062, 2
      %v2240 = vrot.slane %v2063, 2
      %v2241 = vrot.slane %v2065, 2
      %v2242 = vrot.slane %v2066, 2
      %v2243 = vrot.slane %v2067, 2
      %v2244 = vrot.slane %v2069, 2
      %v2245 = vrot.slane %v2070, 2
      %v2246 = vrot.slane %v2071, 2
      %v2247 = vrot.slane %v2073, 2
      %v2248 = vrot.slane %v2074, 2
      %v2249 = vrot.slane %v2075, 2
      %v2250 = vrot.slane %v2077, 2
      %v2251 = vrot.slane %v2078, 2
      %v2252 = vrot.slane %v2079, 2
      %v2253 = vrot.slane %v2081, 2
      %v2254 = vrot.slane %v2082, 2
      %v2255 = vrot.slane %v2083, 2
      %v2256 = vrot.slane %v2085, 2
      %v2257 = vrot.slane %v2086, 2
      %v2258 = vrot.slane %v2087, 2
      %v2259 = vrot.slane %v2089, 2
      %v2260 = vrot.slane %v2090, 2
      %v2261 = vrot.slane %v2091, 2
      %v2262 = vrot.slane %v2093, 2
      %v2263 = vrot.slane %v2094, 2
      %v2264 = vrot.slane %v2095, 2
      %v2265 = vrot.slane %v2097, 2
      %v2266 = vrot.slane %v2098, 2
      %v2267 = vrot.slane %v2099, 2
      %v2268 = vrot.slane %v2101, 2
      %v2269 = vrot.slane %v2102, 2
      %v2270 = vrot.slane %v2103, 2
      %v2271 = vrot.slane %v2105, 2
      %v2272 = vrot.slane %v2106, 2
      %v2273 = vrot.slane %v2107, 2
      %v2274 = vrot.slane %v2109, 2
      %v2275 = vrot.slane %v2110, 2
      %v2276 = vrot.slane %v2111, 2
      %v2277 = vrot.slane %v2113, 2
      %v2278 = vrot.slane %v2114, 2
      %v2279 = vrot.slane %v2115, 2
      %v2280 = vrot.slane %v2117, 2
      %v2281 = vrot.slane %v2118, 2
      %v2282 = vrot.slane %v2119, 2
      %v2283 = vrot.slane %v2121, 2
      %v2284 = vrot.slane %v2122, 2
      %v2285 = vrot.slane %v2123, 2
      %v2286 = vrot.slane %v2125, 2
      %v2287 = vrot.slane %v2126, 2
      %v2288 = vrot.slane %v2127, 2
      %vm2289 = vcmp.lt.s32.totalorder %v793, 6
      %v2290 = vsel %vm2289, %v2287, %v2288
      %v2291 = vsel %vm2289, %v2286, %v2287
      %v2292 = vsel %vm2289, %v2284, %v2285
      %v2293 = vsel %vm2289, %v2283, %v2284
      %v2294 = vsel %vm2289, %v2281, %v2282
      %v2295 = vsel %vm2289, %v2280, %v2281
      %v2296 = vsel %vm2289, %v2278, %v2279
      %v2297 = vsel %vm2289, %v2277, %v2278
      %v2298 = vsel %vm2289, %v2275, %v2276
      %v2299 = vsel %vm2289, %v2274, %v2275
      %v2300 = vsel %vm2289, %v2272, %v2273
      %v2301 = vsel %vm2289, %v2271, %v2272
      %v2302 = vsel %vm2289, %v2269, %v2270
      %v2303 = vsel %vm2289, %v2268, %v2269
      %v2304 = vsel %vm2289, %v2266, %v2267
      %v2305 = vsel %vm2289, %v2265, %v2266
      %v2306 = vsel %vm2289, %v2263, %v2264
      %v2307 = vsel %vm2289, %v2262, %v2263
      %v2308 = vsel %vm2289, %v2260, %v2261
      %v2309 = vsel %vm2289, %v2259, %v2260
      %v2310 = vsel %vm2289, %v2257, %v2258
      %v2311 = vsel %vm2289, %v2256, %v2257
      %v2312 = vsel %vm2289, %v2254, %v2255
      %v2313 = vsel %vm2289, %v2253, %v2254
      %v2314 = vsel %vm2289, %v2251, %v2252
      %v2315 = vsel %vm2289, %v2250, %v2251
      %v2316 = vsel %vm2289, %v2248, %v2249
      %v2317 = vsel %vm2289, %v2247, %v2248
      %v2318 = vsel %vm2289, %v2245, %v2246
      %v2319 = vsel %vm2289, %v2244, %v2245
      %v2320 = vsel %vm2289, %v2242, %v2243
      %v2321 = vsel %vm2289, %v2241, %v2242
      %v2322 = vsel %vm2289, %v2239, %v2240
      %v2323 = vsel %vm2289, %v2238, %v2239
      %v2324 = vsel %vm2289, %v2236, %v2237
      %v2325 = vsel %vm2289, %v2235, %v2236
      %v2326 = vsel %vm2289, %v2233, %v2234
      %v2327 = vsel %vm2289, %v2232, %v2233
      %v2328 = vsel %vm2289, %v2230, %v2231
      %v2329 = vsel %vm2289, %v2229, %v2230
      %v2330 = vlaneseq
      %v2331 = vshrl.u32 %v2330, 7
      %v2332 = vsub.s32 1, %v2331
      %v2333 = vrot.slane %v338, %v2332
      %v2334 = vmul.f32 %v2333, %v2228
      %v2335 = vmul.f32 %v2333, %v2227
      %v2336 = vmul.f32 %v2333, %v2226
      %v2337 = vmul.f32 %v2333, %v2225
      %v2338 = vmul.f32 %v2333, %v2224
      %v2339 = vmul.f32 %v2333, %v2223
      %v2340 = vmul.f32 %v2333, %v2222
      %v2341 = vmul.f32 %v2333, %v2221
      %v2342 = vmul.f32 %v2333, %v2220
      %v2343 = vmul.f32 %v2333, %v2219
      %v2344 = vmul.f32 %v2333, %v2218
      %v2345 = vmul.f32 %v2333, %v2217
      %v2346 = vmul.f32 %v2333, %v2216
      %v2347 = vmul.f32 %v2333, %v2215
      %v2348 = vmul.f32 %v2333, %v2214
      %v2349 = vmul.f32 %v2333, %v2213
      %v2350 = vmul.f32 %v2333, %v2212
      %v2351 = vmul.f32 %v2333, %v2211
      %v2352 = vmul.f32 %v2333, %v2210
      %v2353 = vmul.f32 %v2333, %v2209
      %v2354 = vmul.f32 %v2333, %v2208
      %v2355 = vmul.f32 %v2333, %v2207
      %v2356 = vmul.f32 %v2333, %v2206
      %v2357 = vmul.f32 %v2333, %v2205
      %v2358 = vmul.f32 %v2333, %v2204
      %v2359 = vmul.f32 %v2333, %v2203
      %v2360 = vmul.f32 %v2333, %v2202
      %v2361 = vmul.f32 %v2333, %v2201
      %v2362 = vmul.f32 %v2333, %v2200
      %v2363 = vmul.f32 %v2333, %v2199
      %v2364 = vmul.f32 %v2333, %v2198
      %v2365 = vmul.f32 %v2333, %v2197
      %v2366 = vlaneseq
      %v2367 = vshrl.u32 %v2366, 7
      %v2368 = vsub.s32 2, %v2367
      %v2369 = vrot.slane %v338, %v2368
      %v2370 = vmul.f32 %v2369, %v2049
      %v2371 = vmul.f32 %v2369, %v2050
      %v2372 = vmul.f32 %v2369, %v2053
      %v2373 = vmul.f32 %v2369, %v2054
      %v2374 = vmul.f32 %v2369, %v2057
      %v2375 = vmul.f32 %v2369, %v2058
      %v2376 = vmul.f32 %v2369, %v2061
      %v2377 = vmul.f32 %v2369, %v2062
      %v2378 = vmul.f32 %v2369, %v2065
      %v2379 = vmul.f32 %v2369, %v2066
      %v2380 = vmul.f32 %v2369, %v2069
      %v2381 = vmul.f32 %v2369, %v2070
      %v2382 = vmul.f32 %v2369, %v2073
      %v2383 = vmul.f32 %v2369, %v2074
      %v2384 = vmul.f32 %v2369, %v2077
      %v2385 = vmul.f32 %v2369, %v2078
      %v2386 = vmul.f32 %v2369, %v2081
      %v2387 = vmul.f32 %v2369, %v2082
      %v2388 = vmul.f32 %v2369, %v2085
      %v2389 = vmul.f32 %v2369, %v2086
      %v2390 = vmul.f32 %v2369, %v2089
      %v2391 = vmul.f32 %v2369, %v2090
      %v2392 = vmul.f32 %v2369, %v2093
      %v2393 = vmul.f32 %v2369, %v2094
      %v2394 = vmul.f32 %v2369, %v2097
      %v2395 = vmul.f32 %v2369, %v2098
      %v2396 = vmul.f32 %v2369, %v2101
      %v2397 = vmul.f32 %v2369, %v2102
      %v2398 = vmul.f32 %v2369, %v2105
      %v2399 = vmul.f32 %v2369, %v2106
      %v2400 = vmul.f32 %v2369, %v2109
      %v2401 = vmul.f32 %v2369, %v2110
      %v2402 = vadd.f32 %v2334, %v2370
      %v2403 = vadd.f32 %v2335, %v2371
      %v2404 = vadd.f32 %v2336, %v2372
      %v2405 = vadd.f32 %v2337, %v2373
      %v2406 = vadd.f32 %v2338, %v2374
      %v2407 = vadd.f32 %v2339, %v2375
      %v2408 = vadd.f32 %v2340, %v2376
      %v2409 = vadd.f32 %v2341, %v2377
      %v2410 = vadd.f32 %v2342, %v2378
      %v2411 = vadd.f32 %v2343, %v2379
      %v2412 = vadd.f32 %v2344, %v2380
      %v2413 = vadd.f32 %v2345, %v2381
      %v2414 = vadd.f32 %v2346, %v2382
      %v2415 = vadd.f32 %v2347, %v2383
      %v2416 = vadd.f32 %v2348, %v2384
      %v2417 = vadd.f32 %v2349, %v2385
      %v2418 = vadd.f32 %v2350, %v2386
      %v2419 = vadd.f32 %v2351, %v2387
      %v2420 = vadd.f32 %v2352, %v2388
      %v2421 = vadd.f32 %v2353, %v2389
      %v2422 = vadd.f32 %v2354, %v2390
      %v2423 = vadd.f32 %v2355, %v2391
      %v2424 = vadd.f32 %v2356, %v2392
      %v2425 = vadd.f32 %v2357, %v2393
      %v2426 = vadd.f32 %v2358, %v2394
      %v2427 = vadd.f32 %v2359, %v2395
      %v2428 = vadd.f32 %v2360, %v2396
      %v2429 = vadd.f32 %v2361, %v2397
      %v2430 = vadd.f32 %v2362, %v2398
      %v2431 = vadd.f32 %v2363, %v2399
      %v2432 = vadd.f32 %v2364, %v2400
      %v2433 = vadd.f32 %v2365, %v2401
      %v2434 = vlaneseq
      %v2435 = vshrl.u32 %v2434, 7
      %v2436 = vsub.s32 3, %v2435
      %v2437 = vrot.slane %v338, %v2436
      %v2438 = vmul.f32 %v2437, %v2329
      %v2439 = vmul.f32 %v2437, %v2328
      %v2440 = vmul.f32 %v2437, %v2327
      %v2441 = vmul.f32 %v2437, %v2326
      %v2442 = vmul.f32 %v2437, %v2325
      %v2443 = vmul.f32 %v2437, %v2324
      %v2444 = vmul.f32 %v2437, %v2323
      %v2445 = vmul.f32 %v2437, %v2322
      %v2446 = vmul.f32 %v2437, %v2321
      %v2447 = vmul.f32 %v2437, %v2320
      %v2448 = vmul.f32 %v2437, %v2319
      %v2449 = vmul.f32 %v2437, %v2318
      %v2450 = vmul.f32 %v2437, %v2317
      %v2451 = vmul.f32 %v2437, %v2316
      %v2452 = vmul.f32 %v2437, %v2315
      %v2453 = vmul.f32 %v2437, %v2314
      %v2454 = vmul.f32 %v2437, %v2313
      %v2455 = vmul.f32 %v2437, %v2312
      %v2456 = vmul.f32 %v2437, %v2311
      %v2457 = vmul.f32 %v2437, %v2310
      %v2458 = vmul.f32 %v2437, %v2309
      %v2459 = vmul.f32 %v2437, %v2308
      %v2460 = vmul.f32 %v2437, %v2307
      %v2461 = vmul.f32 %v2437, %v2306
      %v2462 = vmul.f32 %v2437, %v2305
      %v2463 = vmul.f32 %v2437, %v2304
      %v2464 = vmul.f32 %v2437, %v2303
      %v2465 = vmul.f32 %v2437, %v2302
      %v2466 = vmul.f32 %v2437, %v2301
      %v2467 = vmul.f32 %v2437, %v2300
      %v2468 = vmul.f32 %v2437, %v2299
      %v2469 = vmul.f32 %v2437, %v2298
      %v2470 = vadd.f32 %v2402, %v2438
      %v2471 = vadd.f32 %v2403, %v2439
      %v2472 = vadd.f32 %v2404, %v2440
      %v2473 = vadd.f32 %v2405, %v2441
      %v2474 = vadd.f32 %v2406, %v2442
      %v2475 = vadd.f32 %v2407, %v2443
      %v2476 = vadd.f32 %v2408, %v2444
      %v2477 = vadd.f32 %v2409, %v2445
      %v2478 = vadd.f32 %v2410, %v2446
      %v2479 = vadd.f32 %v2411, %v2447
      %v2480 = vadd.f32 %v2412, %v2448
      %v2481 = vadd.f32 %v2413, %v2449
      %v2482 = vadd.f32 %v2414, %v2450
      %v2483 = vadd.f32 %v2415, %v2451
      %v2484 = vadd.f32 %v2416, %v2452
      %v2485 = vadd.f32 %v2417, %v2453
      %v2486 = vadd.f32 %v2418, %v2454
      %v2487 = vadd.f32 %v2419, %v2455
      %v2488 = vadd.f32 %v2420, %v2456
      %v2489 = vadd.f32 %v2421, %v2457
      %v2490 = vadd.f32 %v2422, %v2458
      %v2491 = vadd.f32 %v2423, %v2459
      %v2492 = vadd.f32 %v2424, %v2460
      %v2493 = vadd.f32 %v2425, %v2461
      %v2494 = vadd.f32 %v2426, %v2462
      %v2495 = vadd.f32 %v2427, %v2463
      %v2496 = vadd.f32 %v2428, %v2464
      %v2497 = vadd.f32 %v2429, %v2465
      %v2498 = vadd.f32 %v2430, %v2466
      %v2499 = vadd.f32 %v2431, %v2467
      %v2500 = vadd.f32 %v2432, %v2468
      %v2501 = vadd.f32 %v2433, %v2469
      %v2502 = vlaneseq
      %v2503 = vshrl.u32 %v2502, 7
      %v2504 = vsub.s32 4, %v2503
      %v2505 = vrot.slane %v338, %v2504
      %v2506 = vmul.f32 %v2505, %v2224
      %v2507 = vmul.f32 %v2505, %v2223
      %v2508 = vmul.f32 %v2505, %v2222
      %v2509 = vmul.f32 %v2505, %v2221
      %v2510 = vmul.f32 %v2505, %v2220
      %v2511 = vmul.f32 %v2505, %v2219
      %v2512 = vmul.f32 %v2505, %v2218
      %v2513 = vmul.f32 %v2505, %v2217
      %v2514 = vmul.f32 %v2505, %v2216
      %v2515 = vmul.f32 %v2505, %v2215
      %v2516 = vmul.f32 %v2505, %v2214
      %v2517 = vmul.f32 %v2505, %v2213
      %v2518 = vmul.f32 %v2505, %v2212
      %v2519 = vmul.f32 %v2505, %v2211
      %v2520 = vmul.f32 %v2505, %v2210
      %v2521 = vmul.f32 %v2505, %v2209
      %v2522 = vmul.f32 %v2505, %v2208
      %v2523 = vmul.f32 %v2505, %v2207
      %v2524 = vmul.f32 %v2505, %v2206
      %v2525 = vmul.f32 %v2505, %v2205
      %v2526 = vmul.f32 %v2505, %v2204
      %v2527 = vmul.f32 %v2505, %v2203
      %v2528 = vmul.f32 %v2505, %v2202
      %v2529 = vmul.f32 %v2505, %v2201
      %v2530 = vmul.f32 %v2505, %v2200
      %v2531 = vmul.f32 %v2505, %v2199
      %v2532 = vmul.f32 %v2505, %v2198
      %v2533 = vmul.f32 %v2505, %v2197
      %v2534 = vmul.f32 %v2505, %v2196
      %v2535 = vmul.f32 %v2505, %v2195
      %v2536 = vmul.f32 %v2505, %v2194
      %v2537 = vmul.f32 %v2505, %v2193
      %v2538 = vadd.f32 %v2470, %v2506
      %v2539 = vadd.f32 %v2471, %v2507
      %v2540 = vadd.f32 %v2472, %v2508
      %v2541 = vadd.f32 %v2473, %v2509
      %v2542 = vadd.f32 %v2474, %v2510
      %v2543 = vadd.f32 %v2475, %v2511
      %v2544 = vadd.f32 %v2476, %v2512
      %v2545 = vadd.f32 %v2477, %v2513
      %v2546 = vadd.f32 %v2478, %v2514
      %v2547 = vadd.f32 %v2479, %v2515
      %v2548 = vadd.f32 %v2480, %v2516
      %v2549 = vadd.f32 %v2481, %v2517
      %v2550 = vadd.f32 %v2482, %v2518
      %v2551 = vadd.f32 %v2483, %v2519
      %v2552 = vadd.f32 %v2484, %v2520
      %v2553 = vadd.f32 %v2485, %v2521
      %v2554 = vadd.f32 %v2486, %v2522
      %v2555 = vadd.f32 %v2487, %v2523
      %v2556 = vadd.f32 %v2488, %v2524
      %v2557 = vadd.f32 %v2489, %v2525
      %v2558 = vadd.f32 %v2490, %v2526
      %v2559 = vadd.f32 %v2491, %v2527
      %v2560 = vadd.f32 %v2492, %v2528
      %v2561 = vadd.f32 %v2493, %v2529
      %v2562 = vadd.f32 %v2494, %v2530
      %v2563 = vadd.f32 %v2495, %v2531
      %v2564 = vadd.f32 %v2496, %v2532
      %v2565 = vadd.f32 %v2497, %v2533
      %v2566 = vadd.f32 %v2498, %v2534
      %v2567 = vadd.f32 %v2499, %v2535
      %v2568 = vadd.f32 %v2500, %v2536
      %v2569 = vadd.f32 %v2501, %v2537
      %v2570 = vlaneseq
      %v2571 = vshrl.u32 %v2570, 7
      %v2572 = vsub.s32 5, %v2571
      %v2573 = vrot.slane %v338, %v2572
      %v2574 = vmul.f32 %v2573, %v2057
      %v2575 = vmul.f32 %v2573, %v2058
      %v2576 = vmul.f32 %v2573, %v2061
      %v2577 = vmul.f32 %v2573, %v2062
      %v2578 = vmul.f32 %v2573, %v2065
      %v2579 = vmul.f32 %v2573, %v2066
      %v2580 = vmul.f32 %v2573, %v2069
      %v2581 = vmul.f32 %v2573, %v2070
      %v2582 = vmul.f32 %v2573, %v2073
      %v2583 = vmul.f32 %v2573, %v2074
      %v2584 = vmul.f32 %v2573, %v2077
      %v2585 = vmul.f32 %v2573, %v2078
      %v2586 = vmul.f32 %v2573, %v2081
      %v2587 = vmul.f32 %v2573, %v2082
      %v2588 = vmul.f32 %v2573, %v2085
      %v2589 = vmul.f32 %v2573, %v2086
      %v2590 = vmul.f32 %v2573, %v2089
      %v2591 = vmul.f32 %v2573, %v2090
      %v2592 = vmul.f32 %v2573, %v2093
      %v2593 = vmul.f32 %v2573, %v2094
      %v2594 = vmul.f32 %v2573, %v2097
      %v2595 = vmul.f32 %v2573, %v2098
      %v2596 = vmul.f32 %v2573, %v2101
      %v2597 = vmul.f32 %v2573, %v2102
      %v2598 = vmul.f32 %v2573, %v2105
      %v2599 = vmul.f32 %v2573, %v2106
      %v2600 = vmul.f32 %v2573, %v2109
      %v2601 = vmul.f32 %v2573, %v2110
      %v2602 = vmul.f32 %v2573, %v2113
      %v2603 = vmul.f32 %v2573, %v2114
      %v2604 = vmul.f32 %v2573, %v2117
      %v2605 = vmul.f32 %v2573, %v2118
      %v2606 = vadd.f32 %v2538, %v2574
      %v2607 = vadd.f32 %v2539, %v2575
      %v2608 = vadd.f32 %v2540, %v2576
      %v2609 = vadd.f32 %v2541, %v2577
      %v2610 = vadd.f32 %v2542, %v2578
      %v2611 = vadd.f32 %v2543, %v2579
      %v2612 = vadd.f32 %v2544, %v2580
      %v2613 = vadd.f32 %v2545, %v2581
      %v2614 = vadd.f32 %v2546, %v2582
      %v2615 = vadd.f32 %v2547, %v2583
      %v2616 = vadd.f32 %v2548, %v2584
      %v2617 = vadd.f32 %v2549, %v2585
      %v2618 = vadd.f32 %v2550, %v2586
      %v2619 = vadd.f32 %v2551, %v2587
      %v2620 = vadd.f32 %v2552, %v2588
      %v2621 = vadd.f32 %v2553, %v2589
      %v2622 = vadd.f32 %v2554, %v2590
      %v2623 = vadd.f32 %v2555, %v2591
      %v2624 = vadd.f32 %v2556, %v2592
      %v2625 = vadd.f32 %v2557, %v2593
      %v2626 = vadd.f32 %v2558, %v2594
      %v2627 = vadd.f32 %v2559, %v2595
      %v2628 = vadd.f32 %v2560, %v2596
      %v2629 = vadd.f32 %v2561, %v2597
      %v2630 = vadd.f32 %v2562, %v2598
      %v2631 = vadd.f32 %v2563, %v2599
      %v2632 = vadd.f32 %v2564, %v2600
      %v2633 = vadd.f32 %v2565, %v2601
      %v2634 = vadd.f32 %v2566, %v2602
      %v2635 = vadd.f32 %v2567, %v2603
      %v2636 = vadd.f32 %v2568, %v2604
      %v2637 = vadd.f32 %v2569, %v2605
      %v2638 = vlaneseq
      %v2639 = vshrl.u32 %v2638, 7
      %v2640 = vsub.s32 6, %v2639
      %v2641 = vrot.slane %v338, %v2640
      %v2642 = vmul.f32 %v2641, %v2325
      %v2643 = vmul.f32 %v2641, %v2324
      %v2644 = vmul.f32 %v2641, %v2323
      %v2645 = vmul.f32 %v2641, %v2322
      %v2646 = vmul.f32 %v2641, %v2321
      %v2647 = vmul.f32 %v2641, %v2320
      %v2648 = vmul.f32 %v2641, %v2319
      %v2649 = vmul.f32 %v2641, %v2318
      %v2650 = vmul.f32 %v2641, %v2317
      %v2651 = vmul.f32 %v2641, %v2316
      %v2652 = vmul.f32 %v2641, %v2315
      %v2653 = vmul.f32 %v2641, %v2314
      %v2654 = vmul.f32 %v2641, %v2313
      %v2655 = vmul.f32 %v2641, %v2312
      %v2656 = vmul.f32 %v2641, %v2311
      %v2657 = vmul.f32 %v2641, %v2310
      %v2658 = vmul.f32 %v2641, %v2309
      %v2659 = vmul.f32 %v2641, %v2308
      %v2660 = vmul.f32 %v2641, %v2307
      %v2661 = vmul.f32 %v2641, %v2306
      %v2662 = vmul.f32 %v2641, %v2305
      %v2663 = vmul.f32 %v2641, %v2304
      %v2664 = vmul.f32 %v2641, %v2303
      %v2665 = vmul.f32 %v2641, %v2302
      %v2666 = vmul.f32 %v2641, %v2301
      %v2667 = vmul.f32 %v2641, %v2300
      %v2668 = vmul.f32 %v2641, %v2299
      %v2669 = vmul.f32 %v2641, %v2298
      %v2670 = vmul.f32 %v2641, %v2297
      %v2671 = vmul.f32 %v2641, %v2296
      %v2672 = vmul.f32 %v2641, %v2295
      %v2673 = vmul.f32 %v2641, %v2294
      %v2674 = vadd.f32 %v2606, %v2642
      %v2675 = vadd.f32 %v2607, %v2643
      %v2676 = vadd.f32 %v2608, %v2644
      %v2677 = vadd.f32 %v2609, %v2645
      %v2678 = vadd.f32 %v2610, %v2646
      %v2679 = vadd.f32 %v2611, %v2647
      %v2680 = vadd.f32 %v2612, %v2648
      %v2681 = vadd.f32 %v2613, %v2649
      %v2682 = vadd.f32 %v2614, %v2650
      %v2683 = vadd.f32 %v2615, %v2651
      %v2684 = vadd.f32 %v2616, %v2652
      %v2685 = vadd.f32 %v2617, %v2653
      %v2686 = vadd.f32 %v2618, %v2654
      %v2687 = vadd.f32 %v2619, %v2655
      %v2688 = vadd.f32 %v2620, %v2656
      %v2689 = vadd.f32 %v2621, %v2657
      %v2690 = vadd.f32 %v2622, %v2658
      %v2691 = vadd.f32 %v2623, %v2659
      %v2692 = vadd.f32 %v2624, %v2660
      %v2693 = vadd.f32 %v2625, %v2661
      %v2694 = vadd.f32 %v2626, %v2662
      %v2695 = vadd.f32 %v2627, %v2663
      %v2696 = vadd.f32 %v2628, %v2664
      %v2697 = vadd.f32 %v2629, %v2665
      %v2698 = vadd.f32 %v2630, %v2666
      %v2699 = vadd.f32 %v2631, %v2667
      %v2700 = vadd.f32 %v2632, %v2668
      %v2701 = vadd.f32 %v2633, %v2669
      %v2702 = vadd.f32 %v2634, %v2670
      %v2703 = vadd.f32 %v2635, %v2671
      %v2704 = vadd.f32 %v2636, %v2672
      %v2705 = vadd.f32 %v2637, %v2673
      %v2706 = vlaneseq
      %v2707 = vshrl.u32 %v2706, 7
      %v2708 = vsub.s32 7, %v2707
      %v2709 = vrot.slane %v338, %v2708
      %v2710 = vmul.f32 %v2709, %v2220
      %v2711 = vmul.f32 %v2709, %v2219
      %v2712 = vmul.f32 %v2709, %v2218
      %v2713 = vmul.f32 %v2709, %v2217
      %v2714 = vmul.f32 %v2709, %v2216
      %v2715 = vmul.f32 %v2709, %v2215
      %v2716 = vmul.f32 %v2709, %v2214
      %v2717 = vmul.f32 %v2709, %v2213
      %v2718 = vmul.f32 %v2709, %v2212
      %v2719 = vmul.f32 %v2709, %v2211
      %v2720 = vmul.f32 %v2709, %v2210
      %v2721 = vmul.f32 %v2709, %v2209
      %v2722 = vmul.f32 %v2709, %v2208
      %v2723 = vmul.f32 %v2709, %v2207
      %v2724 = vmul.f32 %v2709, %v2206
      %v2725 = vmul.f32 %v2709, %v2205
      %v2726 = vmul.f32 %v2709, %v2204
      %v2727 = vmul.f32 %v2709, %v2203
      %v2728 = vmul.f32 %v2709, %v2202
      %v2729 = vmul.f32 %v2709, %v2201
      %v2730 = vmul.f32 %v2709, %v2200
      %v2731 = vmul.f32 %v2709, %v2199
      %v2732 = vmul.f32 %v2709, %v2198
      %v2733 = vmul.f32 %v2709, %v2197
      %v2734 = vmul.f32 %v2709, %v2196
      %v2735 = vmul.f32 %v2709, %v2195
      %v2736 = vmul.f32 %v2709, %v2194
      %v2737 = vmul.f32 %v2709, %v2193
      %v2738 = vmul.f32 %v2709, %v2192
      %v2739 = vmul.f32 %v2709, %v2191
      %v2740 = vmul.f32 %v2709, %v2190
      %v2741 = vmul.f32 %v2709, %v2189
      %v2742 = vadd.f32 %v2674, %v2710
      %v2743 = vadd.f32 %v2675, %v2711
      %v2744 = vadd.f32 %v2676, %v2712
      %v2745 = vadd.f32 %v2677, %v2713
      %v2746 = vadd.f32 %v2678, %v2714
      %v2747 = vadd.f32 %v2679, %v2715
      %v2748 = vadd.f32 %v2680, %v2716
      %v2749 = vadd.f32 %v2681, %v2717
      %v2750 = vadd.f32 %v2682, %v2718
      %v2751 = vadd.f32 %v2683, %v2719
      %v2752 = vadd.f32 %v2684, %v2720
      %v2753 = vadd.f32 %v2685, %v2721
      %v2754 = vadd.f32 %v2686, %v2722
      %v2755 = vadd.f32 %v2687, %v2723
      %v2756 = vadd.f32 %v2688, %v2724
      %v2757 = vadd.f32 %v2689, %v2725
      %v2758 = vadd.f32 %v2690, %v2726
      %v2759 = vadd.f32 %v2691, %v2727
      %v2760 = vadd.f32 %v2692, %v2728
      %v2761 = vadd.f32 %v2693, %v2729
      %v2762 = vadd.f32 %v2694, %v2730
      %v2763 = vadd.f32 %v2695, %v2731
      %v2764 = vadd.f32 %v2696, %v2732
      %v2765 = vadd.f32 %v2697, %v2733
      %v2766 = vadd.f32 %v2698, %v2734
      %v2767 = vadd.f32 %v2699, %v2735
      %v2768 = vadd.f32 %v2700, %v2736
      %v2769 = vadd.f32 %v2701, %v2737
      %v2770 = vadd.f32 %v2702, %v2738
      %v2771 = vadd.f32 %v2703, %v2739
      %v2772 = vadd.f32 %v2704, %v2740
      %v2773 = vadd.f32 %v2705, %v2741
      %v2774 = vlaneseq
      %v2775 = vshrl.u32 %v2774, 7
      %v2776 = vsub.s32 0, %v2775
      %v2777 = vrot.slane %v339, %v2776
      %v2778 = vmul.f32 %v2777, %v2065
      %v2779 = vmul.f32 %v2777, %v2066
      %v2780 = vmul.f32 %v2777, %v2069
      %v2781 = vmul.f32 %v2777, %v2070
      %v2782 = vmul.f32 %v2777, %v2073
      %v2783 = vmul.f32 %v2777, %v2074
      %v2784 = vmul.f32 %v2777, %v2077
      %v2785 = vmul.f32 %v2777, %v2078
      %v2786 = vmul.f32 %v2777, %v2081
      %v2787 = vmul.f32 %v2777, %v2082
      %v2788 = vmul.f32 %v2777, %v2085
      %v2789 = vmul.f32 %v2777, %v2086
      %v2790 = vmul.f32 %v2777, %v2089
      %v2791 = vmul.f32 %v2777, %v2090
      %v2792 = vmul.f32 %v2777, %v2093
      %v2793 = vmul.f32 %v2777, %v2094
      %v2794 = vmul.f32 %v2777, %v2097
      %v2795 = vmul.f32 %v2777, %v2098
      %v2796 = vmul.f32 %v2777, %v2101
      %v2797 = vmul.f32 %v2777, %v2102
      %v2798 = vmul.f32 %v2777, %v2105
      %v2799 = vmul.f32 %v2777, %v2106
      %v2800 = vmul.f32 %v2777, %v2109
      %v2801 = vmul.f32 %v2777, %v2110
      %v2802 = vmul.f32 %v2777, %v2113
      %v2803 = vmul.f32 %v2777, %v2114
      %v2804 = vmul.f32 %v2777, %v2117
      %v2805 = vmul.f32 %v2777, %v2118
      %v2806 = vmul.f32 %v2777, %v2121
      %v2807 = vmul.f32 %v2777, %v2122
      %v2808 = vmul.f32 %v2777, %v2125
      %v2809 = vmul.f32 %v2777, %v2126
      %v2810 = vadd.f32 %v2742, %v2778
      %v2811 = vadd.f32 %v2743, %v2779
      %v2812 = vadd.f32 %v2744, %v2780
      %v2813 = vadd.f32 %v2745, %v2781
      %v2814 = vadd.f32 %v2746, %v2782
      %v2815 = vadd.f32 %v2747, %v2783
      %v2816 = vadd.f32 %v2748, %v2784
      %v2817 = vadd.f32 %v2749, %v2785
      %v2818 = vadd.f32 %v2750, %v2786
      %v2819 = vadd.f32 %v2751, %v2787
      %v2820 = vadd.f32 %v2752, %v2788
      %v2821 = vadd.f32 %v2753, %v2789
      %v2822 = vadd.f32 %v2754, %v2790
      %v2823 = vadd.f32 %v2755, %v2791
      %v2824 = vadd.f32 %v2756, %v2792
      %v2825 = vadd.f32 %v2757, %v2793
      %v2826 = vadd.f32 %v2758, %v2794
      %v2827 = vadd.f32 %v2759, %v2795
      %v2828 = vadd.f32 %v2760, %v2796
      %v2829 = vadd.f32 %v2761, %v2797
      %v2830 = vadd.f32 %v2762, %v2798
      %v2831 = vadd.f32 %v2763, %v2799
      %v2832 = vadd.f32 %v2764, %v2800
      %v2833 = vadd.f32 %v2765, %v2801
      %v2834 = vadd.f32 %v2766, %v2802
      %v2835 = vadd.f32 %v2767, %v2803
      %v2836 = vadd.f32 %v2768, %v2804
      %v2837 = vadd.f32 %v2769, %v2805
      %v2838 = vadd.f32 %v2770, %v2806
      %v2839 = vadd.f32 %v2771, %v2807
      %v2840 = vadd.f32 %v2772, %v2808
      %v2841 = vadd.f32 %v2773, %v2809
      %v2842 = vlaneseq
      %v2843 = vshrl.u32 %v2842, 7
      %v2844 = vsub.s32 1, %v2843
      %v2845 = vrot.slane %v339, %v2844
      %v2846 = vmul.f32 %v2845, %v2321
      %v2847 = vmul.f32 %v2845, %v2320
      %v2848 = vmul.f32 %v2845, %v2319
      %v2849 = vmul.f32 %v2845, %v2318
      %v2850 = vmul.f32 %v2845, %v2317
      %v2851 = vmul.f32 %v2845, %v2316
      %v2852 = vmul.f32 %v2845, %v2315
      %v2853 = vmul.f32 %v2845, %v2314
      %v2854 = vmul.f32 %v2845, %v2313
      %v2855 = vmul.f32 %v2845, %v2312
      %v2856 = vmul.f32 %v2845, %v2311
      %v2857 = vmul.f32 %v2845, %v2310
      %v2858 = vmul.f32 %v2845, %v2309
      %v2859 = vmul.f32 %v2845, %v2308
      %v2860 = vmul.f32 %v2845, %v2307
      %v2861 = vmul.f32 %v2845, %v2306
      %v2862 = vmul.f32 %v2845, %v2305
      %v2863 = vmul.f32 %v2845, %v2304
      %v2864 = vmul.f32 %v2845, %v2303
      %v2865 = vmul.f32 %v2845, %v2302
      %v2866 = vmul.f32 %v2845, %v2301
      %v2867 = vmul.f32 %v2845, %v2300
      %v2868 = vmul.f32 %v2845, %v2299
      %v2869 = vmul.f32 %v2845, %v2298
      %v2870 = vmul.f32 %v2845, %v2297
      %v2871 = vmul.f32 %v2845, %v2296
      %v2872 = vmul.f32 %v2845, %v2295
      %v2873 = vmul.f32 %v2845, %v2294
      %v2874 = vmul.f32 %v2845, %v2293
      %v2875 = vmul.f32 %v2845, %v2292
      %v2876 = vmul.f32 %v2845, %v2291
      %v2877 = vmul.f32 %v2845, %v2290
      %v2878 = vadd.f32 %v2810, %v2846
      %v2879 = vadd.f32 %v2811, %v2847
      %v2880 = vadd.f32 %v2812, %v2848
      %v2881 = vadd.f32 %v2813, %v2849
      %v2882 = vadd.f32 %v2814, %v2850
      %v2883 = vadd.f32 %v2815, %v2851
      %v2884 = vadd.f32 %v2816, %v2852
      %v2885 = vadd.f32 %v2817, %v2853
      %v2886 = vadd.f32 %v2818, %v2854
      %v2887 = vadd.f32 %v2819, %v2855
      %v2888 = vadd.f32 %v2820, %v2856
      %v2889 = vadd.f32 %v2821, %v2857
      %v2890 = vadd.f32 %v2822, %v2858
      %v2891 = vadd.f32 %v2823, %v2859
      %v2892 = vadd.f32 %v2824, %v2860
      %v2893 = vadd.f32 %v2825, %v2861
      %v2894 = vadd.f32 %v2826, %v2862
      %v2895 = vadd.f32 %v2827, %v2863
      %v2896 = vadd.f32 %v2828, %v2864
      %v2897 = vadd.f32 %v2829, %v2865
      %v2898 = vadd.f32 %v2830, %v2866
      %v2899 = vadd.f32 %v2831, %v2867
      %v2900 = vadd.f32 %v2832, %v2868
      %v2901 = vadd.f32 %v2833, %v2869
      %v2902 = vadd.f32 %v2834, %v2870
      %v2903 = vadd.f32 %v2835, %v2871
      %v2904 = vadd.f32 %v2836, %v2872
      %v2905 = vadd.f32 %v2837, %v2873
      %v2906 = vadd.f32 %v2838, %v2874
      %v2907 = vadd.f32 %v2839, %v2875
      %v2908 = vadd.f32 %v2840, %v2876
      %v2909 = vadd.f32 %v2841, %v2877
      %v2910 = vmul.f32 %v1758, %v2878
      %v2911 = vmul.f32 %v1759, %v2879
      %v2912 = vmul.f32 %v1760, %v2880
      %v2913 = vmul.f32 %v1761, %v2881
      %v2914 = vmul.f32 %v1762, %v2882
      %v2915 = vmul.f32 %v1763, %v2883
      %v2916 = vmul.f32 %v1764, %v2884
      %v2917 = vmul.f32 %v1765, %v2885
      %v2918 = vmul.f32 %v1766, %v2886
      %v2919 = vmul.f32 %v1767, %v2887
      %v2920 = vmul.f32 %v1768, %v2888
      %v2921 = vmul.f32 %v1769, %v2889
      %v2922 = vmul.f32 %v1770, %v2890
      %v2923 = vmul.f32 %v1771, %v2891
      %v2924 = vmul.f32 %v1772, %v2892
      %v2925 = vmul.f32 %v1773, %v2893
      %v2926 = vmul.f32 %v1774, %v2894
      %v2927 = vmul.f32 %v1775, %v2895
      %v2928 = vmul.f32 %v1776, %v2896
      %v2929 = vmul.f32 %v1777, %v2897
      %v2930 = vmul.f32 %v1778, %v2898
      %v2931 = vmul.f32 %v1779, %v2899
      %v2932 = vmul.f32 %v1780, %v2900
      %v2933 = vmul.f32 %v1781, %v2901
      %v2934 = vmul.f32 %v1782, %v2902
      %v2935 = vmul.f32 %v1783, %v2903
      %v2936 = vmul.f32 %v1784, %v2904
      %v2937 = vmul.f32 %v1785, %v2905
      %v2938 = vmul.f32 %v1786, %v2906
      %v2939 = vmul.f32 %v1787, %v2907
      %v2940 = vmul.f32 %v1788, %v2908
      %v2941 = vmul.f32 %v1789, %v2909
      %s2942 = scalar_lea.vmem %s1, 4
      %v2943 = vld [vmem:[%s2942] sm:$0x3]
      %v2945 = vsel %vm409, %v2943, 0
      %2947 = vmatprep.subr.bf16.mxu0 0
      %2948 = vmatpush1.bf16.msra.mxu0 0
      %2949 = vmatprep.subr.bf16.mxu0 0
      %2950 = vmatpush1.bf16.msra.mxu0 0
      %2951 = vmatprep.subr.bf16.mxu0 0
      %2952 = vmatpush1.bf16.msra.mxu0 0
      %2953 = vmatprep.subr.bf16.mxu0 0
      %2954 = vmatpush1.bf16.msra.mxu0 0
      %2955 = vmatprep.subr.bf16.mxu0 0
      %2956 = vmatpush1.bf16.msra.mxu0 0
      %2957 = vmatprep.subr.bf16.mxu0 0
      %2958 = vmatpush1.bf16.msra.mxu0 0
      %2959 = vmatprep.subr.bf16.mxu0 0
      %2960 = vmatpush1.bf16.msra.mxu0 0
      %2961 = vmatprep.subr.bf16.mxu0 0
      %2962 = vmatpush1.bf16.msra.mxu0 %v2945
      %2963 = vmatprep.subr.bf16.mxu0 0
      %2964 = vmatpush2.bf16.msra.mxu0 0
      %2965 = vmatprep.subr.bf16.mxu0 0
      %2966 = vmatpush2.bf16.msra.mxu0 0
      %2967 = vmatprep.subr.bf16.mxu0 0
      %2968 = vmatpush2.bf16.msra.mxu0 0
      %2969 = vmatprep.subr.bf16.mxu0 0
      %2970 = vmatpush2.bf16.msra.mxu0 0
      %2971 = vmatprep.subr.bf16.mxu0 0
      %2972 = vmatpush2.bf16.msra.mxu0 0
      %2973 = vmatprep.subr.bf16.mxu0 0
      %2974 = vmatpush2.bf16.msra.mxu0 0
      %2975 = vmatprep.subr.bf16.mxu0 0
      %2976 = vmatpush2.bf16.msra.mxu0 0
      %2977 = vmatprep.subr.bf16.mxu0 0
      %2978 = vmatpush2.bf16.msra.mxu0 0
      %2979 = vmatprep.mubr.bf16.mxu0 0
      %2980 = vmatmul.mubr.bf16.gmra.mxu0 %v344
      %v2981 = vpop.f32.mrf.mxu0
      %v2982 = vadd.f32 0.0, %v2981
      %v2983 = vpop.f32.mrf.mxu0
      %v2984 = vpop.f32.mrf.mxu0
      %v2985 = vadd.f32 0.0, %v2984
      %v2986 = vpop.f32.mrf.mxu0
      %2987 = vmatprep.mubr.bf16.mxu0 0
      %2988 = vmatmul.mubr.bf16.gmra.mxu0 %v347
      %v2989 = vpop.f32.mrf.mxu0
      %v2990 = vadd.f32 0.0, %v2989
      %v2991 = vpop.f32.mrf.mxu0
      %v2992 = vpop.f32.mrf.mxu0
      %v2993 = vadd.f32 0.0, %v2992
      %v2994 = vpop.f32.mrf.mxu0
      %2995 = vmatprep.mubr.bf16.mxu0 0
      %2996 = vmatmul.mubr.bf16.gmra.mxu0 %v350
      %v2997 = vpop.f32.mrf.mxu0
      %v2998 = vadd.f32 0.0, %v2997
      %v2999 = vpop.f32.mrf.mxu0
      %v3000 = vpop.f32.mrf.mxu0
      %v3001 = vadd.f32 0.0, %v3000
      %v3002 = vpop.f32.mrf.mxu0
      %3003 = vmatprep.mubr.bf16.mxu0 0
      %3004 = vmatmul.mubr.bf16.gmra.mxu0 %v353
      %v3005 = vpop.f32.mrf.mxu0
      %v3006 = vadd.f32 0.0, %v3005
      %v3007 = vpop.f32.mrf.mxu0
      %v3008 = vpop.f32.mrf.mxu0
      %v3009 = vadd.f32 0.0, %v3008
      %v3010 = vpop.f32.mrf.mxu0
      %3011 = vmatprep.mubr.bf16.mxu0 0
      %3012 = vmatmul.mubr.bf16.gmra.mxu0 %v356
      %v3013 = vpop.f32.mrf.mxu0
      %v3014 = vadd.f32 0.0, %v3013
      %v3015 = vpop.f32.mrf.mxu0
      %v3016 = vpop.f32.mrf.mxu0
      %v3017 = vadd.f32 0.0, %v3016
      %v3018 = vpop.f32.mrf.mxu0
      %3019 = vmatprep.mubr.bf16.mxu0 0
      %3020 = vmatmul.mubr.bf16.gmra.mxu0 %v359
      %v3021 = vpop.f32.mrf.mxu0
      %v3022 = vadd.f32 0.0, %v3021
      %v3023 = vpop.f32.mrf.mxu0
      %v3024 = vpop.f32.mrf.mxu0
      %v3025 = vadd.f32 0.0, %v3024
      %v3026 = vpop.f32.mrf.mxu0
      %3027 = vmatprep.mubr.bf16.mxu0 0
      %3028 = vmatmul.mubr.bf16.gmra.mxu0 %v362
      %v3029 = vpop.f32.mrf.mxu0
      %v3030 = vadd.f32 0.0, %v3029
      %v3031 = vpop.f32.mrf.mxu0
      %v3032 = vpop.f32.mrf.mxu0
      %v3033 = vadd.f32 0.0, %v3032
      %v3034 = vpop.f32.mrf.mxu0
      %3035 = vmatprep.mubr.bf16.mxu0 0
      %3036 = vmatmul.mubr.bf16.gmra.mxu0 %v365
      %v3037 = vpop.f32.mrf.mxu0
      %v3038 = vadd.f32 0.0, %v3037
      %v3039 = vpop.f32.mrf.mxu0
      %v3040 = vpop.f32.mrf.mxu0
      %v3041 = vadd.f32 0.0, %v3040
      %v3042 = vpop.f32.mrf.mxu0
      %3043 = vmatprep.mubr.bf16.mxu0 0
      %3044 = vmatmul.mubr.bf16.gmra.mxu0 %v368
      %v3045 = vpop.f32.mrf.mxu0
      %v3046 = vadd.f32 0.0, %v3045
      %v3047 = vpop.f32.mrf.mxu0
      %v3048 = vpop.f32.mrf.mxu0
      %v3049 = vadd.f32 0.0, %v3048
      %v3050 = vpop.f32.mrf.mxu0
      %3051 = vmatprep.mubr.bf16.mxu0 0
      %3052 = vmatmul.mubr.bf16.gmra.mxu0 %v371
      %v3053 = vpop.f32.mrf.mxu0
      %v3054 = vadd.f32 0.0, %v3053
      %v3055 = vpop.f32.mrf.mxu0
      %v3056 = vpop.f32.mrf.mxu0
      %v3057 = vadd.f32 0.0, %v3056
      %v3058 = vpop.f32.mrf.mxu0
      %3059 = vmatprep.mubr.bf16.mxu0 0
      %3060 = vmatmul.mubr.bf16.gmra.mxu0 %v374
      %v3061 = vpop.f32.mrf.mxu0
      %v3062 = vadd.f32 0.0, %v3061
      %v3063 = vpop.f32.mrf.mxu0
      %v3064 = vpop.f32.mrf.mxu0
      %v3065 = vadd.f32 0.0, %v3064
      %v3066 = vpop.f32.mrf.mxu0
      %3067 = vmatprep.mubr.bf16.mxu0 0
      %3068 = vmatmul.mubr.bf16.gmra.mxu0 %v377
      %v3069 = vpop.f32.mrf.mxu0
      %v3070 = vadd.f32 0.0, %v3069
      %v3071 = vpop.f32.mrf.mxu0
      %v3072 = vpop.f32.mrf.mxu0
      %v3073 = vadd.f32 0.0, %v3072
      %v3074 = vpop.f32.mrf.mxu0
      %3075 = vmatprep.mubr.bf16.mxu0 0
      %3076 = vmatmul.mubr.bf16.gmra.mxu0 %v380
      %v3077 = vpop.f32.mrf.mxu0
      %v3078 = vadd.f32 0.0, %v3077
      %v3079 = vpop.f32.mrf.mxu0
      %v3080 = vpop.f32.mrf.mxu0
      %v3081 = vadd.f32 0.0, %v3080
      %v3082 = vpop.f32.mrf.mxu0
      %3083 = vmatprep.mubr.bf16.mxu0 0
      %3084 = vmatmul.mubr.bf16.gmra.mxu0 %v383
      %v3085 = vpop.f32.mrf.mxu0
      %v3086 = vadd.f32 0.0, %v3085
      %v3087 = vpop.f32.mrf.mxu0
      %v3088 = vpop.f32.mrf.mxu0
      %v3089 = vadd.f32 0.0, %v3088
      %v3090 = vpop.f32.mrf.mxu0
      %3091 = vmatprep.mubr.bf16.mxu0 0
      %3092 = vmatmul.mubr.bf16.gmra.mxu0 %v386
      %v3093 = vpop.f32.mrf.mxu0
      %v3094 = vadd.f32 0.0, %v3093
      %v3095 = vpop.f32.mrf.mxu0
      %v3096 = vpop.f32.mrf.mxu0
      %v3097 = vadd.f32 0.0, %v3096
      %v3098 = vpop.f32.mrf.mxu0
      %3099 = vmatprep.mubr.bf16.mxu0 0
      %3100 = vmatmul.mubr.bf16.gmra.mxu0 %v389
      %v3101 = vpop.f32.mrf.mxu0
      %v3102 = vadd.f32 0.0, %v3101
      %v3103 = vpop.f32.mrf.mxu0
      %v3104 = vpop.f32.mrf.mxu0
      %v3105 = vadd.f32 0.0, %v3104
      %v3106 = vpop.f32.mrf.mxu0
      %3107 = vmatprep.mubr.bf16.mxu0 0
      %3108 = vmatmul.mubr.bf16.gmra.mxu0 %v392
      %v3109 = vpop.f32.mrf.mxu0
      %v3110 = vadd.f32 0.0, %v3109
      %v3111 = vpop.f32.mrf.mxu0
      %v3112 = vpop.f32.mrf.mxu0
      %v3113 = vadd.f32 0.0, %v3112
      %v3114 = vpop.f32.mrf.mxu0
      %3115 = vmatprep.mubr.bf16.mxu0 0
      %3116 = vmatmul.mubr.bf16.gmra.mxu0 %v395
      %v3117 = vpop.f32.mrf.mxu0
      %v3118 = vadd.f32 0.0, %v3117
      %v3119 = vpop.f32.mrf.mxu0
      %v3120 = vpop.f32.mrf.mxu0
      %v3121 = vadd.f32 0.0, %v3120
      %v3122 = vpop.f32.mrf.mxu0
      %3123 = vmatprep.mubr.bf16.mxu0 0
      %3124 = vmatmul.mubr.bf16.gmra.mxu0 %v398
      %v3125 = vpop.f32.mrf.mxu0
      %v3126 = vadd.f32 0.0, %v3125
      %v3127 = vpop.f32.mrf.mxu0
      %v3128 = vpop.f32.mrf.mxu0
      %v3129 = vadd.f32 0.0, %v3128
      %v3130 = vpop.f32.mrf.mxu0
      %3131 = vmatprep.mubr.bf16.mxu0 0
      %3132 = vmatmul.mubr.bf16.gmra.mxu0 %v401
      %v3133 = vpop.f32.mrf.mxu0
      %v3134 = vadd.f32 0.0, %v3133
      %v3135 = vpop.f32.mrf.mxu0
      %v3136 = vpop.f32.mrf.mxu0
      %v3137 = vadd.f32 0.0, %v3136
      %v3138 = vpop.f32.mrf.mxu0
      %3139 = vmatprep.mubr.bf16.mxu0 0
      %3140 = vmatmul.mubr.bf16.gmra.mxu0 %v404
      %v3141 = vpop.f32.mrf.mxu0
      %v3142 = vadd.f32 0.0, %v3141
      %v3143 = vpop.f32.mrf.mxu0
      %v3144 = vpop.f32.mrf.mxu0
      %v3145 = vadd.f32 0.0, %v3144
      %v3146 = vpop.f32.mrf.mxu0
      %3147 = vmatprep.mubr.bf16.mxu0 0
      %3148 = vmatmul.mubr.bf16.gmra.mxu0 %v407
      %v3149 = vpop.f32.mrf.mxu0
      %v3150 = vadd.f32 0.0, %v3149
      %v3151 = vpop.f32.mrf.mxu0
      %v3152 = vpop.f32.mrf.mxu0
      %v3153 = vadd.f32 0.0, %v3152
      %v3154 = vpop.f32.mrf.mxu0
      %3155 = vdwg.mxu0
      %3156 = vst [vmem:[#allocation2 + $0x8] sm:$0xff] %v2982
      %3157 = vst [vmem:[#allocation2 + $0x10] sm:$0xff] %v2985
      %3158 = vst [vmem:[#allocation2 + $0x28] sm:$0xff] %v2990
      %3159 = vst [vmem:[#allocation2 + $0x30] sm:$0xff] %v2993
      %3160 = vst [vmem:[#allocation2 + $0x48] sm:$0xff] %v2998
      %3161 = vst [vmem:[#allocation2 + $0x50] sm:$0xff] %v3001
      %3162 = vst [vmem:[#allocation2 + $0x68] sm:$0xff] %v3006
      %3163 = vst [vmem:[#allocation2 + $0x70] sm:$0xff] %v3009
      %3164 = vst [vmem:[#allocation2 + $0x88] sm:$0xff] %v3014
      %3165 = vst [vmem:[#allocation2 + $0x90] sm:$0xff] %v3017
      %3166 = vst [vmem:[#allocation2 + $0xa8] sm:$0xff] %v3022
      %3167 = vst [vmem:[#allocation2 + $0xb0] sm:$0xff] %v3025
      %3168 = vst [vmem:[#allocation2 + $0xc8] sm:$0xff] %v3030
      %3169 = vst [vmem:[#allocation2 + $0xd0] sm:$0xff] %v3033
      %3170 = vst [vmem:[#allocation2 + $0xe8] sm:$0xff] %v3038
      %3171 = vst [vmem:[#allocation2 + $0xf0] sm:$0xff] %v3041
      %3172 = vst [vmem:[#allocation2 + $0x108] sm:$0xff] %v3046
      %3173 = vst [vmem:[#allocation2 + $0x110] sm:$0xff] %v3049
      %3174 = vst [vmem:[#allocation2 + $0x128] sm:$0xff] %v3054
      %3175 = vst [vmem:[#allocation2 + $0x130] sm:$0xff] %v3057
      %3176 = vst [vmem:[#allocation2 + $0x148] sm:$0xff] %v3062
      %3177 = vst [vmem:[#allocation2 + $0x150] sm:$0xff] %v3065
      %3178 = vst [vmem:[#allocation2 + $0x168] sm:$0xff] %v3070
      %3179 = vst [vmem:[#allocation2 + $0x170] sm:$0xff] %v3073
      %3180 = vst [vmem:[#allocation2 + $0x188] sm:$0xff] %v3078
      %3181 = vst [vmem:[#allocation2 + $0x190] sm:$0xff] %v3081
      %3182 = vst [vmem:[#allocation2 + $0x1a8] sm:$0xff] %v3086
      %3183 = vst [vmem:[#allocation2 + $0x1b0] sm:$0xff] %v3089
      %3184 = vst [vmem:[#allocation2 + $0x1c8] sm:$0xff] %v3094
      %3185 = vst [vmem:[#allocation2 + $0x1d0] sm:$0xff] %v3097
      %3186 = vst [vmem:[#allocation2 + $0x1e8] sm:$0xff] %v3102
      %3187 = vst [vmem:[#allocation2 + $0x1f0] sm:$0xff] %v3105
      %3188 = vst [vmem:[#allocation2 + $0x208] sm:$0xff] %v3110
      %3189 = vst [vmem:[#allocation2 + $0x210] sm:$0xff] %v3113
      %3190 = vst [vmem:[#allocation2 + $0x228] sm:$0xff] %v3118
      %3191 = vst [vmem:[#allocation2 + $0x230] sm:$0xff] %v3121
      %3192 = vst [vmem:[#allocation2 + $0x248] sm:$0xff] %v3126
      %3193 = vst [vmem:[#allocation2 + $0x250] sm:$0xff] %v3129
      %3194 = vst [vmem:[#allocation2 + $0x268] sm:$0xff] %v3134
      %3195 = vst [vmem:[#allocation2 + $0x270] sm:$0xff] %v3137
      %3196 = vst [vmem:[#allocation2 + $0x288] sm:$0xff] %v3142
      %3197 = vst [vmem:[#allocation2 + $0x290] sm:$0xff] %v3145
      %3198 = vst [vmem:[#allocation2 + $0x2a8] sm:$0xff] %v3150
      %3199 = vst [vmem:[#allocation2 + $0x2b0] sm:$0xff] %v3153
      %v3200 = vld [vmem:[#allocation2] sm:$0xff]
      %v3201 = vld [vmem:[#allocation2 + $0x8] sm:$0xff]
      %v3202 = vld [vmem:[#allocation2 + $0x10] sm:$0xff]
      %v3203 = vld [vmem:[#allocation2 + $0x18] sm:$0xff]
      %v3204 = vld [vmem:[#allocation2 + $0x20] sm:$0xff]
      %v3205 = vld [vmem:[#allocation2 + $0x28] sm:$0xff]
      %v3206 = vld [vmem:[#allocation2 + $0x30] sm:$0xff]
      %v3207 = vld [vmem:[#allocation2 + $0x38] sm:$0xff]
      %v3208 = vld [vmem:[#allocation2 + $0x40] sm:$0xff]
      %v3209 = vld [vmem:[#allocation2 + $0x48] sm:$0xff]
      %v3210 = vld [vmem:[#allocation2 + $0x50] sm:$0xff]
      %v3211 = vld [vmem:[#allocation2 + $0x58] sm:$0xff]
      %v3212 = vld [vmem:[#allocation2 + $0x60] sm:$0xff]
      %v3213 = vld [vmem:[#allocation2 + $0x68] sm:$0xff]
      %v3214 = vld [vmem:[#allocation2 + $0x70] sm:$0xff]
      %v3215 = vld [vmem:[#allocation2 + $0x78] sm:$0xff]
      %v3216 = vld [vmem:[#allocation2 + $0x80] sm:$0xff]
      %v3217 = vld [vmem:[#allocation2 + $0x88] sm:$0xff]
      %v3218 = vld [vmem:[#allocation2 + $0x90] sm:$0xff]
      %v3219 = vld [vmem:[#allocation2 + $0x98] sm:$0xff]
      %v3220 = vld [vmem:[#allocation2 + $0xa0] sm:$0xff]
      %v3221 = vld [vmem:[#allocation2 + $0xa8] sm:$0xff]
      %v3222 = vld [vmem:[#allocation2 + $0xb0] sm:$0xff]
      %v3223 = vld [vmem:[#allocation2 + $0xb8] sm:$0xff]
      %v3224 = vld [vmem:[#allocation2 + $0xc0] sm:$0xff]
      %v3225 = vld [vmem:[#allocation2 + $0xc8] sm:$0xff]
      %v3226 = vld [vmem:[#allocation2 + $0xd0] sm:$0xff]
      %v3227 = vld [vmem:[#allocation2 + $0xd8] sm:$0xff]
      %v3228 = vld [vmem:[#allocation2 + $0xe0] sm:$0xff]
      %v3229 = vld [vmem:[#allocation2 + $0xe8] sm:$0xff]
      %v3230 = vld [vmem:[#allocation2 + $0xf0] sm:$0xff]
      %v3231 = vld [vmem:[#allocation2 + $0xf8] sm:$0xff]
      %v3232 = vld [vmem:[#allocation2 + $0x100] sm:$0xff]
      %v3233 = vld [vmem:[#allocation2 + $0x108] sm:$0xff]
      %v3234 = vld [vmem:[#allocation2 + $0x110] sm:$0xff]
      %v3235 = vld [vmem:[#allocation2 + $0x118] sm:$0xff]
      %v3236 = vld [vmem:[#allocation2 + $0x120] sm:$0xff]
      %v3237 = vld [vmem:[#allocation2 + $0x128] sm:$0xff]
      %v3238 = vld [vmem:[#allocation2 + $0x130] sm:$0xff]
      %v3239 = vld [vmem:[#allocation2 + $0x138] sm:$0xff]
      %v3240 = vld [vmem:[#allocation2 + $0x140] sm:$0xff]
      %v3241 = vld [vmem:[#allocation2 + $0x148] sm:$0xff]
      %v3242 = vld [vmem:[#allocation2 + $0x150] sm:$0xff]
      %v3243 = vld [vmem:[#allocation2 + $0x158] sm:$0xff]
      %v3244 = vld [vmem:[#allocation2 + $0x160] sm:$0xff]
      %v3245 = vld [vmem:[#allocation2 + $0x168] sm:$0xff]
      %v3246 = vld [vmem:[#allocation2 + $0x170] sm:$0xff]
      %v3247 = vld [vmem:[#allocation2 + $0x178] sm:$0xff]
      %v3248 = vld [vmem:[#allocation2 + $0x180] sm:$0xff]
      %v3249 = vld [vmem:[#allocation2 + $0x188] sm:$0xff]
      %v3250 = vld [vmem:[#allocation2 + $0x190] sm:$0xff]
      %v3251 = vld [vmem:[#allocation2 + $0x198] sm:$0xff]
      %v3252 = vld [vmem:[#allocation2 + $0x1a0] sm:$0xff]
      %v3253 = vld [vmem:[#allocation2 + $0x1a8] sm:$0xff]
      %v3254 = vld [vmem:[#allocation2 + $0x1b0] sm:$0xff]
      %v3255 = vld [vmem:[#allocation2 + $0x1b8] sm:$0xff]
      %v3256 = vld [vmem:[#allocation2 + $0x1c0] sm:$0xff]
      %v3257 = vld [vmem:[#allocation2 + $0x1c8] sm:$0xff]
      %v3258 = vld [vmem:[#allocation2 + $0x1d0] sm:$0xff]
      %v3259 = vld [vmem:[#allocation2 + $0x1d8] sm:$0xff]
      %v3260 = vld [vmem:[#allocation2 + $0x1e0] sm:$0xff]
      %v3261 = vld [vmem:[#allocation2 + $0x1e8] sm:$0xff]
      %v3262 = vld [vmem:[#allocation2 + $0x1f0] sm:$0xff]
      %v3263 = vld [vmem:[#allocation2 + $0x1f8] sm:$0xff]
      %v3264 = vld [vmem:[#allocation2 + $0x200] sm:$0xff]
      %v3265 = vld [vmem:[#allocation2 + $0x208] sm:$0xff]
      %v3266 = vld [vmem:[#allocation2 + $0x210] sm:$0xff]
      %v3267 = vld [vmem:[#allocation2 + $0x218] sm:$0xff]
      %v3268 = vld [vmem:[#allocation2 + $0x220] sm:$0xff]
      %v3269 = vld [vmem:[#allocation2 + $0x228] sm:$0xff]
      %v3270 = vld [vmem:[#allocation2 + $0x230] sm:$0xff]
      %v3271 = vld [vmem:[#allocation2 + $0x238] sm:$0xff]
      %v3272 = vld [vmem:[#allocation2 + $0x240] sm:$0xff]
      %v3273 = vld [vmem:[#allocation2 + $0x248] sm:$0xff]
      %v3274 = vld [vmem:[#allocation2 + $0x250] sm:$0xff]
      %v3275 = vld [vmem:[#allocation2 + $0x258] sm:$0xff]
      %v3276 = vld [vmem:[#allocation2 + $0x260] sm:$0xff]
      %v3277 = vld [vmem:[#allocation2 + $0x268] sm:$0xff]
      %v3278 = vld [vmem:[#allocation2 + $0x270] sm:$0xff]
      %v3279 = vld [vmem:[#allocation2 + $0x278] sm:$0xff]
      %v3280 = vld [vmem:[#allocation2 + $0x280] sm:$0xff]
      %v3281 = vld [vmem:[#allocation2 + $0x288] sm:$0xff]
      %v3282 = vld [vmem:[#allocation2 + $0x290] sm:$0xff]
      %v3283 = vld [vmem:[#allocation2 + $0x298] sm:$0xff]
      %v3284 = vld [vmem:[#allocation2 + $0x2a0] sm:$0xff]
      %v3285 = vld [vmem:[#allocation2 + $0x2a8] sm:$0xff]
      %v3286 = vld [vmem:[#allocation2 + $0x2b0] sm:$0xff]
      %v3287 = vld [vmem:[#allocation2 + $0x2b8] sm:$0xff]
      %v3288 = vrot.slane %v3200, 5
      %v3289 = vrot.slane %v3201, 5
      %v3290 = vrot.slane %v3202, 5
      %v3291 = vrot.slane %v3204, 5
      %v3292 = vrot.slane %v3205, 5
      %v3293 = vrot.slane %v3206, 5
      %v3294 = vrot.slane %v3208, 5
      %v3295 = vrot.slane %v3209, 5
      %v3296 = vrot.slane %v3210, 5
      %v3297 = vrot.slane %v3212, 5
      %v3298 = vrot.slane %v3213, 5
      %v3299 = vrot.slane %v3214, 5
      %v3300 = vrot.slane %v3216, 5
      %v3301 = vrot.slane %v3217, 5
      %v3302 = vrot.slane %v3218, 5
      %v3303 = vrot.slane %v3220, 5
      %v3304 = vrot.slane %v3221, 5
      %v3305 = vrot.slane %v3222, 5
      %v3306 = vrot.slane %v3224, 5
      %v3307 = vrot.slane %v3225, 5
      %v3308 = vrot.slane %v3226, 5
      %v3309 = vrot.slane %v3228, 5
      %v3310 = vrot.slane %v3229, 5
      %v3311 = vrot.slane %v3230, 5
      %v3312 = vrot.slane %v3232, 5
      %v3313 = vrot.slane %v3233, 5
      %v3314 = vrot.slane %v3234, 5
      %v3315 = vrot.slane %v3236, 5
      %v3316 = vrot.slane %v3237, 5
      %v3317 = vrot.slane %v3238, 5
      %v3318 = vrot.slane %v3240, 5
      %v3319 = vrot.slane %v3241, 5
      %v3320 = vrot.slane %v3242, 5
      %v3321 = vrot.slane %v3244, 5
      %v3322 = vrot.slane %v3245, 5
      %v3323 = vrot.slane %v3246, 5
      %v3324 = vrot.slane %v3248, 5
      %v3325 = vrot.slane %v3249, 5
      %v3326 = vrot.slane %v3250, 5
      %v3327 = vrot.slane %v3252, 5
      %v3328 = vrot.slane %v3253, 5
      %v3329 = vrot.slane %v3254, 5
      %v3330 = vrot.slane %v3256, 5
      %v3331 = vrot.slane %v3257, 5
      %v3332 = vrot.slane %v3258, 5
      %v3333 = vrot.slane %v3260, 5
      %v3334 = vrot.slane %v3261, 5
      %v3335 = vrot.slane %v3262, 5
      %v3336 = vrot.slane %v3264, 5
      %v3337 = vrot.slane %v3265, 5
      %v3338 = vrot.slane %v3266, 5
      %v3339 = vrot.slane %v3268, 5
      %v3340 = vrot.slane %v3269, 5
      %v3341 = vrot.slane %v3270, 5
      %v3342 = vrot.slane %v3272, 5
      %v3343 = vrot.slane %v3273, 5
      %v3344 = vrot.slane %v3274, 5
      %v3345 = vrot.slane %v3276, 5
      %v3346 = vrot.slane %v3277, 5
      %v3347 = vrot.slane %v3278, 5
      %v3348 = vrot.slane %v3280, 5
      %v3349 = vrot.slane %v3281, 5
      %v3350 = vrot.slane %v3282, 5
      %v3351 = vrot.slane %v3284, 5
      %v3352 = vrot.slane %v3285, 5
      %v3353 = vrot.slane %v3286, 5
      %vm3354 = vcmp.lt.s32.totalorder %v793, 3
      %v3355 = vsel %vm3354, %v3352, %v3353
      %v3356 = vsel %vm3354, %v3351, %v3352
      %v3357 = vsel %vm3354, %v3349, %v3350
      %v3358 = vsel %vm3354, %v3348, %v3349
      %v3359 = vsel %vm3354, %v3346, %v3347
      %v3360 = vsel %vm3354, %v3345, %v3346
      %v3361 = vsel %vm3354, %v3343, %v3344
      %v3362 = vsel %vm3354, %v3342, %v3343
      %v3363 = vsel %vm3354, %v3340, %v3341
      %v3364 = vsel %vm3354, %v3339, %v3340
      %v3365 = vsel %vm3354, %v3337, %v3338
      %v3366 = vsel %vm3354, %v3336, %v3337
      %v3367 = vsel %vm3354, %v3334, %v3335
      %v3368 = vsel %vm3354, %v3333, %v3334
      %v3369 = vsel %vm3354, %v3331, %v3332
      %v3370 = vsel %vm3354, %v3330, %v3331
      %v3371 = vsel %vm3354, %v3328, %v3329
      %v3372 = vsel %vm3354, %v3327, %v3328
      %v3373 = vsel %vm3354, %v3325, %v3326
      %v3374 = vsel %vm3354, %v3324, %v3325
      %v3375 = vsel %vm3354, %v3322, %v3323
      %v3376 = vsel %vm3354, %v3321, %v3322
      %v3377 = vsel %vm3354, %v3319, %v3320
      %v3378 = vsel %vm3354, %v3318, %v3319
      %v3379 = vsel %vm3354, %v3316, %v3317
      %v3380 = vsel %vm3354, %v3315, %v3316
      %v3381 = vsel %vm3354, %v3313, %v3314
      %v3382 = vsel %vm3354, %v3312, %v3313
      %v3383 = vsel %vm3354, %v3310, %v3311
      %v3384 = vsel %vm3354, %v3309, %v3310
      %v3385 = vsel %vm3354, %v3307, %v3308
      %v3386 = vsel %vm3354, %v3306, %v3307
      %v3387 = vsel %vm3354, %v3304, %v3305
      %v3388 = vsel %vm3354, %v3303, %v3304
      %v3389 = vsel %vm3354, %v3301, %v3302
      %v3390 = vsel %vm3354, %v3300, %v3301
      %v3391 = vsel %vm3354, %v3298, %v3299
      %v3392 = vsel %vm3354, %v3297, %v3298
      %v3393 = vsel %vm3354, %v3295, %v3296
      %v3394 = vsel %vm3354, %v3294, %v3295
      %v3395 = vsel %vm3354, %v3292, %v3293
      %v3396 = vsel %vm3354, %v3291, %v3292
      %v3397 = vsel %vm3354, %v3289, %v3290
      %v3398 = vsel %vm3354, %v3288, %v3289
      %v3399 = vrot.slane %v3201, 3
      %v3400 = vrot.slane %v3202, 3
      %v3401 = vrot.slane %v3203, 3
      %v3402 = vrot.slane %v3205, 3
      %v3403 = vrot.slane %v3206, 3
      %v3404 = vrot.slane %v3207, 3
      %v3405 = vrot.slane %v3209, 3
      %v3406 = vrot.slane %v3210, 3
      %v3407 = vrot.slane %v3211, 3
      %v3408 = vrot.slane %v3213, 3
      %v3409 = vrot.slane %v3214, 3
      %v3410 = vrot.slane %v3215, 3
      %v3411 = vrot.slane %v3217, 3
      %v3412 = vrot.slane %v3218, 3
      %v3413 = vrot.slane %v3219, 3
      %v3414 = vrot.slane %v3221, 3
      %v3415 = vrot.slane %v3222, 3
      %v3416 = vrot.slane %v3223, 3
      %v3417 = vrot.slane %v3225, 3
      %v3418 = vrot.slane %v3226, 3
      %v3419 = vrot.slane %v3227, 3
      %v3420 = vrot.slane %v3229, 3
      %v3421 = vrot.slane %v3230, 3
      %v3422 = vrot.slane %v3231, 3
      %v3423 = vrot.slane %v3233, 3
      %v3424 = vrot.slane %v3234, 3
      %v3425 = vrot.slane %v3235, 3
      %v3426 = vrot.slane %v3237, 3
      %v3427 = vrot.slane %v3238, 3
      %v3428 = vrot.slane %v3239, 3
      %v3429 = vrot.slane %v3241, 3
      %v3430 = vrot.slane %v3242, 3
      %v3431 = vrot.slane %v3243, 3
      %v3432 = vrot.slane %v3245, 3
      %v3433 = vrot.slane %v3246, 3
      %v3434 = vrot.slane %v3247, 3
      %v3435 = vrot.slane %v3249, 3
      %v3436 = vrot.slane %v3250, 3
      %v3437 = vrot.slane %v3251, 3
      %v3438 = vrot.slane %v3253, 3
      %v3439 = vrot.slane %v3254, 3
      %v3440 = vrot.slane %v3255, 3
      %v3441 = vrot.slane %v3257, 3
      %v3442 = vrot.slane %v3258, 3
      %v3443 = vrot.slane %v3259, 3
      %v3444 = vrot.slane %v3261, 3
      %v3445 = vrot.slane %v3262, 3
      %v3446 = vrot.slane %v3263, 3
      %v3447 = vrot.slane %v3265, 3
      %v3448 = vrot.slane %v3266, 3
      %v3449 = vrot.slane %v3267, 3
      %v3450 = vrot.slane %v3269, 3
      %v3451 = vrot.slane %v3270, 3
      %v3452 = vrot.slane %v3271, 3
      %v3453 = vrot.slane %v3273, 3
      %v3454 = vrot.slane %v3274, 3
      %v3455 = vrot.slane %v3275, 3
      %v3456 = vrot.slane %v3277, 3
      %v3457 = vrot.slane %v3278, 3
      %v3458 = vrot.slane %v3279, 3
      %v3459 = vrot.slane %v3281, 3
      %v3460 = vrot.slane %v3282, 3
      %v3461 = vrot.slane %v3283, 3
      %v3462 = vrot.slane %v3285, 3
      %v3463 = vrot.slane %v3286, 3
      %v3464 = vrot.slane %v3287, 3
      %vm3465 = vcmp.lt.s32.totalorder %v793, 5
      %v3466 = vsel %vm3465, %v3463, %v3464
      %v3467 = vsel %vm3465, %v3462, %v3463
      %v3468 = vsel %vm3465, %v3460, %v3461
      %v3469 = vsel %vm3465, %v3459, %v3460
      %v3470 = vsel %vm3465, %v3457, %v3458
      %v3471 = vsel %vm3465, %v3456, %v3457
      %v3472 = vsel %vm3465, %v3454, %v3455
      %v3473 = vsel %vm3465, %v3453, %v3454
      %v3474 = vsel %vm3465, %v3451, %v3452
      %v3475 = vsel %vm3465, %v3450, %v3451
      %v3476 = vsel %vm3465, %v3448, %v3449
      %v3477 = vsel %vm3465, %v3447, %v3448
      %v3478 = vsel %vm3465, %v3445, %v3446
      %v3479 = vsel %vm3465, %v3444, %v3445
      %v3480 = vsel %vm3465, %v3442, %v3443
      %v3481 = vsel %vm3465, %v3441, %v3442
      %v3482 = vsel %vm3465, %v3439, %v3440
      %v3483 = vsel %vm3465, %v3438, %v3439
      %v3484 = vsel %vm3465, %v3436, %v3437
      %v3485 = vsel %vm3465, %v3435, %v3436
      %v3486 = vsel %vm3465, %v3433, %v3434
      %v3487 = vsel %vm3465, %v3432, %v3433
      %v3488 = vsel %vm3465, %v3430, %v3431
      %v3489 = vsel %vm3465, %v3429, %v3430
      %v3490 = vsel %vm3465, %v3427, %v3428
      %v3491 = vsel %vm3465, %v3426, %v3427
      %v3492 = vsel %vm3465, %v3424, %v3425
      %v3493 = vsel %vm3465, %v3423, %v3424
      %v3494 = vsel %vm3465, %v3421, %v3422
      %v3495 = vsel %vm3465, %v3420, %v3421
      %v3496 = vsel %vm3465, %v3418, %v3419
      %v3497 = vsel %vm3465, %v3417, %v3418
      %v3498 = vsel %vm3465, %v3415, %v3416
      %v3499 = vsel %vm3465, %v3414, %v3415
      %v3500 = vsel %vm3465, %v3412, %v3413
      %v3501 = vsel %vm3465, %v3411, %v3412
      %v3502 = vsel %vm3465, %v3409, %v3410
      %v3503 = vsel %vm3465, %v3408, %v3409
      %v3504 = vsel %vm3465, %v3406, %v3407
      %v3505 = vsel %vm3465, %v3405, %v3406
      %v3506 = vsel %vm3465, %v3403, %v3404
      %v3507 = vsel %vm3465, %v3402, %v3403
      %v3508 = vsel %vm3465, %v3400, %v3401
      %v3509 = vsel %vm3465, %v3399, %v3400
      %v3510 = vlaneseq
      %v3511 = vshrl.u32 %v3510, 7
      %v3512 = vsub.s32 2, %v3511
      %v3513 = vrot.slane %v339, %v3512
      %v3514 = vmul.f32 %v3513, %v3398
      %v3515 = vmul.f32 %v3513, %v3397
      %v3516 = vmul.f32 %v3513, %v3396
      %v3517 = vmul.f32 %v3513, %v3395
      %v3518 = vmul.f32 %v3513, %v3394
      %v3519 = vmul.f32 %v3513, %v3393
      %v3520 = vmul.f32 %v3513, %v3392
      %v3521 = vmul.f32 %v3513, %v3391
      %v3522 = vmul.f32 %v3513, %v3390
      %v3523 = vmul.f32 %v3513, %v3389
      %v3524 = vmul.f32 %v3513, %v3388
      %v3525 = vmul.f32 %v3513, %v3387
      %v3526 = vmul.f32 %v3513, %v3386
      %v3527 = vmul.f32 %v3513, %v3385
      %v3528 = vmul.f32 %v3513, %v3384
      %v3529 = vmul.f32 %v3513, %v3383
      %v3530 = vmul.f32 %v3513, %v3382
      %v3531 = vmul.f32 %v3513, %v3381
      %v3532 = vmul.f32 %v3513, %v3380
      %v3533 = vmul.f32 %v3513, %v3379
      %v3534 = vmul.f32 %v3513, %v3378
      %v3535 = vmul.f32 %v3513, %v3377
      %v3536 = vmul.f32 %v3513, %v3376
      %v3537 = vmul.f32 %v3513, %v3375
      %v3538 = vmul.f32 %v3513, %v3374
      %v3539 = vmul.f32 %v3513, %v3373
      %v3540 = vmul.f32 %v3513, %v3372
      %v3541 = vmul.f32 %v3513, %v3371
      %v3542 = vmul.f32 %v3513, %v3370
      %v3543 = vmul.f32 %v3513, %v3369
      %v3544 = vmul.f32 %v3513, %v3368
      %v3545 = vmul.f32 %v3513, %v3367
      %v3546 = vlaneseq
      %v3547 = vshrl.u32 %v3546, 7
      %v3548 = vsub.s32 3, %v3547
      %v3549 = vrot.slane %v339, %v3548
      %v3550 = vmul.f32 %v3549, %v3201
      %v3551 = vmul.f32 %v3549, %v3202
      %v3552 = vmul.f32 %v3549, %v3205
      %v3553 = vmul.f32 %v3549, %v3206
      %v3554 = vmul.f32 %v3549, %v3209
      %v3555 = vmul.f32 %v3549, %v3210
      %v3556 = vmul.f32 %v3549, %v3213
      %v3557 = vmul.f32 %v3549, %v3214
      %v3558 = vmul.f32 %v3549, %v3217
      %v3559 = vmul.f32 %v3549, %v3218
      %v3560 = vmul.f32 %v3549, %v3221
      %v3561 = vmul.f32 %v3549, %v3222
      %v3562 = vmul.f32 %v3549, %v3225
      %v3563 = vmul.f32 %v3549, %v3226
      %v3564 = vmul.f32 %v3549, %v3229
      %v3565 = vmul.f32 %v3549, %v3230
      %v3566 = vmul.f32 %v3549, %v3233
      %v3567 = vmul.f32 %v3549, %v3234
      %v3568 = vmul.f32 %v3549, %v3237
      %v3569 = vmul.f32 %v3549, %v3238
      %v3570 = vmul.f32 %v3549, %v3241
      %v3571 = vmul.f32 %v3549, %v3242
      %v3572 = vmul.f32 %v3549, %v3245
      %v3573 = vmul.f32 %v3549, %v3246
      %v3574 = vmul.f32 %v3549, %v3249
      %v3575 = vmul.f32 %v3549, %v3250
      %v3576 = vmul.f32 %v3549, %v3253
      %v3577 = vmul.f32 %v3549, %v3254
      %v3578 = vmul.f32 %v3549, %v3257
      %v3579 = vmul.f32 %v3549, %v3258
      %v3580 = vmul.f32 %v3549, %v3261
      %v3581 = vmul.f32 %v3549, %v3262
      %v3582 = vadd.f32 %v3514, %v3550
      %v3583 = vadd.f32 %v3515, %v3551
      %v3584 = vadd.f32 %v3516, %v3552
      %v3585 = vadd.f32 %v3517, %v3553
      %v3586 = vadd.f32 %v3518, %v3554
      %v3587 = vadd.f32 %v3519, %v3555
      %v3588 = vadd.f32 %v3520, %v3556
      %v3589 = vadd.f32 %v3521, %v3557
      %v3590 = vadd.f32 %v3522, %v3558
      %v3591 = vadd.f32 %v3523, %v3559
      %v3592 = vadd.f32 %v3524, %v3560
      %v3593 = vadd.f32 %v3525, %v3561
      %v3594 = vadd.f32 %v3526, %v3562
      %v3595 = vadd.f32 %v3527, %v3563
      %v3596 = vadd.f32 %v3528, %v3564
      %v3597 = vadd.f32 %v3529, %v3565
      %v3598 = vadd.f32 %v3530, %v3566
      %v3599 = vadd.f32 %v3531, %v3567
      %v3600 = vadd.f32 %v3532, %v3568
      %v3601 = vadd.f32 %v3533, %v3569
      %v3602 = vadd.f32 %v3534, %v3570
      %v3603 = vadd.f32 %v3535, %v3571
      %v3604 = vadd.f32 %v3536, %v3572
      %v3605 = vadd.f32 %v3537, %v3573
      %v3606 = vadd.f32 %v3538, %v3574
      %v3607 = vadd.f32 %v3539, %v3575
      %v3608 = vadd.f32 %v3540, %v3576
      %v3609 = vadd.f32 %v3541, %v3577
      %v3610 = vadd.f32 %v3542, %v3578
      %v3611 = vadd.f32 %v3543, %v3579
      %v3612 = vadd.f32 %v3544, %v3580
      %v3613 = vadd.f32 %v3545, %v3581
      %v3614 = vlaneseq
      %v3615 = vshrl.u32 %v3614, 7
      %v3616 = vsub.s32 4, %v3615
      %v3617 = vrot.slane %v339, %v3616
      %v3618 = vmul.f32 %v3617, %v3509
      %v3619 = vmul.f32 %v3617, %v3508
      %v3620 = vmul.f32 %v3617, %v3507
      %v3621 = vmul.f32 %v3617, %v3506
      %v3622 = vmul.f32 %v3617, %v3505
      %v3623 = vmul.f32 %v3617, %v3504
      %v3624 = vmul.f32 %v3617, %v3503
      %v3625 = vmul.f32 %v3617, %v3502
      %v3626 = vmul.f32 %v3617, %v3501
      %v3627 = vmul.f32 %v3617, %v3500
      %v3628 = vmul.f32 %v3617, %v3499
      %v3629 = vmul.f32 %v3617, %v3498
      %v3630 = vmul.f32 %v3617, %v3497
      %v3631 = vmul.f32 %v3617, %v3496
      %v3632 = vmul.f32 %v3617, %v3495
      %v3633 = vmul.f32 %v3617, %v3494
      %v3634 = vmul.f32 %v3617, %v3493
      %v3635 = vmul.f32 %v3617, %v3492
      %v3636 = vmul.f32 %v3617, %v3491
      %v3637 = vmul.f32 %v3617, %v3490
      %v3638 = vmul.f32 %v3617, %v3489
      %v3639 = vmul.f32 %v3617, %v3488
      %v3640 = vmul.f32 %v3617, %v3487
      %v3641 = vmul.f32 %v3617, %v3486
      %v3642 = vmul.f32 %v3617, %v3485
      %v3643 = vmul.f32 %v3617, %v3484
      %v3644 = vmul.f32 %v3617, %v3483
      %v3645 = vmul.f32 %v3617, %v3482
      %v3646 = vmul.f32 %v3617, %v3481
      %v3647 = vmul.f32 %v3617, %v3480
      %v3648 = vmul.f32 %v3617, %v3479
      %v3649 = vmul.f32 %v3617, %v3478
      %v3650 = vadd.f32 %v3582, %v3618
      %v3651 = vadd.f32 %v3583, %v3619
      %v3652 = vadd.f32 %v3584, %v3620
      %v3653 = vadd.f32 %v3585, %v3621
      %v3654 = vadd.f32 %v3586, %v3622
      %v3655 = vadd.f32 %v3587, %v3623
      %v3656 = vadd.f32 %v3588, %v3624
      %v3657 = vadd.f32 %v3589, %v3625
      %v3658 = vadd.f32 %v3590, %v3626
      %v3659 = vadd.f32 %v3591, %v3627
      %v3660 = vadd.f32 %v3592, %v3628
      %v3661 = vadd.f32 %v3593, %v3629
      %v3662 = vadd.f32 %v3594, %v3630
      %v3663 = vadd.f32 %v3595, %v3631
      %v3664 = vadd.f32 %v3596, %v3632
      %v3665 = vadd.f32 %v3597, %v3633
      %v3666 = vadd.f32 %v3598, %v3634
      %v3667 = vadd.f32 %v3599, %v3635
      %v3668 = vadd.f32 %v3600, %v3636
      %v3669 = vadd.f32 %v3601, %v3637
      %v3670 = vadd.f32 %v3602, %v3638
      %v3671 = vadd.f32 %v3603, %v3639
      %v3672 = vadd.f32 %v3604, %v3640
      %v3673 = vadd.f32 %v3605, %v3641
      %v3674 = vadd.f32 %v3606, %v3642
      %v3675 = vadd.f32 %v3607, %v3643
      %v3676 = vadd.f32 %v3608, %v3644
      %v3677 = vadd.f32 %v3609, %v3645
      %v3678 = vadd.f32 %v3610, %v3646
      %v3679 = vadd.f32 %v3611, %v3647
      %v3680 = vadd.f32 %v3612, %v3648
      %v3681 = vadd.f32 %v3613, %v3649
      %v3682 = vlaneseq
      %v3683 = vshrl.u32 %v3682, 7
      %v3684 = vsub.s32 5, %v3683
      %v3685 = vrot.slane %v339, %v3684
      %v3686 = vmul.f32 %v3685, %v3392
      %v3687 = vmul.f32 %v3685, %v3391
      %v3688 = vmul.f32 %v3685, %v3390
      %v3689 = vmul.f32 %v3685, %v3389
      %v3690 = vmul.f32 %v3685, %v3388
      %v3691 = vmul.f32 %v3685, %v3387
      %v3692 = vmul.f32 %v3685, %v3386
      %v3693 = vmul.f32 %v3685, %v3385
      %v3694 = vmul.f32 %v3685, %v3384
      %v3695 = vmul.f32 %v3685, %v3383
      %v3696 = vmul.f32 %v3685, %v3382
      %v3697 = vmul.f32 %v3685, %v3381
      %v3698 = vmul.f32 %v3685, %v3380
      %v3699 = vmul.f32 %v3685, %v3379
      %v3700 = vmul.f32 %v3685, %v3378
      %v3701 = vmul.f32 %v3685, %v3377
      %v3702 = vmul.f32 %v3685, %v3376
      %v3703 = vmul.f32 %v3685, %v3375
      %v3704 = vmul.f32 %v3685, %v3374
      %v3705 = vmul.f32 %v3685, %v3373
      %v3706 = vmul.f32 %v3685, %v3372
      %v3707 = vmul.f32 %v3685, %v3371
      %v3708 = vmul.f32 %v3685, %v3370
      %v3709 = vmul.f32 %v3685, %v3369
      %v3710 = vmul.f32 %v3685, %v3368
      %v3711 = vmul.f32 %v3685, %v3367
      %v3712 = vmul.f32 %v3685, %v3366
      %v3713 = vmul.f32 %v3685, %v3365
      %v3714 = vmul.f32 %v3685, %v3364
      %v3715 = vmul.f32 %v3685, %v3363
      %v3716 = vmul.f32 %v3685, %v3362
      %v3717 = vmul.f32 %v3685, %v3361
      %v3718 = vadd.f32 %v3650, %v3686
      %v3719 = vadd.f32 %v3651, %v3687
      %v3720 = vadd.f32 %v3652, %v3688
      %v3721 = vadd.f32 %v3653, %v3689
      %v3722 = vadd.f32 %v3654, %v3690
      %v3723 = vadd.f32 %v3655, %v3691
      %v3724 = vadd.f32 %v3656, %v3692
      %v3725 = vadd.f32 %v3657, %v3693
      %v3726 = vadd.f32 %v3658, %v3694
      %v3727 = vadd.f32 %v3659, %v3695
      %v3728 = vadd.f32 %v3660, %v3696
      %v3729 = vadd.f32 %v3661, %v3697
      %v3730 = vadd.f32 %v3662, %v3698
      %v3731 = vadd.f32 %v3663, %v3699
      %v3732 = vadd.f32 %v3664, %v3700
      %v3733 = vadd.f32 %v3665, %v3701
      %v3734 = vadd.f32 %v3666, %v3702
      %v3735 = vadd.f32 %v3667, %v3703
      %v3736 = vadd.f32 %v3668, %v3704
      %v3737 = vadd.f32 %v3669, %v3705
      %v3738 = vadd.f32 %v3670, %v3706
      %v3739 = vadd.f32 %v3671, %v3707
      %v3740 = vadd.f32 %v3672, %v3708
      %v3741 = vadd.f32 %v3673, %v3709
      %v3742 = vadd.f32 %v3674, %v3710
      %v3743 = vadd.f32 %v3675, %v3711
      %v3744 = vadd.f32 %v3676, %v3712
      %v3745 = vadd.f32 %v3677, %v3713
      %v3746 = vadd.f32 %v3678, %v3714
      %v3747 = vadd.f32 %v3679, %v3715
      %v3748 = vadd.f32 %v3680, %v3716
      %v3749 = vadd.f32 %v3681, %v3717
      %v3750 = vlaneseq
      %v3751 = vshrl.u32 %v3750, 7
      %v3752 = vsub.s32 6, %v3751
      %v3753 = vrot.slane %v339, %v3752
      %v3754 = vmul.f32 %v3753, %v3213
      %v3755 = vmul.f32 %v3753, %v3214
      %v3756 = vmul.f32 %v3753, %v3217
      %v3757 = vmul.f32 %v3753, %v3218
      %v3758 = vmul.f32 %v3753, %v3221
      %v3759 = vmul.f32 %v3753, %v3222
      %v3760 = vmul.f32 %v3753, %v3225
      %v3761 = vmul.f32 %v3753, %v3226
      %v3762 = vmul.f32 %v3753, %v3229
      %v3763 = vmul.f32 %v3753, %v3230
      %v3764 = vmul.f32 %v3753, %v3233
      %v3765 = vmul.f32 %v3753, %v3234
      %v3766 = vmul.f32 %v3753, %v3237
      %v3767 = vmul.f32 %v3753, %v3238
      %v3768 = vmul.f32 %v3753, %v3241
      %v3769 = vmul.f32 %v3753, %v3242
      %v3770 = vmul.f32 %v3753, %v3245
      %v3771 = vmul.f32 %v3753, %v3246
      %v3772 = vmul.f32 %v3753, %v3249
      %v3773 = vmul.f32 %v3753, %v3250
      %v3774 = vmul.f32 %v3753, %v3253
      %v3775 = vmul.f32 %v3753, %v3254
      %v3776 = vmul.f32 %v3753, %v3257
      %v3777 = vmul.f32 %v3753, %v3258
      %v3778 = vmul.f32 %v3753, %v3261
      %v3779 = vmul.f32 %v3753, %v3262
      %v3780 = vmul.f32 %v3753, %v3265
      %v3781 = vmul.f32 %v3753, %v3266
      %v3782 = vmul.f32 %v3753, %v3269
      %v3783 = vmul.f32 %v3753, %v3270
      %v3784 = vmul.f32 %v3753, %v3273
      %v3785 = vmul.f32 %v3753, %v3274
      %v3786 = vadd.f32 %v3718, %v3754
      %v3787 = vadd.f32 %v3719, %v3755
      %v3788 = vadd.f32 %v3720, %v3756
      %v3789 = vadd.f32 %v3721, %v3757
      %v3790 = vadd.f32 %v3722, %v3758
      %v3791 = vadd.f32 %v3723, %v3759
      %v3792 = vadd.f32 %v3724, %v3760
      %v3793 = vadd.f32 %v3725, %v3761
      %v3794 = vadd.f32 %v3726, %v3762
      %v3795 = vadd.f32 %v3727, %v3763
      %v3796 = vadd.f32 %v3728, %v3764
      %v3797 = vadd.f32 %v3729, %v3765
      %v3798 = vadd.f32 %v3730, %v3766
      %v3799 = vadd.f32 %v3731, %v3767
      %v3800 = vadd.f32 %v3732, %v3768
      %v3801 = vadd.f32 %v3733, %v3769
      %v3802 = vadd.f32 %v3734, %v3770
      %v3803 = vadd.f32 %v3735, %v3771
      %v3804 = vadd.f32 %v3736, %v3772
      %v3805 = vadd.f32 %v3737, %v3773
      %v3806 = vadd.f32 %v3738, %v3774
      %v3807 = vadd.f32 %v3739, %v3775
      %v3808 = vadd.f32 %v3740, %v3776
      %v3809 = vadd.f32 %v3741, %v3777
      %v3810 = vadd.f32 %v3742, %v3778
      %v3811 = vadd.f32 %v3743, %v3779
      %v3812 = vadd.f32 %v3744, %v3780
      %v3813 = vadd.f32 %v3745, %v3781
      %v3814 = vadd.f32 %v3746, %v3782
      %v3815 = vadd.f32 %v3747, %v3783
      %v3816 = vadd.f32 %v3748, %v3784
      %v3817 = vadd.f32 %v3749, %v3785
      %v3818 = vlaneseq
      %v3819 = vshrl.u32 %v3818, 7
      %v3820 = vsub.s32 7, %v3819
      %v3821 = vrot.slane %v339, %v3820
      %v3822 = vmul.f32 %v3821, %v3503
      %v3823 = vmul.f32 %v3821, %v3502
      %v3824 = vmul.f32 %v3821, %v3501
      %v3825 = vmul.f32 %v3821, %v3500
      %v3826 = vmul.f32 %v3821, %v3499
      %v3827 = vmul.f32 %v3821, %v3498
      %v3828 = vmul.f32 %v3821, %v3497
      %v3829 = vmul.f32 %v3821, %v3496
      %v3830 = vmul.f32 %v3821, %v3495
      %v3831 = vmul.f32 %v3821, %v3494
      %v3832 = vmul.f32 %v3821, %v3493
      %v3833 = vmul.f32 %v3821, %v3492
      %v3834 = vmul.f32 %v3821, %v3491
      %v3835 = vmul.f32 %v3821, %v3490
      %v3836 = vmul.f32 %v3821, %v3489
      %v3837 = vmul.f32 %v3821, %v3488
      %v3838 = vmul.f32 %v3821, %v3487
      %v3839 = vmul.f32 %v3821, %v3486
      %v3840 = vmul.f32 %v3821, %v3485
      %v3841 = vmul.f32 %v3821, %v3484
      %v3842 = vmul.f32 %v3821, %v3483
      %v3843 = vmul.f32 %v3821, %v3482
      %v3844 = vmul.f32 %v3821, %v3481
      %v3845 = vmul.f32 %v3821, %v3480
      %v3846 = vmul.f32 %v3821, %v3479
      %v3847 = vmul.f32 %v3821, %v3478
      %v3848 = vmul.f32 %v3821, %v3477
      %v3849 = vmul.f32 %v3821, %v3476
      %v3850 = vmul.f32 %v3821, %v3475
      %v3851 = vmul.f32 %v3821, %v3474
      %v3852 = vmul.f32 %v3821, %v3473
      %v3853 = vmul.f32 %v3821, %v3472
      %v3854 = vadd.f32 %v3786, %v3822
      %v3855 = vadd.f32 %v3787, %v3823
      %v3856 = vadd.f32 %v3788, %v3824
      %v3857 = vadd.f32 %v3789, %v3825
      %v3858 = vadd.f32 %v3790, %v3826
      %v3859 = vadd.f32 %v3791, %v3827
      %v3860 = vadd.f32 %v3792, %v3828
      %v3861 = vadd.f32 %v3793, %v3829
      %v3862 = vadd.f32 %v3794, %v3830
      %v3863 = vadd.f32 %v3795, %v3831
      %v3864 = vadd.f32 %v3796, %v3832
      %v3865 = vadd.f32 %v3797, %v3833
      %v3866 = vadd.f32 %v3798, %v3834
      %v3867 = vadd.f32 %v3799, %v3835
      %v3868 = vadd.f32 %v3800, %v3836
      %v3869 = vadd.f32 %v3801, %v3837
      %v3870 = vadd.f32 %v3802, %v3838
      %v3871 = vadd.f32 %v3803, %v3839
      %v3872 = vadd.f32 %v3804, %v3840
      %v3873 = vadd.f32 %v3805, %v3841
      %v3874 = vadd.f32 %v3806, %v3842
      %v3875 = vadd.f32 %v3807, %v3843
      %v3876 = vadd.f32 %v3808, %v3844
      %v3877 = vadd.f32 %v3809, %v3845
      %v3878 = vadd.f32 %v3810, %v3846
      %v3879 = vadd.f32 %v3811, %v3847
      %v3880 = vadd.f32 %v3812, %v3848
      %v3881 = vadd.f32 %v3813, %v3849
      %v3882 = vadd.f32 %v3814, %v3850
      %v3883 = vadd.f32 %v3815, %v3851
      %v3884 = vadd.f32 %v3816, %v3852
      %v3885 = vadd.f32 %v3817, %v3853
      %v3886 = vlaneseq
      %v3887 = vshrl.u32 %v3886, 7
      %v3888 = vsub.s32 0, %v3887
      %v3889 = vrot.slane %v340, %v3888
      %v3890 = vmul.f32 %v3889, %v3386
      %v3891 = vmul.f32 %v3889, %v3385
      %v3892 = vmul.f32 %v3889, %v3384
      %v3893 = vmul.f32 %v3889, %v3383
      %v3894 = vmul.f32 %v3889, %v3382
      %v3895 = vmul.f32 %v3889, %v3381
      %v3896 = vmul.f32 %v3889, %v3380
      %v3897 = vmul.f32 %v3889, %v3379
      %v3898 = vmul.f32 %v3889, %v3378
      %v3899 = vmul.f32 %v3889, %v3377
      %v3900 = vmul.f32 %v3889, %v3376
      %v3901 = vmul.f32 %v3889, %v3375
      %v3902 = vmul.f32 %v3889, %v3374
      %v3903 = vmul.f32 %v3889, %v3373
      %v3904 = vmul.f32 %v3889, %v3372
      %v3905 = vmul.f32 %v3889, %v3371
      %v3906 = vmul.f32 %v3889, %v3370
      %v3907 = vmul.f32 %v3889, %v3369
      %v3908 = vmul.f32 %v3889, %v3368
      %v3909 = vmul.f32 %v3889, %v3367
      %v3910 = vmul.f32 %v3889, %v3366
      %v3911 = vmul.f32 %v3889, %v3365
      %v3912 = vmul.f32 %v3889, %v3364
      %v3913 = vmul.f32 %v3889, %v3363
      %v3914 = vmul.f32 %v3889, %v3362
      %v3915 = vmul.f32 %v3889, %v3361
      %v3916 = vmul.f32 %v3889, %v3360
      %v3917 = vmul.f32 %v3889, %v3359
      %v3918 = vmul.f32 %v3889, %v3358
      %v3919 = vmul.f32 %v3889, %v3357
      %v3920 = vmul.f32 %v3889, %v3356
      %v3921 = vmul.f32 %v3889, %v3355
      %v3922 = vadd.f32 %v3854, %v3890
      %v3923 = vadd.f32 %v3855, %v3891
      %v3924 = vadd.f32 %v3856, %v3892
      %v3925 = vadd.f32 %v3857, %v3893
      %v3926 = vadd.f32 %v3858, %v3894
      %v3927 = vadd.f32 %v3859, %v3895
      %v3928 = vadd.f32 %v3860, %v3896
      %v3929 = vadd.f32 %v3861, %v3897
      %v3930 = vadd.f32 %v3862, %v3898
      %v3931 = vadd.f32 %v3863, %v3899
      %v3932 = vadd.f32 %v3864, %v3900
      %v3933 = vadd.f32 %v3865, %v3901
      %v3934 = vadd.f32 %v3866, %v3902
      %v3935 = vadd.f32 %v3867, %v3903
      %v3936 = vadd.f32 %v3868, %v3904
      %v3937 = vadd.f32 %v3869, %v3905
      %v3938 = vadd.f32 %v3870, %v3906
      %v3939 = vadd.f32 %v3871, %v3907
      %v3940 = vadd.f32 %v3872, %v3908
      %v3941 = vadd.f32 %v3873, %v3909
      %v3942 = vadd.f32 %v3874, %v3910
      %v3943 = vadd.f32 %v3875, %v3911
      %v3944 = vadd.f32 %v3876, %v3912
      %v3945 = vadd.f32 %v3877, %v3913
      %v3946 = vadd.f32 %v3878, %v3914
      %v3947 = vadd.f32 %v3879, %v3915
      %v3948 = vadd.f32 %v3880, %v3916
      %v3949 = vadd.f32 %v3881, %v3917
      %v3950 = vadd.f32 %v3882, %v3918
      %v3951 = vadd.f32 %v3883, %v3919
      %v3952 = vadd.f32 %v3884, %v3920
      %v3953 = vadd.f32 %v3885, %v3921
      %v3954 = vlaneseq
      %v3955 = vshrl.u32 %v3954, 7
      %v3956 = vsub.s32 1, %v3955
      %v3957 = vrot.slane %v340, %v3956
      %v3958 = vmul.f32 %v3957, %v3225
      %v3959 = vmul.f32 %v3957, %v3226
      %v3960 = vmul.f32 %v3957, %v3229
      %v3961 = vmul.f32 %v3957, %v3230
      %v3962 = vmul.f32 %v3957, %v3233
      %v3963 = vmul.f32 %v3957, %v3234
      %v3964 = vmul.f32 %v3957, %v3237
      %v3965 = vmul.f32 %v3957, %v3238
      %v3966 = vmul.f32 %v3957, %v3241
      %v3967 = vmul.f32 %v3957, %v3242
      %v3968 = vmul.f32 %v3957, %v3245
      %v3969 = vmul.f32 %v3957, %v3246
      %v3970 = vmul.f32 %v3957, %v3249
      %v3971 = vmul.f32 %v3957, %v3250
      %v3972 = vmul.f32 %v3957, %v3253
      %v3973 = vmul.f32 %v3957, %v3254
      %v3974 = vmul.f32 %v3957, %v3257
      %v3975 = vmul.f32 %v3957, %v3258
      %v3976 = vmul.f32 %v3957, %v3261
      %v3977 = vmul.f32 %v3957, %v3262
      %v3978 = vmul.f32 %v3957, %v3265
      %v3979 = vmul.f32 %v3957, %v3266
      %v3980 = vmul.f32 %v3957, %v3269
      %v3981 = vmul.f32 %v3957, %v3270
      %v3982 = vmul.f32 %v3957, %v3273
      %v3983 = vmul.f32 %v3957, %v3274
      %v3984 = vmul.f32 %v3957, %v3277
      %v3985 = vmul.f32 %v3957, %v3278
      %v3986 = vmul.f32 %v3957, %v3281
      %v3987 = vmul.f32 %v3957, %v3282
      %v3988 = vmul.f32 %v3957, %v3285
      %v3989 = vmul.f32 %v3957, %v3286
      %v3990 = vadd.f32 %v3922, %v3958
      %v3991 = vadd.f32 %v3923, %v3959
      %v3992 = vadd.f32 %v3924, %v3960
      %v3993 = vadd.f32 %v3925, %v3961
      %v3994 = vadd.f32 %v3926, %v3962
      %v3995 = vadd.f32 %v3927, %v3963
      %v3996 = vadd.f32 %v3928, %v3964
      %v3997 = vadd.f32 %v3929, %v3965
      %v3998 = vadd.f32 %v3930, %v3966
      %v3999 = vadd.f32 %v3931, %v3967
      %v4000 = vadd.f32 %v3932, %v3968
      %v4001 = vadd.f32 %v3933, %v3969
      %v4002 = vadd.f32 %v3934, %v3970
      %v4003 = vadd.f32 %v3935, %v3971
      %v4004 = vadd.f32 %v3936, %v3972
      %v4005 = vadd.f32 %v3937, %v3973
      %v4006 = vadd.f32 %v3938, %v3974
      %v4007 = vadd.f32 %v3939, %v3975
      %v4008 = vadd.f32 %v3940, %v3976
      %v4009 = vadd.f32 %v3941, %v3977
      %v4010 = vadd.f32 %v3942, %v3978
      %v4011 = vadd.f32 %v3943, %v3979
      %v4012 = vadd.f32 %v3944, %v3980
      %v4013 = vadd.f32 %v3945, %v3981
      %v4014 = vadd.f32 %v3946, %v3982
      %v4015 = vadd.f32 %v3947, %v3983
      %v4016 = vadd.f32 %v3948, %v3984
      %v4017 = vadd.f32 %v3949, %v3985
      %v4018 = vadd.f32 %v3950, %v3986
      %v4019 = vadd.f32 %v3951, %v3987
      %v4020 = vadd.f32 %v3952, %v3988
      %v4021 = vadd.f32 %v3953, %v3989
      %v4022 = vlaneseq
      %v4023 = vshrl.u32 %v4022, 7
      %v4024 = vsub.s32 2, %v4023
      %v4025 = vrot.slane %v340, %v4024
      %v4026 = vmul.f32 %v4025, %v3497
      %v4027 = vmul.f32 %v4025, %v3496
      %v4028 = vmul.f32 %v4025, %v3495
      %v4029 = vmul.f32 %v4025, %v3494
      %v4030 = vmul.f32 %v4025, %v3493
      %v4031 = vmul.f32 %v4025, %v3492
      %v4032 = vmul.f32 %v4025, %v3491
      %v4033 = vmul.f32 %v4025, %v3490
      %v4034 = vmul.f32 %v4025, %v3489
      %v4035 = vmul.f32 %v4025, %v3488
      %v4036 = vmul.f32 %v4025, %v3487
      %v4037 = vmul.f32 %v4025, %v3486
      %v4038 = vmul.f32 %v4025, %v3485
      %v4039 = vmul.f32 %v4025, %v3484
      %v4040 = vmul.f32 %v4025, %v3483
      %v4041 = vmul.f32 %v4025, %v3482
      %v4042 = vmul.f32 %v4025, %v3481
      %v4043 = vmul.f32 %v4025, %v3480
      %v4044 = vmul.f32 %v4025, %v3479
      %v4045 = vmul.f32 %v4025, %v3478
      %v4046 = vmul.f32 %v4025, %v3477
      %v4047 = vmul.f32 %v4025, %v3476
      %v4048 = vmul.f32 %v4025, %v3475
      %v4049 = vmul.f32 %v4025, %v3474
      %v4050 = vmul.f32 %v4025, %v3473
      %v4051 = vmul.f32 %v4025, %v3472
      %v4052 = vmul.f32 %v4025, %v3471
      %v4053 = vmul.f32 %v4025, %v3470
      %v4054 = vmul.f32 %v4025, %v3469
      %v4055 = vmul.f32 %v4025, %v3468
      %v4056 = vmul.f32 %v4025, %v3467
      %v4057 = vmul.f32 %v4025, %v3466
      %v4058 = vadd.f32 %v3990, %v4026
      %v4059 = vadd.f32 %v3991, %v4027
      %v4060 = vadd.f32 %v3992, %v4028
      %v4061 = vadd.f32 %v3993, %v4029
      %v4062 = vadd.f32 %v3994, %v4030
      %v4063 = vadd.f32 %v3995, %v4031
      %v4064 = vadd.f32 %v3996, %v4032
      %v4065 = vadd.f32 %v3997, %v4033
      %v4066 = vadd.f32 %v3998, %v4034
      %v4067 = vadd.f32 %v3999, %v4035
      %v4068 = vadd.f32 %v4000, %v4036
      %v4069 = vadd.f32 %v4001, %v4037
      %v4070 = vadd.f32 %v4002, %v4038
      %v4071 = vadd.f32 %v4003, %v4039
      %v4072 = vadd.f32 %v4004, %v4040
      %v4073 = vadd.f32 %v4005, %v4041
      %v4074 = vadd.f32 %v4006, %v4042
      %v4075 = vadd.f32 %v4007, %v4043
      %v4076 = vadd.f32 %v4008, %v4044
      %v4077 = vadd.f32 %v4009, %v4045
      %v4078 = vadd.f32 %v4010, %v4046
      %v4079 = vadd.f32 %v4011, %v4047
      %v4080 = vadd.f32 %v4012, %v4048
      %v4081 = vadd.f32 %v4013, %v4049
      %v4082 = vadd.f32 %v4014, %v4050
      %v4083 = vadd.f32 %v4015, %v4051
      %v4084 = vadd.f32 %v4016, %v4052
      %v4085 = vadd.f32 %v4017, %v4053
      %v4086 = vadd.f32 %v4018, %v4054
      %v4087 = vadd.f32 %v4019, %v4055
      %v4088 = vadd.f32 %v4020, %v4056
      %v4089 = vadd.f32 %v4021, %v4057
      %v4090 = vmul.f32 %v2910, %v4058
      %v4091 = vmul.f32 %v2911, %v4059
      %v4092 = vmul.f32 %v2912, %v4060
      %v4093 = vmul.f32 %v2913, %v4061
      %v4094 = vmul.f32 %v2914, %v4062
      %v4095 = vmul.f32 %v2915, %v4063
      %v4096 = vmul.f32 %v2916, %v4064
      %v4097 = vmul.f32 %v2917, %v4065
      %v4098 = vmul.f32 %v2918, %v4066
      %v4099 = vmul.f32 %v2919, %v4067
      %v4100 = vmul.f32 %v2920, %v4068
      %v4101 = vmul.f32 %v2921, %v4069
      %v4102 = vmul.f32 %v2922, %v4070
      %v4103 = vmul.f32 %v2923, %v4071
      %v4104 = vmul.f32 %v2924, %v4072
      %v4105 = vmul.f32 %v2925, %v4073
      %v4106 = vmul.f32 %v2926, %v4074
      %v4107 = vmul.f32 %v2927, %v4075
      %v4108 = vmul.f32 %v2928, %v4076
      %v4109 = vmul.f32 %v2929, %v4077
      %v4110 = vmul.f32 %v2930, %v4078
      %v4111 = vmul.f32 %v2931, %v4079
      %v4112 = vmul.f32 %v2932, %v4080
      %v4113 = vmul.f32 %v2933, %v4081
      %v4114 = vmul.f32 %v2934, %v4082
      %v4115 = vmul.f32 %v2935, %v4083
      %v4116 = vmul.f32 %v2936, %v4084
      %v4117 = vmul.f32 %v2937, %v4085
      %v4118 = vmul.f32 %v2938, %v4086
      %v4119 = vmul.f32 %v2939, %v4087
      %v4120 = vmul.f32 %v2940, %v4088
      %v4121 = vmul.f32 %v2941, %v4089
      %v4122 = vpack.c.bf16 %v4091, %v4090
      %v4123 = vpack.c.bf16 %v4093, %v4092
      %v4124 = vpack.c.bf16 %v4095, %v4094
      %v4125 = vpack.c.bf16 %v4097, %v4096
      %v4126 = vpack.c.bf16 %v4099, %v4098
      %v4127 = vpack.c.bf16 %v4101, %v4100
      %v4128 = vpack.c.bf16 %v4103, %v4102
      %v4129 = vpack.c.bf16 %v4105, %v4104
      %v4130 = vpack.c.bf16 %v4107, %v4106
      %v4131 = vpack.c.bf16 %v4109, %v4108
      %v4132 = vpack.c.bf16 %v4111, %v4110
      %v4133 = vpack.c.bf16 %v4113, %v4112
      %v4134 = vpack.c.bf16 %v4115, %v4114
      %v4135 = vpack.c.bf16 %v4117, %v4116
      %v4136 = vpack.c.bf16 %v4119, %v4118
      %v4137 = vpack.c.bf16 %v4121, %v4120
      %v4138 = vld [vmem:[%s3] sm:$0xf]
      %v4139 = vld [vmem:[%s3 + $0x4] sm:$0xf]
      %v4140 = vld [vmem:[%s3 + $0x8] sm:$0xf]
      %v4141 = vld [vmem:[%s3 + $0xc] sm:$0xf]
      %v4142 = vld [vmem:[%s3 + $0x10] sm:$0xf]
      %v4143 = vld [vmem:[%s3 + $0x14] sm:$0xf]
      %v4144 = vld [vmem:[%s3 + $0x18] sm:$0xf]
      %v4145 = vld [vmem:[%s3 + $0x1c] sm:$0xf]
      %v4146 = vld [vmem:[%s3 + $0x20] sm:$0xf]
      %v4147 = vld [vmem:[%s3 + $0x24] sm:$0xf]
      %v4148 = vld [vmem:[%s3 + $0x28] sm:$0xf]
      %v4149 = vld [vmem:[%s3 + $0x2c] sm:$0xf]
      %v4150 = vld [vmem:[%s3 + $0x30] sm:$0xf]
      %v4151 = vld [vmem:[%s3 + $0x34] sm:$0xf]
      %v4152 = vld [vmem:[%s3 + $0x38] sm:$0xf]
      %v4153 = vld [vmem:[%s3 + $0x3c] sm:$0xf]
      %v4170 = vunpack.c.l.b16 %v4138
      %v4171 = vunpack.c.l.b16 %v4139
      %v4172 = vunpack.c.l.b16 %v4140
      %v4173 = vunpack.c.l.b16 %v4141
      %v4174 = vunpack.c.l.b16 %v4142
      %v4175 = vunpack.c.l.b16 %v4143
      %v4176 = vunpack.c.l.b16 %v4144
      %v4177 = vunpack.c.l.b16 %v4145
      %v4178 = vunpack.c.l.b16 %v4146
      %v4179 = vunpack.c.l.b16 %v4147
      %v4180 = vunpack.c.l.b16 %v4148
      %v4181 = vunpack.c.l.b16 %v4149
      %v4182 = vunpack.c.l.b16 %v4150
      %v4183 = vunpack.c.l.b16 %v4151
      %v4184 = vunpack.c.l.b16 %v4152
      %v4185 = vunpack.c.l.b16 %v4153
      %v4186 = vpack.c.b16 %v4171, %v4170
      %v4187 = vpack.c.b16 %v4173, %v4172
      %v4188 = vpack.c.b16 %v4175, %v4174
      %v4189 = vpack.c.b16 %v4177, %v4176
      %v4190 = vpack.c.b16 %v4179, %v4178
      %v4191 = vpack.c.b16 %v4181, %v4180
      %v4192 = vpack.c.b16 %v4183, %v4182
      %v4193 = vpack.c.b16 %v4185, %v4184
      %4202 = vmatprep.subr.bf16.mxu0 0
      %4203 = vmatpush1.bf16.msra.mxu0 %v4193
      %4204 = vmatprep.subr.bf16.mxu0 0
      %4205 = vmatpush1.bf16.msra.mxu0 %v4192
      %4206 = vmatprep.subr.bf16.mxu0 0
      %4207 = vmatpush1.bf16.msra.mxu0 %v4191
      %4208 = vmatprep.subr.bf16.mxu0 0
      %4209 = vmatpush1.bf16.msra.mxu0 %v4190
      %4210 = vmatprep.subr.bf16.mxu0 0
      %4211 = vmatpush1.bf16.msra.mxu0 %v4189
      %4212 = vmatprep.subr.bf16.mxu0 0
      %4213 = vmatpush1.bf16.msra.mxu0 %v4188
      %4214 = vmatprep.subr.bf16.mxu0 0
      %4215 = vmatpush1.bf16.msra.mxu0 %v4187
      %4216 = vmatprep.subr.bf16.mxu0 0
      %4217 = vmatpush1.bf16.msra.mxu0 %v4186
      %4218 = vmatprep.subr.bf16.mxu0 0
      %4219 = vmatpush2.bf16.msra.mxu0 0
      %4220 = vmatprep.subr.bf16.mxu0 0
      %4221 = vmatpush2.bf16.msra.mxu0 0
      %4222 = vmatprep.subr.bf16.mxu0 0
      %4223 = vmatpush2.bf16.msra.mxu0 0
      %4224 = vmatprep.subr.bf16.mxu0 0
      %4225 = vmatpush2.bf16.msra.mxu0 0
      %4226 = vmatprep.subr.bf16.mxu0 0
      %4227 = vmatpush2.bf16.msra.mxu0 0
      %4228 = vmatprep.subr.bf16.mxu0 0
      %4229 = vmatpush2.bf16.msra.mxu0 0
      %4230 = vmatprep.subr.bf16.mxu0 0
      %4231 = vmatpush2.bf16.msra.mxu0 0
      %4232 = vmatprep.subr.bf16.mxu0 0
      %4233 = vmatpush2.bf16.msra.mxu0 0
      %4234 = vmatprep.mubr.bf16.mxu0 0
      %4235 = vmatmul.mubr.bf16.gmra.mxu0 %v4122
      %v4236 = vpop.f32.mrf.mxu0
      %v4237 = vadd.f32 0.0, %v4236
      %v4238 = vpop.f32.mrf.mxu0
      %v4239 = vpop.f32.mrf.mxu0
      %v4240 = vadd.f32 0.0, %v4239
      %v4241 = vpop.f32.mrf.mxu0
      %4242 = vmatprep.mubr.bf16.mxu0 0
      %4243 = vmatmul.mubr.bf16.gmra.mxu0 %v4123
      %v4244 = vpop.f32.mrf.mxu0
      %v4245 = vadd.f32 0.0, %v4244
      %v4246 = vpop.f32.mrf.mxu0
      %v4247 = vpop.f32.mrf.mxu0
      %v4248 = vadd.f32 0.0, %v4247
      %v4249 = vpop.f32.mrf.mxu0
      %4250 = vmatprep.mubr.bf16.mxu0 0
      %4251 = vmatmul.mubr.bf16.gmra.mxu0 %v4124
      %v4252 = vpop.f32.mrf.mxu0
      %v4253 = vadd.f32 0.0, %v4252
      %v4254 = vpop.f32.mrf.mxu0
      %v4255 = vpop.f32.mrf.mxu0
      %v4256 = vadd.f32 0.0, %v4255
      %v4257 = vpop.f32.mrf.mxu0
      %4258 = vmatprep.mubr.bf16.mxu0 0
      %4259 = vmatmul.mubr.bf16.gmra.mxu0 %v4125
      %v4260 = vpop.f32.mrf.mxu0
      %v4261 = vadd.f32 0.0, %v4260
      %v4262 = vpop.f32.mrf.mxu0
      %v4263 = vpop.f32.mrf.mxu0
      %v4264 = vadd.f32 0.0, %v4263
      %v4265 = vpop.f32.mrf.mxu0
      %4266 = vmatprep.mubr.bf16.mxu0 0
      %4267 = vmatmul.mubr.bf16.gmra.mxu0 %v4126
      %v4268 = vpop.f32.mrf.mxu0
      %v4269 = vadd.f32 0.0, %v4268
      %v4270 = vpop.f32.mrf.mxu0
      %v4271 = vpop.f32.mrf.mxu0
      %v4272 = vadd.f32 0.0, %v4271
      %v4273 = vpop.f32.mrf.mxu0
      %4274 = vmatprep.mubr.bf16.mxu0 0
      %4275 = vmatmul.mubr.bf16.gmra.mxu0 %v4127
      %v4276 = vpop.f32.mrf.mxu0
      %v4277 = vadd.f32 0.0, %v4276
      %v4278 = vpop.f32.mrf.mxu0
      %v4279 = vpop.f32.mrf.mxu0
      %v4280 = vadd.f32 0.0, %v4279
      %v4281 = vpop.f32.mrf.mxu0
      %4282 = vmatprep.mubr.bf16.mxu0 0
      %4283 = vmatmul.mubr.bf16.gmra.mxu0 %v4128
      %v4284 = vpop.f32.mrf.mxu0
      %v4285 = vadd.f32 0.0, %v4284
      %v4286 = vpop.f32.mrf.mxu0
      %v4287 = vpop.f32.mrf.mxu0
      %v4288 = vadd.f32 0.0, %v4287
      %v4289 = vpop.f32.mrf.mxu0
      %4290 = vmatprep.mubr.bf16.mxu0 0
      %4291 = vmatmul.mubr.bf16.gmra.mxu0 %v4129
      %v4292 = vpop.f32.mrf.mxu0
      %v4293 = vadd.f32 0.0, %v4292
      %v4294 = vpop.f32.mrf.mxu0
      %v4295 = vpop.f32.mrf.mxu0
      %v4296 = vadd.f32 0.0, %v4295
      %v4297 = vpop.f32.mrf.mxu0
      %4298 = vmatprep.mubr.bf16.mxu0 0
      %4299 = vmatmul.mubr.bf16.gmra.mxu0 %v4130
      %v4300 = vpop.f32.mrf.mxu0
      %v4301 = vadd.f32 0.0, %v4300
      %v4302 = vpop.f32.mrf.mxu0
      %v4303 = vpop.f32.mrf.mxu0
      %v4304 = vadd.f32 0.0, %v4303
      %v4305 = vpop.f32.mrf.mxu0
      %4306 = vmatprep.mubr.bf16.mxu0 0
      %4307 = vmatmul.mubr.bf16.gmra.mxu0 %v4131
      %v4308 = vpop.f32.mrf.mxu0
      %v4309 = vadd.f32 0.0, %v4308
      %v4310 = vpop.f32.mrf.mxu0
      %v4311 = vpop.f32.mrf.mxu0
      %v4312 = vadd.f32 0.0, %v4311
      %v4313 = vpop.f32.mrf.mxu0
      %4314 = vmatprep.mubr.bf16.mxu0 0
      %4315 = vmatmul.mubr.bf16.gmra.mxu0 %v4132
      %v4316 = vpop.f32.mrf.mxu0
      %v4317 = vadd.f32 0.0, %v4316
      %v4318 = vpop.f32.mrf.mxu0
      %v4319 = vpop.f32.mrf.mxu0
      %v4320 = vadd.f32 0.0, %v4319
      %v4321 = vpop.f32.mrf.mxu0
      %4322 = vmatprep.mubr.bf16.mxu0 0
      %4323 = vmatmul.mubr.bf16.gmra.mxu0 %v4133
      %v4324 = vpop.f32.mrf.mxu0
      %v4325 = vadd.f32 0.0, %v4324
      %v4326 = vpop.f32.mrf.mxu0
      %v4327 = vpop.f32.mrf.mxu0
      %v4328 = vadd.f32 0.0, %v4327
      %v4329 = vpop.f32.mrf.mxu0
      %4330 = vmatprep.mubr.bf16.mxu0 0
      %4331 = vmatmul.mubr.bf16.gmra.mxu0 %v4134
      %v4332 = vpop.f32.mrf.mxu0
      %v4333 = vadd.f32 0.0, %v4332
      %v4334 = vpop.f32.mrf.mxu0
      %v4335 = vpop.f32.mrf.mxu0
      %v4336 = vadd.f32 0.0, %v4335
      %v4337 = vpop.f32.mrf.mxu0
      %4338 = vmatprep.mubr.bf16.mxu0 0
      %4339 = vmatmul.mubr.bf16.gmra.mxu0 %v4135
      %v4340 = vpop.f32.mrf.mxu0
      %v4341 = vadd.f32 0.0, %v4340
      %v4342 = vpop.f32.mrf.mxu0
      %v4343 = vpop.f32.mrf.mxu0
      %v4344 = vadd.f32 0.0, %v4343
      %v4345 = vpop.f32.mrf.mxu0
      %4346 = vmatprep.mubr.bf16.mxu0 0
      %4347 = vmatmul.mubr.bf16.gmra.mxu0 %v4136
      %v4348 = vpop.f32.mrf.mxu0
      %v4349 = vadd.f32 0.0, %v4348
      %v4350 = vpop.f32.mrf.mxu0
      %v4351 = vpop.f32.mrf.mxu0
      %v4352 = vadd.f32 0.0, %v4351
      %v4353 = vpop.f32.mrf.mxu0
      %4354 = vmatprep.mubr.bf16.mxu0 0
      %4355 = vmatmul.mubr.bf16.gmra.mxu0 %v4137
      %v4356 = vpop.f32.mrf.mxu0
      %v4357 = vadd.f32 0.0, %v4356
      %v4358 = vpop.f32.mrf.mxu0
      %v4359 = vpop.f32.mrf.mxu0
      %v4360 = vadd.f32 0.0, %v4359
      %v4361 = vpop.f32.mrf.mxu0
      %4362 = vdwg.mxu0
      %4363 = vst.msk [vmem:[%s221] sm:$0xff] %vm342, %v4237
      %4364 = vst.msk [vmem:[%s221 + $0x8] sm:$0xff] %vm342, %v4240
      %4365 = vst.msk [vmem:[%s221 + $0x10] sm:$0xff] %vm342, %v4245
      %4366 = vst.msk [vmem:[%s221 + $0x18] sm:$0xff] %vm342, %v4248
      %4367 = vst.msk [vmem:[%s221 + $0x20] sm:$0xff] %vm342, %v4253
      %4368 = vst.msk [vmem:[%s221 + $0x28] sm:$0xff] %vm342, %v4256
      %4369 = vst.msk [vmem:[%s221 + $0x30] sm:$0xff] %vm342, %v4261
      %4370 = vst.msk [vmem:[%s221 + $0x38] sm:$0xff] %vm342, %v4264
      %4371 = vst.msk [vmem:[%s221 + $0x40] sm:$0xff] %vm342, %v4269
      %4372 = vst.msk [vmem:[%s221 + $0x48] sm:$0xff] %vm342, %v4272
      %4373 = vst.msk [vmem:[%s221 + $0x50] sm:$0xff] %vm342, %v4277
      %4374 = vst.msk [vmem:[%s221 + $0x58] sm:$0xff] %vm342, %v4280
      %4375 = vst.msk [vmem:[%s221 + $0x60] sm:$0xff] %vm342, %v4285
      %4376 = vst.msk [vmem:[%s221 + $0x68] sm:$0xff] %vm342, %v4288
      %4377 = vst.msk [vmem:[%s221 + $0x70] sm:$0xff] %vm342, %v4293
      %4378 = vst.msk [vmem:[%s221 + $0x78] sm:$0xff] %vm342, %v4296
      %4379 = vst.msk [vmem:[%s221 + $0x80] sm:$0xff] %vm342, %v4301
      %4380 = vst.msk [vmem:[%s221 + $0x88] sm:$0xff] %vm342, %v4304
      %4381 = vst.msk [vmem:[%s221 + $0x90] sm:$0xff] %vm342, %v4309
      %4382 = vst.msk [vmem:[%s221 + $0x98] sm:$0xff] %vm342, %v4312
      %4383 = vst.msk [vmem:[%s221 + $0xa0] sm:$0xff] %vm342, %v4317
      %4384 = vst.msk [vmem:[%s221 + $0xa8] sm:$0xff] %vm342, %v4320
      %4385 = vst.msk [vmem:[%s221 + $0xb0] sm:$0xff] %vm342, %v4325
      %4386 = vst.msk [vmem:[%s221 + $0xb8] sm:$0xff] %vm342, %v4328
      %4387 = vst.msk [vmem:[%s221 + $0xc0] sm:$0xff] %vm342, %v4333
      %4388 = vst.msk [vmem:[%s221 + $0xc8] sm:$0xff] %vm342, %v4336
      %4389 = vst.msk [vmem:[%s221 + $0xd0] sm:$0xff] %vm342, %v4341
      %4390 = vst.msk [vmem:[%s221 + $0xd8] sm:$0xff] %vm342, %v4344
      %4391 = vst.msk [vmem:[%s221 + $0xe0] sm:$0xff] %vm342, %v4349
      %4392 = vst.msk [vmem:[%s221 + $0xe8] sm:$0xff] %vm342, %v4352
      %4393 = vst.msk [vmem:[%s221 + $0xf0] sm:$0xff] %vm342, %v4357
      %4394 = vst.msk [vmem:[%s221 + $0xf8] sm:$0xff] %vm342, %v4360
      %s4395 = smul.u32 16, %s20
      %p4396 = scmp.lt.s32.totalorder %s19, 1
      %s4397 = scalar_select %p4396, %s19, 1
      %p4398 = scmp.lt.s32.totalorder %s4395, 15
      %s4399 = scalar_select %p4398, %s4395, 15
      %s4400 = smul.addr %s4399, 2
      %s4401 = smul.addr %s4397, 32
      %s4402 = sadd.s32 %s4400, %s4401
      %s4403 = smul.addr %s4402, 8
      %s4404 = scalar_lea.vmem %s4, %s4403
      // Predicated region
      $region37: #{tpu_custom_call.1} parent=35 // pred_check
        %p4405 = pneg %p136
      $region38: #{tpu_custom_call.1} parent=35 // pred_check_branch
        %4407 = sbr.rel (%p4405) target = $region40
      $region39: #{tpu_custom_call.1} parent=35 // pred_region
        %s4408 = smul.u32 16, %s20
      $region40: #{tpu_custom_call.1} parent=35 // pred_fallthru
        _
    $region36: #{tpu_custom_call.1} parent=5 // pred_fallthru
      _
    %p4409 = scmp.le.s32.totalorder 2, %s10
    // Predicated region
    $region41: #{tpu_custom_call.1} parent=5 // pred_check
      %p4410 = pneg %p4409
    $region42: #{tpu_custom_call.1} parent=5 // pred_check_branch
      %4412 = sbr.rel (%p4410) target = $region44
    $region43: #{tpu_custom_call.1} parent=5 // pred_region
      %s4413 = ssub.s32 %s10, 2
      // Predicated region
      $region45: #{tpu_custom_call.1} parent=43 // pred_check
        %p4414 = pneg %p142
      $region46: #{tpu_custom_call.1} parent=43 // pred_check_branch
        %4416 = sbr.rel (%p4414) target = $region48
      $region47: #{tpu_custom_call.1} parent=43 // pred_region
        %s4417 = smul.u32 16, %s22
        %p4418 = scmp.lt.s32.totalorder %s21, 1
        %s4419 = scalar_select %p4418, %s21, 1
        %p4420 = scmp.lt.s32.totalorder %s4417, 15
        %s4421 = scalar_select %p4420, %s4417, 15
        %s4422 = smul.addr %s4421, 2
        %s4423 = smul.addr %s4419, 32
        %s4424 = sadd.s32 %s4422, %s4423
        %s4425 = smul.addr %s4424, 8
        %s4426 = scalar_lea.vmem %s4, %s4425
      $region48: #{tpu_custom_call.1} parent=43 // pred_fallthru
        _
    $region44: #{tpu_custom_call.1} parent=5 // pred_fallthru
      _
  $region6: #{tpu_custom_call.1} parent=0 // loop_footer
    %s14 = sadd.s32 1, %s10
  $region7: #{tpu_custom_call.1} parent=0 // loop_footer_branch
    %9 = sbr.rel target = $region3
  $region8: #{tpu_custom_call.1} parent=0 // loop_exit
    _

</llo_original>
